<compile_context>
chip_gen: v7x
topology: tpu7x:2x2x1
jax: 0.10.0
libtpu: 0.0.40
codegen_flags: <defaults>
</compile_context>

<pallas_src>
import functools

import jax
import jax.numpy as jnp
from jax.experimental import pallas as pl
from jax.experimental.pallas import tpu as pltpu

FEATS = 32
HIDDEN = 128
BATCH = 8


def _round_up(n: int, m: int) -> int:
    return ((n + m - 1) // m) * m


def mlp_kernel(x_ref, w1_ref, w2_ref, w3_ref, b12_ref, b3_ref, o_ref, *,
               compute_dtype):
    """One batch tile: x_ref (tile_b, F) f32 -> o_ref (tile_b // 128, 128) f32."""
    # Cast to the MXU compute dtype on the VPU, inside the kernel, so the
    # wrapper never makes an extra HBM read/write pass over the activations.
    x = x_ref[...].astype(compute_dtype)

    # Layer 1: (tile_b, F) @ (F, H) on the MXU, f32 accumulation.
    h1 = jnp.dot(x, w1_ref[...], preferred_element_type=jnp.float32)
    h1 = jnp.maximum(h1 + b12_ref[0:1, :], 0.0)            # bias + ReLU in f32

    # Layer 2: (tile_b, H) @ (H, H); feed the MXU its compute dtype.
    h2 = jnp.dot(h1.astype(compute_dtype), w2_ref[...],
                 preferred_element_type=jnp.float32)
    h2 = jnp.maximum(h2 + b12_ref[1:2, :], 0.0)

    # Layer 3 (N=1): VPU multiply + lane reduction; b3 is a scalar from SMEM.
    # (MXU fallback only if a profile shows the XLU/vex slot binding.)
    logits = jnp.sum(h2 * w3_ref[...], axis=-1, keepdims=True) + b3_ref[0]
    probs = jax.nn.sigmoid(logits)                          # (tile_b, 1) f32

    # Lane-dense store: (tile_b, 1) -> (tile_b // 128, 128) slab so every
    # store writes full 128-lane rows (no masked vst.msk).
    o_ref[...] = probs.reshape(o_ref.shape).astype(o_ref.dtype)


def mlp_forward(x, w1, b1, w2, b2, w3, b3, *, max_tile_b=8192,
                compute_dtype=jnp.bfloat16):
    B, F = x.shape
    H = w1.shape[1]
    assert max_tile_b % 1024 == 0, "max_tile_b must be a multiple of 1024"

    # Adaptive batch tile: large batches get big tiles (amortize per-step
    # overhead); tiny batches stay at a single minimal 1024-row tile.
    tile_b = min(max_tile_b, max(1024, _round_up(B, 1024)))
    num_tiles = pl.cdiv(B, tile_b)

    cdt = jnp.dtype(compute_dtype)
    # Parameters are tiny and VMEM-resident; casting them here is a one-time cost.
    w1_c = jnp.asarray(w1, jnp.float32).astype(cdt)           # (F, H)
    w2_c = jnp.asarray(w2, jnp.float32).astype(cdt)           # (H, H)
    w3_row = jnp.asarray(w3, jnp.float32).reshape(1, H)       # (1, H) f32: VPU path
    b12 = jnp.concatenate(
        [jnp.asarray(b1, jnp.float32).reshape(1, H),
         jnp.asarray(b2, jnp.float32).reshape(1, H)], axis=0)  # (2, H) f32
    b3_s = jnp.asarray(b3, jnp.float32).reshape((1,))          # scalar -> SMEM

    # Pad only the (tiny) output slab to whole tiles so output blocks always
    # divide the array; x itself is neither padded nor pre-cast — the last
    # grid step reads a partial block and rows >= B are sliced off below.
    slab_rows = num_tiles * (tile_b // 128)

    flops = 2 * B * (F * H + H * H + H)
    bytes_accessed = (B * F * x.dtype.itemsize            # x read once, in place
                      + B * 4                             # probabilities out
                      + (w1_c.size + w2_c.size) * cdt.itemsize
                      + (w3_row.size + b12.size + 1) * 4)  # small params

    out_slab = pl.pallas_call(
        functools.partial(mlp_kernel, compute_dtype=cdt),
        out_shape=jax.ShapeDtypeStruct((slab_rows, 128), jnp.float32),
        grid=(num_tiles,),
        in_specs=[
            pl.BlockSpec((tile_b, F), lambda i: (i, 0)),        # x: streamed per tile
            pl.BlockSpec((F, H), lambda i: (0, 0)),             # w1: VMEM-resident
            pl.BlockSpec((H, H), lambda i: (0, 0)),             # w2: VMEM-resident
            pl.BlockSpec((1, H), lambda i: (0, 0)),             # w3 row: resident (f32)
            pl.BlockSpec((2, H), lambda i: (0, 0)),             # packed b1/b2: resident
            pl.BlockSpec(memory_space=pltpu.MemorySpace.SMEM),  # b3 scalar in SMEM
        ],
        out_specs=pl.BlockSpec((tile_b // 128, 128), lambda i: (i, 0)),
        compiler_params=pltpu.CompilerParams(
            dimension_semantics=("parallel",),      # megacore split on v7x
            vmem_limit_bytes=48 * 1024 * 1024,      # > v5e 16 MiB default, < v7x 64 MiB
        ),
        cost_estimate=pl.CostEstimate(
            flops=flops, transcendentals=B, bytes_accessed=bytes_accessed),
    )(x, w1_c, w2_c, w3_row, b12, b3_s)

    # (slab_rows, 128) slab -> (B, 1) column; the reshape is a free row-major
    # reinterpretation in XLA; padded/undefined tail rows are sliced off.
    return out_slab.reshape(slab_rows * 128, 1)[:B]


def init_params(key):
    """nn.Linear-style uniform init; weights stored as (in, out) = torch W^T."""
    k1, k2, k3, k4, k5, k6 = jax.random.split(key, 6)

    def lin(kw, kb, fan_in, fan_out):
        bound = 1.0 / jnp.sqrt(float(fan_in))
        w = jax.random.uniform(kw, (fan_in, fan_out), jnp.float32, -bound, bound)
        b = jax.random.uniform(kb, (1, fan_out), jnp.float32, -bound, bound)
        return w, b

    w1, b1 = lin(k1, k2, FEATS, HIDDEN)
    w2, b2 = lin(k3, k4, HIDDEN, HIDDEN)
    w3, b3 = lin(k5, k6, HIDDEN, 1)
    return w1, b1, w2, b2, w3, b3


if __name__ == "__main__":
    key = jax.random.PRNGKey(0)
    kx, kp = jax.random.split(key)
    params = init_params(kp)
    w1, b1, w2, b2, w3, b3 = params

    def ref_fn(xv):
        h = jnp.maximum(xv @ w1 + b1, 0.0)
        h = jnp.maximum(h @ w2 + b2, 0.0)
        return jax.nn.sigmoid(h @ w3 + b3)

    # Small check, consistent with the module (batch=8, feats=32): one grid
    # step, partial x block, single minimal tile via the adaptive clamp.
    x_small = jax.random.normal(kx, (BATCH, FEATS), jnp.float32)
    out_small = mlp_forward(x_small, *params)
    jax.block_until_ready(out_small)
    assert out_small.shape == (BATCH, 1)
    assert jnp.allclose(out_small, ref_fn(x_small), atol=2e-2), "small-batch mismatch"

    # Ragged multi-tile check: 2500 rows at a 1024-row tile -> 3 grid steps,
    # last x block partial; exercises resident weights + in-kernel cast + slab.
    x_big = jax.random.normal(jax.random.PRNGKey(1), (2500, FEATS), jnp.float32)
    out_big = mlp_forward(x_big, *params, max_tile_b=1024)
    jax.block_until_ready(out_big)
    assert out_big.shape == (2500, 1)
    assert jnp.allclose(out_big, ref_fn(x_big), atol=2e-2), "batched mismatch"

    # Same batch through the default adaptive path (single 3072-row tile).
    out_big2 = mlp_forward(x_big, *params)
    jax.block_until_ready(out_big2)
    assert jnp.allclose(out_big2, ref_fn(x_big), atol=2e-2), "adaptive-tile mismatch"

    print("KERNEL_OK")
</pallas_src>

<mosaic_0001>
module attributes {stable_mosaic.version = 11 : i64} {
  func.func @mlp_kernel(%arg0: i32, %arg1: memref<1024x32xf32, #tpu.memory_space<vmem>>, %arg2: memref<32x128xbf16, #tpu.memory_space<vmem>>, %arg3: memref<128x128xbf16, #tpu.memory_space<vmem>>, %arg4: memref<1x128xf32, #tpu.memory_space<vmem>>, %arg5: memref<2x128xf32, #tpu.memory_space<vmem>>, %arg6: memref<1xf32, #tpu.memory_space<smem>>, %arg7: memref<8x128xf32, #tpu.memory_space<vmem>>) attributes {dimension_semantics = [#tpu.dimension_semantics<parallel>], iteration_bounds = array<i64: 1>, scalar_prefetch = 0 : i64, scratch_operands = 0 : i64, tpu.core_type = #tpu.core_type<tc>, window_params = [{transform_indices = @transform_0, window_bounds = array<i64: 1024, 32>}, {pipeline_mode = #tpu.pipeline_mode<synchronous>, transform_indices = @transform_1, window_bounds = array<i64: 32, 128>}, {pipeline_mode = #tpu.pipeline_mode<synchronous>, transform_indices = @transform_2, window_bounds = array<i64: 128, 128>}, {pipeline_mode = #tpu.pipeline_mode<synchronous>, transform_indices = @transform_3, window_bounds = array<i64: 1, 128>}, {pipeline_mode = #tpu.pipeline_mode<synchronous>, transform_indices = @transform_4, window_bounds = array<i64: 2, 128>}, {transform_indices = @transform_5, window_bounds = array<i64: 1>}, {transform_indices = @transform_6, window_bounds = array<i64: 8, 128>}]} {
    %c0 = arith.constant 0 : index
    %c0_0 = arith.constant 0 : index
    %0 = vector.load %arg1[%c0, %c0_0] : memref<1024x32xf32, #tpu.memory_space<vmem>>, vector<1024x32xf32>
    %1 = arith.truncf %0 : vector<1024x32xf32> to vector<1024x32xbf16>
    %c0_1 = arith.constant 0 : index
    %c0_2 = arith.constant 0 : index
    %2 = vector.load %arg2[%c0_1, %c0_2] : memref<32x128xbf16, #tpu.memory_space<vmem>>, vector<32x128xbf16>
    %cst = arith.constant dense<0.000000e+00> : vector<1024x128xf32>
    %3 = tpu.matmul %1, %2, %cst {dimension_numbers = #tpu.dot_dimension_numbers<[1], [0], [0], [1], [0, 0, 1, 1], [], []>} : vector<1024x32xbf16>, vector<32x128xbf16>, vector<1024x128xf32> -> vector<1024x128xf32>
    %c0_3 = arith.constant 0 : index
    %c0_4 = arith.constant 0 : index
    %4 = vector.load %arg5[%c0_3, %c0_4] : memref<2x128xf32, #tpu.memory_space<vmem>>, vector<1x128xf32>
    %5 = vector.broadcast %4 : vector<1x128xf32> to vector<1024x128xf32>
    %6 = arith.addf %3, %5 : vector<1024x128xf32>
    %cst_5 = arith.constant 0.000000e+00 : f32
    %7 = vector.broadcast %cst_5 : f32 to vector<1024x128xf32>
    %8 = arith.maximumf %6, %7 : vector<1024x128xf32>
    %9 = arith.truncf %8 : vector<1024x128xf32> to vector<1024x128xbf16>
    %c0_6 = arith.constant 0 : index
    %c0_7 = arith.constant 0 : index
    %10 = vector.load %arg3[%c0_6, %c0_7] : memref<128x128xbf16, #tpu.memory_space<vmem>>, vector<128x128xbf16>
    %cst_8 = arith.constant dense<0.000000e+00> : vector<1024x128xf32>
    %11 = tpu.matmul %9, %10, %cst_8 {dimension_numbers = #tpu.dot_dimension_numbers<[1], [0], [0], [1], [0, 0, 1, 1], [], []>} : vector<1024x128xbf16>, vector<128x128xbf16>, vector<1024x128xf32> -> vector<1024x128xf32>
    %c1 = arith.constant 1 : index
    %c0_9 = arith.constant 0 : index
    %12 = vector.load %arg5[%c1, %c0_9] : memref<2x128xf32, #tpu.memory_space<vmem>>, vector<1x128xf32>
    %13 = vector.broadcast %12 : vector<1x128xf32> to vector<1024x128xf32>
    %14 = arith.addf %11, %13 : vector<1024x128xf32>
    %cst_10 = arith.constant 0.000000e+00 : f32
    %15 = vector.broadcast %cst_10 : f32 to vector<1024x128xf32>
    %16 = arith.maximumf %14, %15 : vector<1024x128xf32>
    %c0_11 = arith.constant 0 : index
    %c0_12 = arith.constant 0 : index
    %17 = vector.load %arg4[%c0_11, %c0_12] : memref<1x128xf32, #tpu.memory_space<vmem>>, vector<1x128xf32>
    %18 = vector.broadcast %17 : vector<1x128xf32> to vector<1024x128xf32>
    %19 = arith.mulf %16, %18 : vector<1024x128xf32>
    %cst_13 = arith.constant dense<0.000000e+00> : vector<1024xf32>
    %20 = vector.multi_reduction <add>, %19, %cst_13 [1] : vector<1024x128xf32> to vector<1024xf32>
    %21 = vector.shape_cast %20 : vector<1024xf32> to vector<1024x1xf32>
    %c0_14 = arith.constant 0 : index
    %22 = memref.load %arg6[%c0_14] : memref<1xf32, #tpu.memory_space<smem>>
    %23 = vector.broadcast %22 : f32 to vector<1024x1xf32>
    %24 = arith.addf %21, %23 : vector<1024x1xf32>
    %25 = arith.negf %24 : vector<1024x1xf32>
    %26 = math.exp %25 : vector<1024x1xf32>
    %cst_15 = arith.constant 1.000000e+00 : f32
    %27 = vector.broadcast %cst_15 : f32 to vector<1024x1xf32>
    %28 = arith.addf %27, %26 : vector<1024x1xf32>
    %29 = arith.divf %27, %28 : vector<1024x1xf32>
    %30 = vector.shape_cast %29 : vector<1024x1xf32> to vector<8x128xf32>
    %c0_16 = arith.constant 0 : index
    %c0_17 = arith.constant 0 : index
    %31 = vector.load %arg7[%c0_16, %c0_17] : memref<8x128xf32, #tpu.memory_space<vmem>>, vector<8x128xf32>
    tpu.vector_store %arg7[%c0_16, %c0_17], %30 {strides = array<i32>} : memref<8x128xf32, #tpu.memory_space<vmem>>, vector<8x128xf32>,
    return
  }
  func.func @transform_0(%arg0: i32) -> (i32, i32) {
    %c0_i32 = arith.constant 0 : i32
    %c0_i32_0 = arith.constant 0 : i32
    return %arg0, %c0_i32 : i32, i32
  }
  func.func @transform_1(%arg0: i32) -> (i32, i32) {
    %c0_i32 = arith.constant 0 : i32
    %c0_i32_0 = arith.constant 0 : i32
    %c0_i32_1 = arith.constant 0 : i32
    return %c0_i32, %c0_i32_0 : i32, i32
  }
  func.func @transform_2(%arg0: i32) -> (i32, i32) {
    %c0_i32 = arith.constant 0 : i32
    %c0_i32_0 = arith.constant 0 : i32
    %c0_i32_1 = arith.constant 0 : i32
    return %c0_i32, %c0_i32_0 : i32, i32
  }
  func.func @transform_3(%arg0: i32) -> (i32, i32) {
    %c0_i32 = arith.constant 0 : i32
    %c0_i32_0 = arith.constant 0 : i32
    %c0_i32_1 = arith.constant 0 : i32
    return %c0_i32, %c0_i32_0 : i32, i32
  }
  func.func @transform_4(%arg0: i32) -> (i32, i32) {
    %c0_i32 = arith.constant 0 : i32
    %c0_i32_0 = arith.constant 0 : i32
    %c0_i32_1 = arith.constant 0 : i32
    return %c0_i32, %c0_i32_0 : i32, i32
  }
  func.func @transform_5(%arg0: i32) -> i32 {
    %c0_i32 = arith.constant 0 : i32
    %c0_i32_0 = arith.constant 0 : i32
    return %c0_i32 : i32
  }
  func.func @transform_6(%arg0: i32) -> (i32, i32) {
    %c0_i32 = arith.constant 0 : i32
    %c0_i32_0 = arith.constant 0 : i32
    return %arg0, %c0_i32 : i32, i32
  }
}

</mosaic_0001>

<llo_original>
// kernel: tpu_custom_call.1
$region0: #{tpu_custom_call.1}
  #allocation0 [shape = 'u32[]', space=smem, size = 0x4, offset = 0x4, fixed_abs, tag = 'smem constant byte address 0x4 - core index']
  #allocation1 [shape = 'u32[144,128]{1,0:T(1,128)}', space=vmem, size = 0x12000, scoped, tag = 'internal scratch']
  #allocation2 [shape = 'f32[1]{0:T(128)S(6)}', space=smem, size = 0x200, scoped, tag = 'scoped memory for tpu_custom_call.1']
  %s0 = inlined_call_operand.hbm [shape: f32[8,32], index: 0, kind: input, shape index: {}]
  %s1 = inlined_call_operand.hbm [shape: bf16[32,128], index: 1, kind: input, shape index: {}]
  %s2 = inlined_call_operand.hbm [shape: bf16[128,128], index: 2, kind: input, shape index: {}]
  %s3 = inlined_call_operand.vmem [shape: f32[1,128], index: 3, kind: input, shape index: {}]
  %s4 = inlined_call_operand.vmem [shape: f32[2,128], index: 4, kind: input, shape index: {}]
  %s5 = inlined_call_operand.<no memory space> [shape: f32[1], index: 5, kind: input, shape index: {}]
  %s6 = inlined_call_operand.hbm [shape: f32[8,128], index: 6, kind: output, shape index: {}]
  %s7 = sld [smem:[#allocation0]]
  $region46: #{tpu_custom_call.1} parent=0
    _
  %s9 = ssub.s32 1, %s7
  %s10 = scalar_select 0, %s9, %s7
  %11 = sst [smem:[#allocation2]] %s5
  $region1: #{tpu_custom_call.1} parent=0
    #allocation3 [shape = 'u8[524288]{0}', space=vmem, size = 0x80000, scoped, tag = 'input window, operand 0, single buffered']
    #allocation4 [shape = 's32[1]{0}', space=sflag, size = 0x4, scoped, tag = 'scoped memory for tpu_custom_call.1']
    #allocation5 [shape = 's32[1]{0}', space=sflag, size = 0x4, scoped, tag = 'scoped memory for tpu_custom_call.1']
    #allocation6 [shape = 'u8[8192]{0}', space=vmem, size = 0x2000, scoped, tag = 'input window, operand 1, single buffered']
    #allocation7 [shape = 's32[1]{0}', space=sflag, size = 0x4, scoped, tag = 'scoped memory for tpu_custom_call.1']
    #allocation8 [shape = 'u8[32768]{0}', space=vmem, size = 0x8000, scoped, tag = 'input window, operand 2, single buffered']
    #allocation9 [shape = 'u8[4096]{0}', space=vmem, size = 0x1000, scoped, tag = 'output window, operand 0, single buffered']
    %12 = vsyncpa [#allocation4], 0
    %13 = vsyncpa [#allocation7], 0
    %14 = vsyncpa [#allocation5], 0
    // Predicated region
    $region2: #{tpu_custom_call.1} parent=1 // pred_check
      _
    $region3: #{tpu_custom_call.1} parent=1 // pred_check_branch
      %16 = sbr.rel (0) target = $region5
    $region4: #{tpu_custom_call.1} parent=1 // pred_region
      %s18 = ssub.s32 16384, 128
      %19 = vsyncadd [#allocation4], %s18
      %s20 = sshll.u32 [#allocation3], 4
      %s21 = int_to_ptr.vmem [resolvable:$true] %s20
      %26 = dma.hbm_to_vmem [thread:$0]  %s0, 128, %s21, [#allocation4], 128, 128, 8
    $region5: #{tpu_custom_call.1} parent=1 // pred_fallthru
      _
    // Predicated region
    $region6: #{tpu_custom_call.1} parent=1 // pred_check
      _
    $region7: #{tpu_custom_call.1} parent=1 // pred_check_branch
      %28 = sbr.rel (0) target = $region9
    $region8: #{tpu_custom_call.1} parent=1 // pred_region
      %s30 = ssub.s32 256, 256
      %31 = vsyncadd [#allocation7], %s30
      %s32 = sshll.u32 [#allocation6], 4
      %s33 = int_to_ptr.vmem [resolvable:$true] %s32
      %38 = dma.hbm_to_vmem [thread:$0]  %s1, 256, %s33, [#allocation7], 64, 64, 4
    $region9: #{tpu_custom_call.1} parent=1 // pred_fallthru
      _
    // Predicated region
    $region10: #{tpu_custom_call.1} parent=1 // pred_check
      _
    $region11: #{tpu_custom_call.1} parent=1 // pred_check_branch
      %40 = sbr.rel (0) target = $region13
    $region12: #{tpu_custom_call.1} parent=1 // pred_region
      %s42 = ssub.s32 1024, 1024
      %43 = vsyncadd [#allocation7], %s42
      %s44 = sshll.u32 [#allocation8], 4
      %s45 = int_to_ptr.vmem [resolvable:$true] %s44
      %50 = dma.hbm_to_vmem [thread:$0]  %s2, 1024, %s45, [#allocation7], 64, 64, 4
    $region13: #{tpu_custom_call.1} parent=1 // pred_fallthru
      _
    // Predicated region
    $region14: #{tpu_custom_call.1} parent=1 // pred_check
      _
    $region15: #{tpu_custom_call.1} parent=1 // pred_check_branch
      %52 = sbr.rel (0) target = $region17
    $region16: #{tpu_custom_call.1} parent=1 // pred_region
      _
    $region17: #{tpu_custom_call.1} parent=1 // pred_fallthru
      _
    // Predicated region
    $region18: #{tpu_custom_call.1} parent=1 // pred_check
      _
    $region19: #{tpu_custom_call.1} parent=1 // pred_check_branch
      %54 = sbr.rel (0) target = $region21
    $region20: #{tpu_custom_call.1} parent=1 // pred_region
      _
    $region21: #{tpu_custom_call.1} parent=1 // pred_fallthru
      _
    // Predicated region
    $region22: #{tpu_custom_call.1} parent=1 // pred_check
      _
    $region23: #{tpu_custom_call.1} parent=1 // pred_check_branch
      %56 = sbr.rel (0) target = $region25
    $region24: #{tpu_custom_call.1} parent=1 // pred_region
      _
    $region25: #{tpu_custom_call.1} parent=1 // pred_fallthru
      _
    // Predicated region
    $region26: #{tpu_custom_call.1} parent=1 // pred_check
      _
    $region27: #{tpu_custom_call.1} parent=1 // pred_check_branch
      %58 = sbr.rel (0) target = $region29
    $region28: #{tpu_custom_call.1} parent=1 // pred_region
      %59 = dma.done [#allocation4], 16384
    $region29: #{tpu_custom_call.1} parent=1 // pred_fallthru
      _
    // Predicated region
    $region30: #{tpu_custom_call.1} parent=1 // pred_check
      _
    $region31: #{tpu_custom_call.1} parent=1 // pred_check_branch
      %61 = sbr.rel (0) target = $region33
    $region32: #{tpu_custom_call.1} parent=1 // pred_region
      %62 = dma.done [#allocation7], 256
    $region33: #{tpu_custom_call.1} parent=1 // pred_fallthru
      _
    // Predicated region
    $region34: #{tpu_custom_call.1} parent=1 // pred_check
      _
    $region35: #{tpu_custom_call.1} parent=1 // pred_check_branch
      %64 = sbr.rel (0) target = $region37
    $region36: #{tpu_custom_call.1} parent=1 // pred_region
      %65 = dma.done [#allocation7], 1024
    $region37: #{tpu_custom_call.1} parent=1 // pred_fallthru
      _
    %v67 = vld [vmem:[#allocation3] sm:$0xff]
    %v68 = vld [vmem:[#allocation3 + $0x8] sm:$0xff]
    %v69 = vld [vmem:[#allocation3 + $0x10] sm:$0xff]
    %v70 = vld [vmem:[#allocation3 + $0x18] sm:$0xff]
    %v71 = vld [vmem:[#allocation3 + $0x20] sm:$0xff]
    %v72 = vld [vmem:[#allocation3 + $0x28] sm:$0xff]
    %v73 = vld [vmem:[#allocation3 + $0x30] sm:$0xff]
    %v74 = vld [vmem:[#allocation3 + $0x38] sm:$0xff]
    %v75 = vld [vmem:[#allocation3 + $0x40] sm:$0xff]
    %v76 = vld [vmem:[#allocation3 + $0x48] sm:$0xff]
    %v77 = vld [vmem:[#allocation3 + $0x50] sm:$0xff]
    %v78 = vld [vmem:[#allocation3 + $0x58] sm:$0xff]
    %v79 = vld [vmem:[#allocation3 + $0x60] sm:$0xff]
    %v80 = vld [vmem:[#allocation3 + $0x68] sm:$0xff]
    %v81 = vld [vmem:[#allocation3 + $0x70] sm:$0xff]
    %v82 = vld [vmem:[#allocation3 + $0x78] sm:$0xff]
    %v83 = vld [vmem:[#allocation3 + $0x80] sm:$0xff]
    %v84 = vld [vmem:[#allocation3 + $0x88] sm:$0xff]
    %v85 = vld [vmem:[#allocation3 + $0x90] sm:$0xff]
    %v86 = vld [vmem:[#allocation3 + $0x98] sm:$0xff]
    %v87 = vld [vmem:[#allocation3 + $0xa0] sm:$0xff]
    %v88 = vld [vmem:[#allocation3 + $0xa8] sm:$0xff]
    %v89 = vld [vmem:[#allocation3 + $0xb0] sm:$0xff]
    %v90 = vld [vmem:[#allocation3 + $0xb8] sm:$0xff]
    %v91 = vld [vmem:[#allocation3 + $0xc0] sm:$0xff]
    %v92 = vld [vmem:[#allocation3 + $0xc8] sm:$0xff]
    %v93 = vld [vmem:[#allocation3 + $0xd0] sm:$0xff]
    %v94 = vld [vmem:[#allocation3 + $0xd8] sm:$0xff]
    %v95 = vld [vmem:[#allocation3 + $0xe0] sm:$0xff]
    %v96 = vld [vmem:[#allocation3 + $0xe8] sm:$0xff]
    %v97 = vld [vmem:[#allocation3 + $0xf0] sm:$0xff]
    %v98 = vld [vmem:[#allocation3 + $0xf8] sm:$0xff]
    %v99 = vld [vmem:[#allocation3 + $0x100] sm:$0xff]
    %v100 = vld [vmem:[#allocation3 + $0x108] sm:$0xff]
    %v101 = vld [vmem:[#allocation3 + $0x110] sm:$0xff]
    %v102 = vld [vmem:[#allocation3 + $0x118] sm:$0xff]
    %v103 = vld [vmem:[#allocation3 + $0x120] sm:$0xff]
    %v104 = vld [vmem:[#allocation3 + $0x128] sm:$0xff]
    %v105 = vld [vmem:[#allocation3 + $0x130] sm:$0xff]
    %v106 = vld [vmem:[#allocation3 + $0x138] sm:$0xff]
    %v107 = vld [vmem:[#allocation3 + $0x140] sm:$0xff]
    %v108 = vld [vmem:[#allocation3 + $0x148] sm:$0xff]
    %v109 = vld [vmem:[#allocation3 + $0x150] sm:$0xff]
    %v110 = vld [vmem:[#allocation3 + $0x158] sm:$0xff]
    %v111 = vld [vmem:[#allocation3 + $0x160] sm:$0xff]
    %v112 = vld [vmem:[#allocation3 + $0x168] sm:$0xff]
    %v113 = vld [vmem:[#allocation3 + $0x170] sm:$0xff]
    %v114 = vld [vmem:[#allocation3 + $0x178] sm:$0xff]
    %v115 = vld [vmem:[#allocation3 + $0x180] sm:$0xff]
    %v116 = vld [vmem:[#allocation3 + $0x188] sm:$0xff]
    %v117 = vld [vmem:[#allocation3 + $0x190] sm:$0xff]
    %v118 = vld [vmem:[#allocation3 + $0x198] sm:$0xff]
    %v119 = vld [vmem:[#allocation3 + $0x1a0] sm:$0xff]
    %v120 = vld [vmem:[#allocation3 + $0x1a8] sm:$0xff]
    %v121 = vld [vmem:[#allocation3 + $0x1b0] sm:$0xff]
    %v122 = vld [vmem:[#allocation3 + $0x1b8] sm:$0xff]
    %v123 = vld [vmem:[#allocation3 + $0x1c0] sm:$0xff]
    %v124 = vld [vmem:[#allocation3 + $0x1c8] sm:$0xff]
    %v125 = vld [vmem:[#allocation3 + $0x1d0] sm:$0xff]
    %v126 = vld [vmem:[#allocation3 + $0x1d8] sm:$0xff]
    %v127 = vld [vmem:[#allocation3 + $0x1e0] sm:$0xff]
    %v128 = vld [vmem:[#allocation3 + $0x1e8] sm:$0xff]
    %v129 = vld [vmem:[#allocation3 + $0x1f0] sm:$0xff]
    %v130 = vld [vmem:[#allocation3 + $0x1f8] sm:$0xff]
    %v131 = vld [vmem:[#allocation3 + $0x200] sm:$0xff]
    %v132 = vld [vmem:[#allocation3 + $0x208] sm:$0xff]
    %v133 = vld [vmem:[#allocation3 + $0x210] sm:$0xff]
    %v134 = vld [vmem:[#allocation3 + $0x218] sm:$0xff]
    %v135 = vld [vmem:[#allocation3 + $0x220] sm:$0xff]
    %v136 = vld [vmem:[#allocation3 + $0x228] sm:$0xff]
    %v137 = vld [vmem:[#allocation3 + $0x230] sm:$0xff]
    %v138 = vld [vmem:[#allocation3 + $0x238] sm:$0xff]
    %v139 = vld [vmem:[#allocation3 + $0x240] sm:$0xff]
    %v140 = vld [vmem:[#allocation3 + $0x248] sm:$0xff]
    %v141 = vld [vmem:[#allocation3 + $0x250] sm:$0xff]
    %v142 = vld [vmem:[#allocation3 + $0x258] sm:$0xff]
    %v143 = vld [vmem:[#allocation3 + $0x260] sm:$0xff]
    %v144 = vld [vmem:[#allocation3 + $0x268] sm:$0xff]
    %v145 = vld [vmem:[#allocation3 + $0x270] sm:$0xff]
    %v146 = vld [vmem:[#allocation3 + $0x278] sm:$0xff]
    %v147 = vld [vmem:[#allocation3 + $0x280] sm:$0xff]
    %v148 = vld [vmem:[#allocation3 + $0x288] sm:$0xff]
    %v149 = vld [vmem:[#allocation3 + $0x290] sm:$0xff]
    %v150 = vld [vmem:[#allocation3 + $0x298] sm:$0xff]
    %v151 = vld [vmem:[#allocation3 + $0x2a0] sm:$0xff]
    %v152 = vld [vmem:[#allocation3 + $0x2a8] sm:$0xff]
    %v153 = vld [vmem:[#allocation3 + $0x2b0] sm:$0xff]
    %v154 = vld [vmem:[#allocation3 + $0x2b8] sm:$0xff]
    %v155 = vld [vmem:[#allocation3 + $0x2c0] sm:$0xff]
    %v156 = vld [vmem:[#allocation3 + $0x2c8] sm:$0xff]
    %v157 = vld [vmem:[#allocation3 + $0x2d0] sm:$0xff]
    %v158 = vld [vmem:[#allocation3 + $0x2d8] sm:$0xff]
    %v159 = vld [vmem:[#allocation3 + $0x2e0] sm:$0xff]
    %v160 = vld [vmem:[#allocation3 + $0x2e8] sm:$0xff]
    %v161 = vld [vmem:[#allocation3 + $0x2f0] sm:$0xff]
    %v162 = vld [vmem:[#allocation3 + $0x2f8] sm:$0xff]
    %v163 = vld [vmem:[#allocation3 + $0x300] sm:$0xff]
    %v164 = vld [vmem:[#allocation3 + $0x308] sm:$0xff]
    %v165 = vld [vmem:[#allocation3 + $0x310] sm:$0xff]
    %v166 = vld [vmem:[#allocation3 + $0x318] sm:$0xff]
    %v167 = vld [vmem:[#allocation3 + $0x320] sm:$0xff]
    %v168 = vld [vmem:[#allocation3 + $0x328] sm:$0xff]
    %v169 = vld [vmem:[#allocation3 + $0x330] sm:$0xff]
    %v170 = vld [vmem:[#allocation3 + $0x338] sm:$0xff]
    %v171 = vld [vmem:[#allocation3 + $0x340] sm:$0xff]
    %v172 = vld [vmem:[#allocation3 + $0x348] sm:$0xff]
    %v173 = vld [vmem:[#allocation3 + $0x350] sm:$0xff]
    %v174 = vld [vmem:[#allocation3 + $0x358] sm:$0xff]
    %v175 = vld [vmem:[#allocation3 + $0x360] sm:$0xff]
    %v176 = vld [vmem:[#allocation3 + $0x368] sm:$0xff]
    %v177 = vld [vmem:[#allocation3 + $0x370] sm:$0xff]
    %v178 = vld [vmem:[#allocation3 + $0x378] sm:$0xff]
    %v179 = vld [vmem:[#allocation3 + $0x380] sm:$0xff]
    %v180 = vld [vmem:[#allocation3 + $0x388] sm:$0xff]
    %v181 = vld [vmem:[#allocation3 + $0x390] sm:$0xff]
    %v182 = vld [vmem:[#allocation3 + $0x398] sm:$0xff]
    %v183 = vld [vmem:[#allocation3 + $0x3a0] sm:$0xff]
    %v184 = vld [vmem:[#allocation3 + $0x3a8] sm:$0xff]
    %v185 = vld [vmem:[#allocation3 + $0x3b0] sm:$0xff]
    %v186 = vld [vmem:[#allocation3 + $0x3b8] sm:$0xff]
    %v187 = vld [vmem:[#allocation3 + $0x3c0] sm:$0xff]
    %v188 = vld [vmem:[#allocation3 + $0x3c8] sm:$0xff]
    %v189 = vld [vmem:[#allocation3 + $0x3d0] sm:$0xff]
    %v190 = vld [vmem:[#allocation3 + $0x3d8] sm:$0xff]
    %v191 = vld [vmem:[#allocation3 + $0x3e0] sm:$0xff]
    %v192 = vld [vmem:[#allocation3 + $0x3e8] sm:$0xff]
    %v193 = vld [vmem:[#allocation3 + $0x3f0] sm:$0xff]
    %v194 = vld [vmem:[#allocation3 + $0x3f8] sm:$0xff]
    %v195 = vpack.c.bf16 %v68, %v67
    %v196 = vpack.c.bf16 %v70, %v69
    %v197 = vpack.c.bf16 %v72, %v71
    %v198 = vpack.c.bf16 %v74, %v73
    %v199 = vpack.c.bf16 %v76, %v75
    %v200 = vpack.c.bf16 %v78, %v77
    %v201 = vpack.c.bf16 %v80, %v79
    %v202 = vpack.c.bf16 %v82, %v81
    %v203 = vpack.c.bf16 %v84, %v83
    %v204 = vpack.c.bf16 %v86, %v85
    %v205 = vpack.c.bf16 %v88, %v87
    %v206 = vpack.c.bf16 %v90, %v89
    %v207 = vpack.c.bf16 %v92, %v91
    %v208 = vpack.c.bf16 %v94, %v93
    %v209 = vpack.c.bf16 %v96, %v95
    %v210 = vpack.c.bf16 %v98, %v97
    %v211 = vpack.c.bf16 %v100, %v99
    %v212 = vpack.c.bf16 %v102, %v101
    %v213 = vpack.c.bf16 %v104, %v103
    %v214 = vpack.c.bf16 %v106, %v105
    %v215 = vpack.c.bf16 %v108, %v107
    %v216 = vpack.c.bf16 %v110, %v109
    %v217 = vpack.c.bf16 %v112, %v111
    %v218 = vpack.c.bf16 %v114, %v113
    %v219 = vpack.c.bf16 %v116, %v115
    %v220 = vpack.c.bf16 %v118, %v117
    %v221 = vpack.c.bf16 %v120, %v119
    %v222 = vpack.c.bf16 %v122, %v121
    %v223 = vpack.c.bf16 %v124, %v123
    %v224 = vpack.c.bf16 %v126, %v125
    %v225 = vpack.c.bf16 %v128, %v127
    %v226 = vpack.c.bf16 %v130, %v129
    %v227 = vpack.c.bf16 %v132, %v131
    %v228 = vpack.c.bf16 %v134, %v133
    %v229 = vpack.c.bf16 %v136, %v135
    %v230 = vpack.c.bf16 %v138, %v137
    %v231 = vpack.c.bf16 %v140, %v139
    %v232 = vpack.c.bf16 %v142, %v141
    %v233 = vpack.c.bf16 %v144, %v143
    %v234 = vpack.c.bf16 %v146, %v145
    %v235 = vpack.c.bf16 %v148, %v147
    %v236 = vpack.c.bf16 %v150, %v149
    %v237 = vpack.c.bf16 %v152, %v151
    %v238 = vpack.c.bf16 %v154, %v153
    %v239 = vpack.c.bf16 %v156, %v155
    %v240 = vpack.c.bf16 %v158, %v157
    %v241 = vpack.c.bf16 %v160, %v159
    %v242 = vpack.c.bf16 %v162, %v161
    %v243 = vpack.c.bf16 %v164, %v163
    %v244 = vpack.c.bf16 %v166, %v165
    %v245 = vpack.c.bf16 %v168, %v167
    %v246 = vpack.c.bf16 %v170, %v169
    %v247 = vpack.c.bf16 %v172, %v171
    %v248 = vpack.c.bf16 %v174, %v173
    %v249 = vpack.c.bf16 %v176, %v175
    %v250 = vpack.c.bf16 %v178, %v177
    %v251 = vpack.c.bf16 %v180, %v179
    %v252 = vpack.c.bf16 %v182, %v181
    %v253 = vpack.c.bf16 %v184, %v183
    %v254 = vpack.c.bf16 %v186, %v185
    %v255 = vpack.c.bf16 %v188, %v187
    %v256 = vpack.c.bf16 %v190, %v189
    %v257 = vpack.c.bf16 %v192, %v191
    %v258 = vpack.c.bf16 %v194, %v193
    %v259 = vld [vmem:[#allocation6] sm:$0xf]
    %v260 = vld [vmem:[#allocation6 + $0x4] sm:$0xf]
    %v261 = vld [vmem:[#allocation6 + $0x8] sm:$0xf]
    %v262 = vld [vmem:[#allocation6 + $0xc] sm:$0xf]
    %v263 = vld [vmem:[%s4] sm:$0x1]
    %v264 = vlaneseq
    %v265 = vshrl.u32 %v264, 7
    %v266 = vsub.s32 0, %v265
    %v267 = vrot.slane %v263, %v266
    %v272 = vunpack.c.l.b16 %v259
    %v273 = vunpack.c.l.b16 %v260
    %v274 = vunpack.c.l.b16 %v261
    %v275 = vunpack.c.l.b16 %v262
    %v276 = vpack.c.b16 %v273, %v272
    %v277 = vpack.c.b16 %v275, %v274
    %vm280 = vcmask 261120
    %v282 = vsel %vm280, %v195, 0
    %v285 = vsel %vm280, %v196, 0
    %v288 = vsel %vm280, %v197, 0
    %v291 = vsel %vm280, %v198, 0
    %v294 = vsel %vm280, %v199, 0
    %v297 = vsel %vm280, %v200, 0
    %v300 = vsel %vm280, %v201, 0
    %v303 = vsel %vm280, %v202, 0
    %v306 = vsel %vm280, %v203, 0
    %v309 = vsel %vm280, %v204, 0
    %v312 = vsel %vm280, %v205, 0
    %v315 = vsel %vm280, %v206, 0
    %v318 = vsel %vm280, %v207, 0
    %v321 = vsel %vm280, %v208, 0
    %v324 = vsel %vm280, %v209, 0
    %v327 = vsel %vm280, %v210, 0
    %v330 = vsel %vm280, %v211, 0
    %v333 = vsel %vm280, %v212, 0
    %v336 = vsel %vm280, %v213, 0
    %v339 = vsel %vm280, %v214, 0
    %v342 = vsel %vm280, %v215, 0
    %v345 = vsel %vm280, %v216, 0
    %v348 = vsel %vm280, %v217, 0
    %v351 = vsel %vm280, %v218, 0
    %v354 = vsel %vm280, %v219, 0
    %v357 = vsel %vm280, %v220, 0
    %v360 = vsel %vm280, %v221, 0
    %v363 = vsel %vm280, %v222, 0
    %v366 = vsel %vm280, %v223, 0
    %v369 = vsel %vm280, %v224, 0
    %v372 = vsel %vm280, %v225, 0
    %v375 = vsel %vm280, %v226, 0
    %v378 = vsel %vm280, %v227, 0
    %v381 = vsel %vm280, %v228, 0
    %v384 = vsel %vm280, %v229, 0
    %v387 = vsel %vm280, %v230, 0
    %v390 = vsel %vm280, %v231, 0
    %v393 = vsel %vm280, %v232, 0
    %v396 = vsel %vm280, %v233, 0
    %v399 = vsel %vm280, %v234, 0
    %v402 = vsel %vm280, %v235, 0
    %v405 = vsel %vm280, %v236, 0
    %v408 = vsel %vm280, %v237, 0
    %v411 = vsel %vm280, %v238, 0
    %v414 = vsel %vm280, %v239, 0
    %v417 = vsel %vm280, %v240, 0
    %v420 = vsel %vm280, %v241, 0
    %v423 = vsel %vm280, %v242, 0
    %v426 = vsel %vm280, %v243, 0
    %v429 = vsel %vm280, %v244, 0
    %v432 = vsel %vm280, %v245, 0
    %v435 = vsel %vm280, %v246, 0
    %v438 = vsel %vm280, %v247, 0
    %v441 = vsel %vm280, %v248, 0
    %v444 = vsel %vm280, %v249, 0
    %v447 = vsel %vm280, %v250, 0
    %v450 = vsel %vm280, %v251, 0
    %v453 = vsel %vm280, %v252, 0
    %v456 = vsel %vm280, %v253, 0
    %v459 = vsel %vm280, %v254, 0
    %v462 = vsel %vm280, %v255, 0
    %v465 = vsel %vm280, %v256, 0
    %v468 = vsel %vm280, %v257, 0
    %v471 = vsel %vm280, %v258, 0
    %473 = vmatprep.subr.bf16.mxu0 0
    %474 = vmatpush1.bf16.msra.mxu0 %v276
    %475 = vmatprep.subr.bf16.mxu0 0
    %476 = vmatpush1.bf16.msra.mxu0 %v277
    %477 = vmatprep.subr.bf16.mxu0 0
    %478 = vmatpush1.bf16.msra.mxu0 0
    %479 = vmatprep.subr.bf16.mxu0 0
    %480 = vmatpush1.bf16.msra.mxu0 0
    %481 = vmatprep.subr.bf16.mxu0 0
    %482 = vmatpush1.bf16.msra.mxu0 0
    %483 = vmatprep.subr.bf16.mxu0 0
    %484 = vmatpush1.bf16.msra.mxu0 0
    %485 = vmatprep.subr.bf16.mxu0 0
    %486 = vmatpush1.bf16.msra.mxu0 0
    %487 = vmatprep.subr.bf16.mxu0 0
    %488 = vmatpush1.bf16.msra.mxu0 0
    %489 = vmatprep.subr.bf16.mxu0 0
    %490 = vmatpush1.bf16.msra.mxu0 0
    %491 = vmatprep.subr.bf16.mxu0 0
    %492 = vmatpush1.bf16.msra.mxu0 0
    %493 = vmatprep.subr.bf16.mxu0 0
    %494 = vmatpush1.bf16.msra.mxu0 0
    %495 = vmatprep.subr.bf16.mxu0 0
    %496 = vmatpush1.bf16.msra.mxu0 0
    %497 = vmatprep.subr.bf16.mxu0 0
    %498 = vmatpush1.bf16.msra.mxu0 0
    %499 = vmatprep.subr.bf16.mxu0 0
    %500 = vmatpush1.bf16.msra.mxu0 0
    %501 = vmatprep.subr.bf16.mxu0 0
    %502 = vmatpush1.bf16.msra.mxu0 0
    %503 = vmatprep.subr.bf16.mxu0 0
    %504 = vmatpush1.bf16.msra.mxu0 0
    %505 = vmatprep.mubr.bf16.mxu0 0
    %506 = vmatmul.mubr.bf16.gmra.mrb[0].mxu0 %v282
    %v507 = vpop.f32.mrb[0].mxu0
    %v508 = vadd.f32 %v267, %v507
    %v509 = vpop.f32.mrb[0].mxu0
    %v510 = vpop.f32.mrb[0].mxu0
    %v511 = vadd.f32 %v267, %v510
    %v512 = vpop.f32.mrb[0].mxu0
    %513 = vmatprep.mubr.bf16.mxu0 0
    %514 = vmatmul.mubr.bf16.gmra.mrb[0].mxu0 %v285
    %v515 = vpop.f32.mrb[0].mxu0
    %v516 = vadd.f32 %v267, %v515
    %v517 = vpop.f32.mrb[0].mxu0
    %v518 = vpop.f32.mrb[0].mxu0
    %v519 = vadd.f32 %v267, %v518
    %v520 = vpop.f32.mrb[0].mxu0
    %521 = vmatprep.mubr.bf16.mxu0 0
    %522 = vmatmul.mubr.bf16.gmra.mrb[0].mxu0 %v288
    %v523 = vpop.f32.mrb[0].mxu0
    %v524 = vadd.f32 %v267, %v523
    %v525 = vpop.f32.mrb[0].mxu0
    %v526 = vpop.f32.mrb[0].mxu0
    %v527 = vadd.f32 %v267, %v526
    %v528 = vpop.f32.mrb[0].mxu0
    %529 = vmatprep.mubr.bf16.mxu0 0
    %530 = vmatmul.mubr.bf16.gmra.mrb[0].mxu0 %v291
    %v531 = vpop.f32.mrb[0].mxu0
    %v532 = vadd.f32 %v267, %v531
    %v533 = vpop.f32.mrb[0].mxu0
    %v534 = vpop.f32.mrb[0].mxu0
    %v535 = vadd.f32 %v267, %v534
    %v536 = vpop.f32.mrb[0].mxu0
    %537 = vmatprep.mubr.bf16.mxu0 0
    %538 = vmatmul.mubr.bf16.gmra.mrb[0].mxu0 %v294
    %v539 = vpop.f32.mrb[0].mxu0
    %v540 = vadd.f32 %v267, %v539
    %v541 = vpop.f32.mrb[0].mxu0
    %v542 = vpop.f32.mrb[0].mxu0
    %v543 = vadd.f32 %v267, %v542
    %v544 = vpop.f32.mrb[0].mxu0
    %545 = vmatprep.mubr.bf16.mxu0 0
    %546 = vmatmul.mubr.bf16.gmra.mrb[0].mxu0 %v297
    %v547 = vpop.f32.mrb[0].mxu0
    %v548 = vadd.f32 %v267, %v547
    %v549 = vpop.f32.mrb[0].mxu0
    %v550 = vpop.f32.mrb[0].mxu0
    %v551 = vadd.f32 %v267, %v550
    %v552 = vpop.f32.mrb[0].mxu0
    %553 = vmatprep.mubr.bf16.mxu0 0
    %554 = vmatmul.mubr.bf16.gmra.mrb[0].mxu0 %v300
    %v555 = vpop.f32.mrb[0].mxu0
    %v556 = vadd.f32 %v267, %v555
    %v557 = vpop.f32.mrb[0].mxu0
    %v558 = vpop.f32.mrb[0].mxu0
    %v559 = vadd.f32 %v267, %v558
    %v560 = vpop.f32.mrb[0].mxu0
    %561 = vmatprep.mubr.bf16.mxu0 0
    %562 = vmatmul.mubr.bf16.gmra.mrb[0].mxu0 %v303
    %v563 = vpop.f32.mrb[0].mxu0
    %v564 = vadd.f32 %v267, %v563
    %v565 = vpop.f32.mrb[0].mxu0
    %v566 = vpop.f32.mrb[0].mxu0
    %v567 = vadd.f32 %v267, %v566
    %v568 = vpop.f32.mrb[0].mxu0
    %569 = vmatprep.mubr.bf16.mxu0 0
    %570 = vmatmul.mubr.bf16.gmra.mrb[0].mxu0 %v306
    %v571 = vpop.f32.mrb[0].mxu0
    %v572 = vadd.f32 %v267, %v571
    %v573 = vpop.f32.mrb[0].mxu0
    %v574 = vpop.f32.mrb[0].mxu0
    %v575 = vadd.f32 %v267, %v574
    %v576 = vpop.f32.mrb[0].mxu0
    %577 = vmatprep.mubr.bf16.mxu0 0
    %578 = vmatmul.mubr.bf16.gmra.mrb[0].mxu0 %v309
    %v579 = vpop.f32.mrb[0].mxu0
    %v580 = vadd.f32 %v267, %v579
    %v581 = vpop.f32.mrb[0].mxu0
    %v582 = vpop.f32.mrb[0].mxu0
    %v583 = vadd.f32 %v267, %v582
    %v584 = vpop.f32.mrb[0].mxu0
    %585 = vmatprep.mubr.bf16.mxu0 0
    %586 = vmatmul.mubr.bf16.gmra.mrb[0].mxu0 %v312
    %v587 = vpop.f32.mrb[0].mxu0
    %v588 = vadd.f32 %v267, %v587
    %v589 = vpop.f32.mrb[0].mxu0
    %v590 = vpop.f32.mrb[0].mxu0
    %v591 = vadd.f32 %v267, %v590
    %v592 = vpop.f32.mrb[0].mxu0
    %593 = vmatprep.mubr.bf16.mxu0 0
    %594 = vmatmul.mubr.bf16.gmra.mrb[0].mxu0 %v315
    %v595 = vpop.f32.mrb[0].mxu0
    %v596 = vadd.f32 %v267, %v595
    %v597 = vpop.f32.mrb[0].mxu0
    %v598 = vpop.f32.mrb[0].mxu0
    %v599 = vadd.f32 %v267, %v598
    %v600 = vpop.f32.mrb[0].mxu0
    %601 = vmatprep.mubr.bf16.mxu0 0
    %602 = vmatmul.mubr.bf16.gmra.mrb[0].mxu0 %v318
    %v603 = vpop.f32.mrb[0].mxu0
    %v604 = vadd.f32 %v267, %v603
    %v605 = vpop.f32.mrb[0].mxu0
    %v606 = vpop.f32.mrb[0].mxu0
    %v607 = vadd.f32 %v267, %v606
    %v608 = vpop.f32.mrb[0].mxu0
    %609 = vmatprep.mubr.bf16.mxu0 0
    %610 = vmatmul.mubr.bf16.gmra.mrb[0].mxu0 %v321
    %v611 = vpop.f32.mrb[0].mxu0
    %v612 = vadd.f32 %v267, %v611
    %v613 = vpop.f32.mrb[0].mxu0
    %v614 = vpop.f32.mrb[0].mxu0
    %v615 = vadd.f32 %v267, %v614
    %v616 = vpop.f32.mrb[0].mxu0
    %617 = vmatprep.mubr.bf16.mxu0 0
    %618 = vmatmul.mubr.bf16.gmra.mrb[0].mxu0 %v324
    %v619 = vpop.f32.mrb[0].mxu0
    %v620 = vadd.f32 %v267, %v619
    %v621 = vpop.f32.mrb[0].mxu0
    %v622 = vpop.f32.mrb[0].mxu0
    %v623 = vadd.f32 %v267, %v622
    %v624 = vpop.f32.mrb[0].mxu0
    %625 = vmatprep.mubr.bf16.mxu0 0
    %626 = vmatmul.mubr.bf16.gmra.mrb[0].mxu0 %v327
    %v627 = vpop.f32.mrb[0].mxu0
    %v628 = vadd.f32 %v267, %v627
    %v629 = vpop.f32.mrb[0].mxu0
    %v630 = vpop.f32.mrb[0].mxu0
    %v631 = vadd.f32 %v267, %v630
    %v632 = vpop.f32.mrb[0].mxu0
    %633 = vmatprep.mubr.bf16.mxu0 0
    %634 = vmatmul.mubr.bf16.gmra.mrb[0].mxu0 %v330
    %v635 = vpop.f32.mrb[0].mxu0
    %v636 = vadd.f32 %v267, %v635
    %v637 = vpop.f32.mrb[0].mxu0
    %v638 = vpop.f32.mrb[0].mxu0
    %v639 = vadd.f32 %v267, %v638
    %v640 = vpop.f32.mrb[0].mxu0
    %641 = vmatprep.mubr.bf16.mxu0 0
    %642 = vmatmul.mubr.bf16.gmra.mrb[0].mxu0 %v333
    %v643 = vpop.f32.mrb[0].mxu0
    %v644 = vadd.f32 %v267, %v643
    %v645 = vpop.f32.mrb[0].mxu0
    %v646 = vpop.f32.mrb[0].mxu0
    %v647 = vadd.f32 %v267, %v646
    %v648 = vpop.f32.mrb[0].mxu0
    %649 = vmatprep.mubr.bf16.mxu0 0
    %650 = vmatmul.mubr.bf16.gmra.mrb[0].mxu0 %v336
    %v651 = vpop.f32.mrb[0].mxu0
    %v652 = vadd.f32 %v267, %v651
    %v653 = vpop.f32.mrb[0].mxu0
    %v654 = vpop.f32.mrb[0].mxu0
    %v655 = vadd.f32 %v267, %v654
    %v656 = vpop.f32.mrb[0].mxu0
    %657 = vmatprep.mubr.bf16.mxu0 0
    %658 = vmatmul.mubr.bf16.gmra.mrb[0].mxu0 %v339
    %v659 = vpop.f32.mrb[0].mxu0
    %v660 = vadd.f32 %v267, %v659
    %v661 = vpop.f32.mrb[0].mxu0
    %v662 = vpop.f32.mrb[0].mxu0
    %v663 = vadd.f32 %v267, %v662
    %v664 = vpop.f32.mrb[0].mxu0
    %665 = vmatprep.mubr.bf16.mxu0 0
    %666 = vmatmul.mubr.bf16.gmra.mrb[0].mxu0 %v342
    %v667 = vpop.f32.mrb[0].mxu0
    %v668 = vadd.f32 %v267, %v667
    %v669 = vpop.f32.mrb[0].mxu0
    %v670 = vpop.f32.mrb[0].mxu0
    %v671 = vadd.f32 %v267, %v670
    %v672 = vpop.f32.mrb[0].mxu0
    %673 = vmatprep.mubr.bf16.mxu0 0
    %674 = vmatmul.mubr.bf16.gmra.mrb[0].mxu0 %v345
    %v675 = vpop.f32.mrb[0].mxu0
    %v676 = vadd.f32 %v267, %v675
    %v677 = vpop.f32.mrb[0].mxu0
    %v678 = vpop.f32.mrb[0].mxu0
    %v679 = vadd.f32 %v267, %v678
    %v680 = vpop.f32.mrb[0].mxu0
    %681 = vmatprep.mubr.bf16.mxu0 0
    %682 = vmatmul.mubr.bf16.gmra.mrb[0].mxu0 %v348
    %v683 = vpop.f32.mrb[0].mxu0
    %v684 = vadd.f32 %v267, %v683
    %v685 = vpop.f32.mrb[0].mxu0
    %v686 = vpop.f32.mrb[0].mxu0
    %v687 = vadd.f32 %v267, %v686
    %v688 = vpop.f32.mrb[0].mxu0
    %689 = vmatprep.mubr.bf16.mxu0 0
    %690 = vmatmul.mubr.bf16.gmra.mrb[0].mxu0 %v351
    %v691 = vpop.f32.mrb[0].mxu0
    %v692 = vadd.f32 %v267, %v691
    %v693 = vpop.f32.mrb[0].mxu0
    %v694 = vpop.f32.mrb[0].mxu0
    %v695 = vadd.f32 %v267, %v694
    %v696 = vpop.f32.mrb[0].mxu0
    %697 = vmatprep.mubr.bf16.mxu0 0
    %698 = vmatmul.mubr.bf16.gmra.mrb[0].mxu0 %v354
    %v699 = vpop.f32.mrb[0].mxu0
    %v700 = vadd.f32 %v267, %v699
    %v701 = vpop.f32.mrb[0].mxu0
    %v702 = vpop.f32.mrb[0].mxu0
    %v703 = vadd.f32 %v267, %v702
    %v704 = vpop.f32.mrb[0].mxu0
    %705 = vmatprep.mubr.bf16.mxu0 0
    %706 = vmatmul.mubr.bf16.gmra.mrb[0].mxu0 %v357
    %v707 = vpop.f32.mrb[0].mxu0
    %v708 = vadd.f32 %v267, %v707
    %v709 = vpop.f32.mrb[0].mxu0
    %v710 = vpop.f32.mrb[0].mxu0
    %v711 = vadd.f32 %v267, %v710
    %v712 = vpop.f32.mrb[0].mxu0
    %713 = vmatprep.mubr.bf16.mxu0 0
    %714 = vmatmul.mubr.bf16.gmra.mrb[0].mxu0 %v360
    %v715 = vpop.f32.mrb[0].mxu0
    %v716 = vadd.f32 %v267, %v715
    %v717 = vpop.f32.mrb[0].mxu0
    %v718 = vpop.f32.mrb[0].mxu0
    %v719 = vadd.f32 %v267, %v718
    %v720 = vpop.f32.mrb[0].mxu0
    %721 = vmatprep.mubr.bf16.mxu0 0
    %722 = vmatmul.mubr.bf16.gmra.mrb[0].mxu0 %v363
    %v723 = vpop.f32.mrb[0].mxu0
    %v724 = vadd.f32 %v267, %v723
    %v725 = vpop.f32.mrb[0].mxu0
    %v726 = vpop.f32.mrb[0].mxu0
    %v727 = vadd.f32 %v267, %v726
    %v728 = vpop.f32.mrb[0].mxu0
    %729 = vmatprep.mubr.bf16.mxu0 0
    %730 = vmatmul.mubr.bf16.gmra.mrb[0].mxu0 %v366
    %v731 = vpop.f32.mrb[0].mxu0
    %v732 = vadd.f32 %v267, %v731
    %v733 = vpop.f32.mrb[0].mxu0
    %v734 = vpop.f32.mrb[0].mxu0
    %v735 = vadd.f32 %v267, %v734
    %v736 = vpop.f32.mrb[0].mxu0
    %737 = vmatprep.mubr.bf16.mxu0 0
    %738 = vmatmul.mubr.bf16.gmra.mrb[0].mxu0 %v369
    %v739 = vpop.f32.mrb[0].mxu0
    %v740 = vadd.f32 %v267, %v739
    %v741 = vpop.f32.mrb[0].mxu0
    %v742 = vpop.f32.mrb[0].mxu0
    %v743 = vadd.f32 %v267, %v742
    %v744 = vpop.f32.mrb[0].mxu0
    %745 = vmatprep.mubr.bf16.mxu0 0
    %746 = vmatmul.mubr.bf16.gmra.mrb[0].mxu0 %v372
    %v747 = vpop.f32.mrb[0].mxu0
    %v748 = vadd.f32 %v267, %v747
    %v749 = vpop.f32.mrb[0].mxu0
    %v750 = vpop.f32.mrb[0].mxu0
    %v751 = vadd.f32 %v267, %v750
    %v752 = vpop.f32.mrb[0].mxu0
    %753 = vmatprep.mubr.bf16.mxu0 0
    %754 = vmatmul.mubr.bf16.gmra.mrb[0].mxu0 %v375
    %v755 = vpop.f32.mrb[0].mxu0
    %v756 = vadd.f32 %v267, %v755
    %v757 = vpop.f32.mrb[0].mxu0
    %v758 = vpop.f32.mrb[0].mxu0
    %v759 = vadd.f32 %v267, %v758
    %v760 = vpop.f32.mrb[0].mxu0
    %761 = vmatprep.mubr.bf16.mxu0 0
    %762 = vmatmul.mubr.bf16.gmra.mrb[0].mxu0 %v378
    %v763 = vpop.f32.mrb[0].mxu0
    %v764 = vadd.f32 %v267, %v763
    %v765 = vpop.f32.mrb[0].mxu0
    %v766 = vpop.f32.mrb[0].mxu0
    %v767 = vadd.f32 %v267, %v766
    %v768 = vpop.f32.mrb[0].mxu0
    %769 = vmatprep.mubr.bf16.mxu0 0
    %770 = vmatmul.mubr.bf16.gmra.mrb[0].mxu0 %v381
    %v771 = vpop.f32.mrb[0].mxu0
    %v772 = vadd.f32 %v267, %v771
    %v773 = vpop.f32.mrb[0].mxu0
    %v774 = vpop.f32.mrb[0].mxu0
    %v775 = vadd.f32 %v267, %v774
    %v776 = vpop.f32.mrb[0].mxu0
    %777 = vmatprep.mubr.bf16.mxu0 0
    %778 = vmatmul.mubr.bf16.gmra.mrb[0].mxu0 %v384
    %v779 = vpop.f32.mrb[0].mxu0
    %v780 = vadd.f32 %v267, %v779
    %v781 = vpop.f32.mrb[0].mxu0
    %v782 = vpop.f32.mrb[0].mxu0
    %v783 = vadd.f32 %v267, %v782
    %v784 = vpop.f32.mrb[0].mxu0
    %785 = vmatprep.mubr.bf16.mxu0 0
    %786 = vmatmul.mubr.bf16.gmra.mrb[0].mxu0 %v387
    %v787 = vpop.f32.mrb[0].mxu0
    %v788 = vadd.f32 %v267, %v787
    %v789 = vpop.f32.mrb[0].mxu0
    %v790 = vpop.f32.mrb[0].mxu0
    %v791 = vadd.f32 %v267, %v790
    %v792 = vpop.f32.mrb[0].mxu0
    %793 = vmatprep.mubr.bf16.mxu0 0
    %794 = vmatmul.mubr.bf16.gmra.mrb[0].mxu0 %v390
    %v795 = vpop.f32.mrb[0].mxu0
    %v796 = vadd.f32 %v267, %v795
    %v797 = vpop.f32.mrb[0].mxu0
    %v798 = vpop.f32.mrb[0].mxu0
    %v799 = vadd.f32 %v267, %v798
    %v800 = vpop.f32.mrb[0].mxu0
    %801 = vmatprep.mubr.bf16.mxu0 0
    %802 = vmatmul.mubr.bf16.gmra.mrb[0].mxu0 %v393
    %v803 = vpop.f32.mrb[0].mxu0
    %v804 = vadd.f32 %v267, %v803
    %v805 = vpop.f32.mrb[0].mxu0
    %v806 = vpop.f32.mrb[0].mxu0
    %v807 = vadd.f32 %v267, %v806
    %v808 = vpop.f32.mrb[0].mxu0
    %809 = vmatprep.mubr.bf16.mxu0 0
    %810 = vmatmul.mubr.bf16.gmra.mrb[0].mxu0 %v396
    %v811 = vpop.f32.mrb[0].mxu0
    %v812 = vadd.f32 %v267, %v811
    %v813 = vpop.f32.mrb[0].mxu0
    %v814 = vpop.f32.mrb[0].mxu0
    %v815 = vadd.f32 %v267, %v814
    %v816 = vpop.f32.mrb[0].mxu0
    %817 = vmatprep.mubr.bf16.mxu0 0
    %818 = vmatmul.mubr.bf16.gmra.mrb[0].mxu0 %v399
    %v819 = vpop.f32.mrb[0].mxu0
    %v820 = vadd.f32 %v267, %v819
    %v821 = vpop.f32.mrb[0].mxu0
    %v822 = vpop.f32.mrb[0].mxu0
    %v823 = vadd.f32 %v267, %v822
    %v824 = vpop.f32.mrb[0].mxu0
    %825 = vmatprep.mubr.bf16.mxu0 0
    %826 = vmatmul.mubr.bf16.gmra.mrb[0].mxu0 %v402
    %v827 = vpop.f32.mrb[0].mxu0
    %v828 = vadd.f32 %v267, %v827
    %v829 = vpop.f32.mrb[0].mxu0
    %v830 = vpop.f32.mrb[0].mxu0
    %v831 = vadd.f32 %v267, %v830
    %v832 = vpop.f32.mrb[0].mxu0
    %833 = vmatprep.mubr.bf16.mxu0 0
    %834 = vmatmul.mubr.bf16.gmra.mrb[0].mxu0 %v405
    %v835 = vpop.f32.mrb[0].mxu0
    %v836 = vadd.f32 %v267, %v835
    %v837 = vpop.f32.mrb[0].mxu0
    %v838 = vpop.f32.mrb[0].mxu0
    %v839 = vadd.f32 %v267, %v838
    %v840 = vpop.f32.mrb[0].mxu0
    %841 = vmatprep.mubr.bf16.mxu0 0
    %842 = vmatmul.mubr.bf16.gmra.mrb[0].mxu0 %v408
    %v843 = vpop.f32.mrb[0].mxu0
    %v844 = vadd.f32 %v267, %v843
    %v845 = vpop.f32.mrb[0].mxu0
    %v846 = vpop.f32.mrb[0].mxu0
    %v847 = vadd.f32 %v267, %v846
    %v848 = vpop.f32.mrb[0].mxu0
    %849 = vmatprep.mubr.bf16.mxu0 0
    %850 = vmatmul.mubr.bf16.gmra.mrb[0].mxu0 %v411
    %v851 = vpop.f32.mrb[0].mxu0
    %v852 = vadd.f32 %v267, %v851
    %v853 = vpop.f32.mrb[0].mxu0
    %v854 = vpop.f32.mrb[0].mxu0
    %v855 = vadd.f32 %v267, %v854
    %v856 = vpop.f32.mrb[0].mxu0
    %857 = vmatprep.mubr.bf16.mxu0 0
    %858 = vmatmul.mubr.bf16.gmra.mrb[0].mxu0 %v414
    %v859 = vpop.f32.mrb[0].mxu0
    %v860 = vadd.f32 %v267, %v859
    %v861 = vpop.f32.mrb[0].mxu0
    %v862 = vpop.f32.mrb[0].mxu0
    %v863 = vadd.f32 %v267, %v862
    %v864 = vpop.f32.mrb[0].mxu0
    %865 = vmatprep.mubr.bf16.mxu0 0
    %866 = vmatmul.mubr.bf16.gmra.mrb[0].mxu0 %v417
    %v867 = vpop.f32.mrb[0].mxu0
    %v868 = vadd.f32 %v267, %v867
    %v869 = vpop.f32.mrb[0].mxu0
    %v870 = vpop.f32.mrb[0].mxu0
    %v871 = vadd.f32 %v267, %v870
    %v872 = vpop.f32.mrb[0].mxu0
    %873 = vmatprep.mubr.bf16.mxu0 0
    %874 = vmatmul.mubr.bf16.gmra.mrb[0].mxu0 %v420
    %v875 = vpop.f32.mrb[0].mxu0
    %v876 = vadd.f32 %v267, %v875
    %v877 = vpop.f32.mrb[0].mxu0
    %v878 = vpop.f32.mrb[0].mxu0
    %v879 = vadd.f32 %v267, %v878
    %v880 = vpop.f32.mrb[0].mxu0
    %881 = vmatprep.mubr.bf16.mxu0 0
    %882 = vmatmul.mubr.bf16.gmra.mrb[0].mxu0 %v423
    %v883 = vpop.f32.mrb[0].mxu0
    %v884 = vadd.f32 %v267, %v883
    %v885 = vpop.f32.mrb[0].mxu0
    %v886 = vpop.f32.mrb[0].mxu0
    %v887 = vadd.f32 %v267, %v886
    %v888 = vpop.f32.mrb[0].mxu0
    %889 = vmatprep.mubr.bf16.mxu0 0
    %890 = vmatmul.mubr.bf16.gmra.mrb[0].mxu0 %v426
    %v891 = vpop.f32.mrb[0].mxu0
    %v892 = vadd.f32 %v267, %v891
    %v893 = vpop.f32.mrb[0].mxu0
    %v894 = vpop.f32.mrb[0].mxu0
    %v895 = vadd.f32 %v267, %v894
    %v896 = vpop.f32.mrb[0].mxu0
    %897 = vmatprep.mubr.bf16.mxu0 0
    %898 = vmatmul.mubr.bf16.gmra.mrb[0].mxu0 %v429
    %v899 = vpop.f32.mrb[0].mxu0
    %v900 = vadd.f32 %v267, %v899
    %v901 = vpop.f32.mrb[0].mxu0
    %v902 = vpop.f32.mrb[0].mxu0
    %v903 = vadd.f32 %v267, %v902
    %v904 = vpop.f32.mrb[0].mxu0
    %905 = vmatprep.mubr.bf16.mxu0 0
    %906 = vmatmul.mubr.bf16.gmra.mrb[0].mxu0 %v432
    %v907 = vpop.f32.mrb[0].mxu0
    %v908 = vadd.f32 %v267, %v907
    %v909 = vpop.f32.mrb[0].mxu0
    %v910 = vpop.f32.mrb[0].mxu0
    %v911 = vadd.f32 %v267, %v910
    %v912 = vpop.f32.mrb[0].mxu0
    %913 = vmatprep.mubr.bf16.mxu0 0
    %914 = vmatmul.mubr.bf16.gmra.mrb[0].mxu0 %v435
    %v915 = vpop.f32.mrb[0].mxu0
    %v916 = vadd.f32 %v267, %v915
    %v917 = vpop.f32.mrb[0].mxu0
    %v918 = vpop.f32.mrb[0].mxu0
    %v919 = vadd.f32 %v267, %v918
    %v920 = vpop.f32.mrb[0].mxu0
    %921 = vmatprep.mubr.bf16.mxu0 0
    %922 = vmatmul.mubr.bf16.gmra.mrb[0].mxu0 %v438
    %v923 = vpop.f32.mrb[0].mxu0
    %v924 = vadd.f32 %v267, %v923
    %v925 = vpop.f32.mrb[0].mxu0
    %v926 = vpop.f32.mrb[0].mxu0
    %v927 = vadd.f32 %v267, %v926
    %v928 = vpop.f32.mrb[0].mxu0
    %929 = vmatprep.mubr.bf16.mxu0 0
    %930 = vmatmul.mubr.bf16.gmra.mrb[0].mxu0 %v441
    %v931 = vpop.f32.mrb[0].mxu0
    %v932 = vadd.f32 %v267, %v931
    %v933 = vpop.f32.mrb[0].mxu0
    %v934 = vpop.f32.mrb[0].mxu0
    %v935 = vadd.f32 %v267, %v934
    %v936 = vpop.f32.mrb[0].mxu0
    %937 = vmatprep.mubr.bf16.mxu0 0
    %938 = vmatmul.mubr.bf16.gmra.mrb[0].mxu0 %v444
    %v939 = vpop.f32.mrb[0].mxu0
    %v940 = vadd.f32 %v267, %v939
    %v941 = vpop.f32.mrb[0].mxu0
    %v942 = vpop.f32.mrb[0].mxu0
    %v943 = vadd.f32 %v267, %v942
    %v944 = vpop.f32.mrb[0].mxu0
    %945 = vmatprep.mubr.bf16.mxu0 0
    %946 = vmatmul.mubr.bf16.gmra.mrb[0].mxu0 %v447
    %v947 = vpop.f32.mrb[0].mxu0
    %v948 = vadd.f32 %v267, %v947
    %v949 = vpop.f32.mrb[0].mxu0
    %v950 = vpop.f32.mrb[0].mxu0
    %v951 = vadd.f32 %v267, %v950
    %v952 = vpop.f32.mrb[0].mxu0
    %953 = vmatprep.mubr.bf16.mxu0 0
    %954 = vmatmul.mubr.bf16.gmra.mrb[0].mxu0 %v450
    %v955 = vpop.f32.mrb[0].mxu0
    %v956 = vadd.f32 %v267, %v955
    %v957 = vpop.f32.mrb[0].mxu0
    %v958 = vpop.f32.mrb[0].mxu0
    %v959 = vadd.f32 %v267, %v958
    %v960 = vpop.f32.mrb[0].mxu0
    %961 = vmatprep.mubr.bf16.mxu0 0
    %962 = vmatmul.mubr.bf16.gmra.mrb[0].mxu0 %v453
    %v963 = vpop.f32.mrb[0].mxu0
    %v964 = vadd.f32 %v267, %v963
    %v965 = vpop.f32.mrb[0].mxu0
    %v966 = vpop.f32.mrb[0].mxu0
    %v967 = vadd.f32 %v267, %v966
    %v968 = vpop.f32.mrb[0].mxu0
    %969 = vmatprep.mubr.bf16.mxu0 0
    %970 = vmatmul.mubr.bf16.gmra.mrb[0].mxu0 %v456
    %v971 = vpop.f32.mrb[0].mxu0
    %v972 = vadd.f32 %v267, %v971
    %v973 = vpop.f32.mrb[0].mxu0
    %v974 = vpop.f32.mrb[0].mxu0
    %v975 = vadd.f32 %v267, %v974
    %v976 = vpop.f32.mrb[0].mxu0
    %977 = vmatprep.mubr.bf16.mxu0 0
    %978 = vmatmul.mubr.bf16.gmra.mrb[0].mxu0 %v459
    %v979 = vpop.f32.mrb[0].mxu0
    %v980 = vadd.f32 %v267, %v979
    %v981 = vpop.f32.mrb[0].mxu0
    %v982 = vpop.f32.mrb[0].mxu0
    %v983 = vadd.f32 %v267, %v982
    %v984 = vpop.f32.mrb[0].mxu0
    %985 = vmatprep.mubr.bf16.mxu0 0
    %986 = vmatmul.mubr.bf16.gmra.mrb[0].mxu0 %v462
    %v987 = vpop.f32.mrb[0].mxu0
    %v988 = vadd.f32 %v267, %v987
    %v989 = vpop.f32.mrb[0].mxu0
    %v990 = vpop.f32.mrb[0].mxu0
    %v991 = vadd.f32 %v267, %v990
    %v992 = vpop.f32.mrb[0].mxu0
    %993 = vmatprep.mubr.bf16.mxu0 0
    %994 = vmatmul.mubr.bf16.gmra.mrb[0].mxu0 %v465
    %v995 = vpop.f32.mrb[0].mxu0
    %v996 = vadd.f32 %v267, %v995
    %v997 = vpop.f32.mrb[0].mxu0
    %v998 = vpop.f32.mrb[0].mxu0
    %v999 = vadd.f32 %v267, %v998
    %v1000 = vpop.f32.mrb[0].mxu0
    %1001 = vmatprep.mubr.bf16.mxu0 0
    %1002 = vmatmul.mubr.bf16.gmra.mrb[0].mxu0 %v468
    %v1003 = vpop.f32.mrb[0].mxu0
    %v1004 = vadd.f32 %v267, %v1003
    %v1005 = vpop.f32.mrb[0].mxu0
    %v1006 = vpop.f32.mrb[0].mxu0
    %v1007 = vadd.f32 %v267, %v1006
    %v1008 = vpop.f32.mrb[0].mxu0
    %1009 = vmatprep.mubr.bf16.mxu0 0
    %1010 = vmatmul.mubr.bf16.gmra.mrb[0].mxu0 %v471
    %v1011 = vpop.f32.mrb[0].mxu0
    %v1012 = vadd.f32 %v267, %v1011
    %v1013 = vpop.f32.mrb[0].mxu0
    %v1014 = vpop.f32.mrb[0].mxu0
    %v1015 = vadd.f32 %v267, %v1014
    %v1016 = vpop.f32.mrb[0].mxu0
    %1017 = vdwg.mxu0
    %v1018 = vmax.f32 %v508, 0.0
    %v1019 = vmax.f32 %v511, 0.0
    %v1020 = vmax.f32 %v516, 0.0
    %v1021 = vmax.f32 %v519, 0.0
    %v1022 = vmax.f32 %v524, 0.0
    %v1023 = vmax.f32 %v527, 0.0
    %v1024 = vmax.f32 %v532, 0.0
    %v1025 = vmax.f32 %v535, 0.0
    %v1026 = vmax.f32 %v540, 0.0
    %v1027 = vmax.f32 %v543, 0.0
    %v1028 = vmax.f32 %v548, 0.0
    %v1029 = vmax.f32 %v551, 0.0
    %v1030 = vmax.f32 %v556, 0.0
    %v1031 = vmax.f32 %v559, 0.0
    %v1032 = vmax.f32 %v564, 0.0
    %v1033 = vmax.f32 %v567, 0.0
    %v1034 = vmax.f32 %v572, 0.0
    %v1035 = vmax.f32 %v575, 0.0
    %v1036 = vmax.f32 %v580, 0.0
    %v1037 = vmax.f32 %v583, 0.0
    %v1038 = vmax.f32 %v588, 0.0
    %v1039 = vmax.f32 %v591, 0.0
    %v1040 = vmax.f32 %v596, 0.0
    %v1041 = vmax.f32 %v599, 0.0
    %v1042 = vmax.f32 %v604, 0.0
    %v1043 = vmax.f32 %v607, 0.0
    %v1044 = vmax.f32 %v612, 0.0
    %v1045 = vmax.f32 %v615, 0.0
    %v1046 = vmax.f32 %v620, 0.0
    %v1047 = vmax.f32 %v623, 0.0
    %v1048 = vmax.f32 %v628, 0.0
    %v1049 = vmax.f32 %v631, 0.0
    %v1050 = vmax.f32 %v636, 0.0
    %v1051 = vmax.f32 %v639, 0.0
    %v1052 = vmax.f32 %v644, 0.0
    %v1053 = vmax.f32 %v647, 0.0
    %v1054 = vmax.f32 %v652, 0.0
    %v1055 = vmax.f32 %v655, 0.0
    %v1056 = vmax.f32 %v660, 0.0
    %v1057 = vmax.f32 %v663, 0.0
    %v1058 = vmax.f32 %v668, 0.0
    %v1059 = vmax.f32 %v671, 0.0
    %v1060 = vmax.f32 %v676, 0.0
    %v1061 = vmax.f32 %v679, 0.0
    %v1062 = vmax.f32 %v684, 0.0
    %v1063 = vmax.f32 %v687, 0.0
    %v1064 = vmax.f32 %v692, 0.0
    %v1065 = vmax.f32 %v695, 0.0
    %v1066 = vmax.f32 %v700, 0.0
    %v1067 = vmax.f32 %v703, 0.0
    %v1068 = vmax.f32 %v708, 0.0
    %v1069 = vmax.f32 %v711, 0.0
    %v1070 = vmax.f32 %v716, 0.0
    %v1071 = vmax.f32 %v719, 0.0
    %v1072 = vmax.f32 %v724, 0.0
    %v1073 = vmax.f32 %v727, 0.0
    %v1074 = vmax.f32 %v732, 0.0
    %v1075 = vmax.f32 %v735, 0.0
    %v1076 = vmax.f32 %v740, 0.0
    %v1077 = vmax.f32 %v743, 0.0
    %v1078 = vmax.f32 %v748, 0.0
    %v1079 = vmax.f32 %v751, 0.0
    %v1080 = vmax.f32 %v756, 0.0
    %v1081 = vmax.f32 %v759, 0.0
    %v1082 = vmax.f32 %v764, 0.0
    %v1083 = vmax.f32 %v767, 0.0
    %v1084 = vmax.f32 %v772, 0.0
    %v1085 = vmax.f32 %v775, 0.0
    %v1086 = vmax.f32 %v780, 0.0
    %v1087 = vmax.f32 %v783, 0.0
    %v1088 = vmax.f32 %v788, 0.0
    %v1089 = vmax.f32 %v791, 0.0
    %v1090 = vmax.f32 %v796, 0.0
    %v1091 = vmax.f32 %v799, 0.0
    %v1092 = vmax.f32 %v804, 0.0
    %v1093 = vmax.f32 %v807, 0.0
    %v1094 = vmax.f32 %v812, 0.0
    %v1095 = vmax.f32 %v815, 0.0
    %v1096 = vmax.f32 %v820, 0.0
    %v1097 = vmax.f32 %v823, 0.0
    %v1098 = vmax.f32 %v828, 0.0
    %v1099 = vmax.f32 %v831, 0.0
    %v1100 = vmax.f32 %v836, 0.0
    %v1101 = vmax.f32 %v839, 0.0
    %v1102 = vmax.f32 %v844, 0.0
    %v1103 = vmax.f32 %v847, 0.0
    %v1104 = vmax.f32 %v852, 0.0
    %v1105 = vmax.f32 %v855, 0.0
    %v1106 = vmax.f32 %v860, 0.0
    %v1107 = vmax.f32 %v863, 0.0
    %v1108 = vmax.f32 %v868, 0.0
    %v1109 = vmax.f32 %v871, 0.0
    %v1110 = vmax.f32 %v876, 0.0
    %v1111 = vmax.f32 %v879, 0.0
    %v1112 = vmax.f32 %v884, 0.0
    %v1113 = vmax.f32 %v887, 0.0
    %v1114 = vmax.f32 %v892, 0.0
    %v1115 = vmax.f32 %v895, 0.0
    %v1116 = vmax.f32 %v900, 0.0
    %v1117 = vmax.f32 %v903, 0.0
    %v1118 = vmax.f32 %v908, 0.0
    %v1119 = vmax.f32 %v911, 0.0
    %v1120 = vmax.f32 %v916, 0.0
    %v1121 = vmax.f32 %v919, 0.0
    %v1122 = vmax.f32 %v924, 0.0
    %v1123 = vmax.f32 %v927, 0.0
    %v1124 = vmax.f32 %v932, 0.0
    %v1125 = vmax.f32 %v935, 0.0
    %v1126 = vmax.f32 %v940, 0.0
    %v1127 = vmax.f32 %v943, 0.0
    %v1128 = vmax.f32 %v948, 0.0
    %v1129 = vmax.f32 %v951, 0.0
    %v1130 = vmax.f32 %v956, 0.0
    %v1131 = vmax.f32 %v959, 0.0
    %v1132 = vmax.f32 %v964, 0.0
    %v1133 = vmax.f32 %v967, 0.0
    %v1134 = vmax.f32 %v972, 0.0
    %v1135 = vmax.f32 %v975, 0.0
    %v1136 = vmax.f32 %v980, 0.0
    %v1137 = vmax.f32 %v983, 0.0
    %v1138 = vmax.f32 %v988, 0.0
    %v1139 = vmax.f32 %v991, 0.0
    %v1140 = vmax.f32 %v996, 0.0
    %v1141 = vmax.f32 %v999, 0.0
    %v1142 = vmax.f32 %v1004, 0.0
    %v1143 = vmax.f32 %v1007, 0.0
    %v1144 = vmax.f32 %v1012, 0.0
    %v1145 = vmax.f32 %v1015, 0.0
    %v1146 = vpack.c.bf16 %v1019, %v1018
    %v1147 = vpack.c.bf16 %v1021, %v1020
    %v1148 = vpack.c.bf16 %v1023, %v1022
    %v1149 = vpack.c.bf16 %v1025, %v1024
    %v1150 = vpack.c.bf16 %v1027, %v1026
    %v1151 = vpack.c.bf16 %v1029, %v1028
    %v1152 = vpack.c.bf16 %v1031, %v1030
    %v1153 = vpack.c.bf16 %v1033, %v1032
    %v1154 = vpack.c.bf16 %v1035, %v1034
    %v1155 = vpack.c.bf16 %v1037, %v1036
    %v1156 = vpack.c.bf16 %v1039, %v1038
    %v1157 = vpack.c.bf16 %v1041, %v1040
    %v1158 = vpack.c.bf16 %v1043, %v1042
    %v1159 = vpack.c.bf16 %v1045, %v1044
    %v1160 = vpack.c.bf16 %v1047, %v1046
    %v1161 = vpack.c.bf16 %v1049, %v1048
    %v1162 = vpack.c.bf16 %v1051, %v1050
    %v1163 = vpack.c.bf16 %v1053, %v1052
    %v1164 = vpack.c.bf16 %v1055, %v1054
    %v1165 = vpack.c.bf16 %v1057, %v1056
    %v1166 = vpack.c.bf16 %v1059, %v1058
    %v1167 = vpack.c.bf16 %v1061, %v1060
    %v1168 = vpack.c.bf16 %v1063, %v1062
    %v1169 = vpack.c.bf16 %v1065, %v1064
    %v1170 = vpack.c.bf16 %v1067, %v1066
    %v1171 = vpack.c.bf16 %v1069, %v1068
    %v1172 = vpack.c.bf16 %v1071, %v1070
    %v1173 = vpack.c.bf16 %v1073, %v1072
    %v1174 = vpack.c.bf16 %v1075, %v1074
    %v1175 = vpack.c.bf16 %v1077, %v1076
    %v1176 = vpack.c.bf16 %v1079, %v1078
    %v1177 = vpack.c.bf16 %v1081, %v1080
    %v1178 = vpack.c.bf16 %v1083, %v1082
    %v1179 = vpack.c.bf16 %v1085, %v1084
    %v1180 = vpack.c.bf16 %v1087, %v1086
    %v1181 = vpack.c.bf16 %v1089, %v1088
    %v1182 = vpack.c.bf16 %v1091, %v1090
    %v1183 = vpack.c.bf16 %v1093, %v1092
    %v1184 = vpack.c.bf16 %v1095, %v1094
    %v1185 = vpack.c.bf16 %v1097, %v1096
    %v1186 = vpack.c.bf16 %v1099, %v1098
    %v1187 = vpack.c.bf16 %v1101, %v1100
    %v1188 = vpack.c.bf16 %v1103, %v1102
    %v1189 = vpack.c.bf16 %v1105, %v1104
    %v1190 = vpack.c.bf16 %v1107, %v1106
    %v1191 = vpack.c.bf16 %v1109, %v1108
    %v1192 = vpack.c.bf16 %v1111, %v1110
    %v1193 = vpack.c.bf16 %v1113, %v1112
    %v1194 = vpack.c.bf16 %v1115, %v1114
    %v1195 = vpack.c.bf16 %v1117, %v1116
    %v1196 = vpack.c.bf16 %v1119, %v1118
    %v1197 = vpack.c.bf16 %v1121, %v1120
    %v1198 = vpack.c.bf16 %v1123, %v1122
    %v1199 = vpack.c.bf16 %v1125, %v1124
    %v1200 = vpack.c.bf16 %v1127, %v1126
    %v1201 = vpack.c.bf16 %v1129, %v1128
    %v1202 = vpack.c.bf16 %v1131, %v1130
    %v1203 = vpack.c.bf16 %v1133, %v1132
    %v1204 = vpack.c.bf16 %v1135, %v1134
    %v1205 = vpack.c.bf16 %v1137, %v1136
    %v1206 = vpack.c.bf16 %v1139, %v1138
    %v1207 = vpack.c.bf16 %v1141, %v1140
    %v1208 = vpack.c.bf16 %v1143, %v1142
    %v1209 = vpack.c.bf16 %v1145, %v1144
    %v1210 = vld [vmem:[#allocation8] sm:$0xf]
    %v1211 = vld [vmem:[#allocation8 + $0x4] sm:$0xf]
    %v1212 = vld [vmem:[#allocation8 + $0x8] sm:$0xf]
    %v1213 = vld [vmem:[#allocation8 + $0xc] sm:$0xf]
    %v1214 = vld [vmem:[#allocation8 + $0x10] sm:$0xf]
    %v1215 = vld [vmem:[#allocation8 + $0x14] sm:$0xf]
    %v1216 = vld [vmem:[#allocation8 + $0x18] sm:$0xf]
    %v1217 = vld [vmem:[#allocation8 + $0x1c] sm:$0xf]
    %v1218 = vld [vmem:[#allocation8 + $0x20] sm:$0xf]
    %v1219 = vld [vmem:[#allocation8 + $0x24] sm:$0xf]
    %v1220 = vld [vmem:[#allocation8 + $0x28] sm:$0xf]
    %v1221 = vld [vmem:[#allocation8 + $0x2c] sm:$0xf]
    %v1222 = vld [vmem:[#allocation8 + $0x30] sm:$0xf]
    %v1223 = vld [vmem:[#allocation8 + $0x34] sm:$0xf]
    %v1224 = vld [vmem:[#allocation8 + $0x38] sm:$0xf]
    %v1225 = vld [vmem:[#allocation8 + $0x3c] sm:$0xf]
    %v1226 = vld [vmem:[%s4 + $0x1] sm:$0x1]
    %v1227 = vlaneseq
    %v1228 = vshrl.u32 %v1227, 7
    %v1229 = vsub.s32 0, %v1228
    %v1230 = vrot.slane %v1226, %v1229
    %v1247 = vunpack.c.l.b16 %v1210
    %v1248 = vunpack.c.l.b16 %v1211
    %v1249 = vunpack.c.l.b16 %v1212
    %v1250 = vunpack.c.l.b16 %v1213
    %v1251 = vunpack.c.l.b16 %v1214
    %v1252 = vunpack.c.l.b16 %v1215
    %v1253 = vunpack.c.l.b16 %v1216
    %v1254 = vunpack.c.l.b16 %v1217
    %v1255 = vunpack.c.l.b16 %v1218
    %v1256 = vunpack.c.l.b16 %v1219
    %v1257 = vunpack.c.l.b16 %v1220
    %v1258 = vunpack.c.l.b16 %v1221
    %v1259 = vunpack.c.l.b16 %v1222
    %v1260 = vunpack.c.l.b16 %v1223
    %v1261 = vunpack.c.l.b16 %v1224
    %v1262 = vunpack.c.l.b16 %v1225
    %v1263 = vpack.c.b16 %v1248, %v1247
    %v1264 = vpack.c.b16 %v1250, %v1249
    %v1265 = vpack.c.b16 %v1252, %v1251
    %v1266 = vpack.c.b16 %v1254, %v1253
    %v1267 = vpack.c.b16 %v1256, %v1255
    %v1268 = vpack.c.b16 %v1258, %v1257
    %v1269 = vpack.c.b16 %v1260, %v1259
    %v1270 = vpack.c.b16 %v1262, %v1261
    %1279 = vmatprep.subr.bf16.mxu0 0
    %1280 = vmatpush1.bf16.msra.mxu0 %v1263
    %1281 = vmatprep.subr.bf16.mxu0 0
    %1282 = vmatpush1.bf16.msra.mxu0 %v1264
    %1283 = vmatprep.subr.bf16.mxu0 0
    %1284 = vmatpush1.bf16.msra.mxu0 %v1265
    %1285 = vmatprep.subr.bf16.mxu0 0
    %1286 = vmatpush1.bf16.msra.mxu0 %v1266
    %1287 = vmatprep.subr.bf16.mxu0 0
    %1288 = vmatpush1.bf16.msra.mxu0 %v1267
    %1289 = vmatprep.subr.bf16.mxu0 0
    %1290 = vmatpush1.bf16.msra.mxu0 %v1268
    %1291 = vmatprep.subr.bf16.mxu0 0
    %1292 = vmatpush1.bf16.msra.mxu0 %v1269
    %1293 = vmatprep.subr.bf16.mxu0 0
    %1294 = vmatpush1.bf16.msra.mxu0 %v1270
    %1295 = vmatprep.subr.bf16.mxu0 0
    %1296 = vmatpush1.bf16.msra.mxu0 0
    %1297 = vmatprep.subr.bf16.mxu0 0
    %1298 = vmatpush1.bf16.msra.mxu0 0
    %1299 = vmatprep.subr.bf16.mxu0 0
    %1300 = vmatpush1.bf16.msra.mxu0 0
    %1301 = vmatprep.subr.bf16.mxu0 0
    %1302 = vmatpush1.bf16.msra.mxu0 0
    %1303 = vmatprep.subr.bf16.mxu0 0
    %1304 = vmatpush1.bf16.msra.mxu0 0
    %1305 = vmatprep.subr.bf16.mxu0 0
    %1306 = vmatpush1.bf16.msra.mxu0 0
    %1307 = vmatprep.subr.bf16.mxu0 0
    %1308 = vmatpush1.bf16.msra.mxu0 0
    %1309 = vmatprep.subr.bf16.mxu0 0
    %1310 = vmatpush1.bf16.msra.mxu0 0
    %1311 = vmatprep.mubr.bf16.mxu0 0
    %1312 = vmatmul.mubr.bf16.gmra.mrb[0].mxu0 %v1146
    %v1313 = vpop.f32.mrb[0].mxu0
    %v1314 = vadd.f32 %v1230, %v1313
    %v1315 = vpop.f32.mrb[0].mxu0
    %v1316 = vpop.f32.mrb[0].mxu0
    %v1317 = vadd.f32 %v1230, %v1316
    %v1318 = vpop.f32.mrb[0].mxu0
    %1319 = vmatprep.mubr.bf16.mxu0 0
    %1320 = vmatmul.mubr.bf16.gmra.mrb[0].mxu0 %v1147
    %v1321 = vpop.f32.mrb[0].mxu0
    %v1322 = vadd.f32 %v1230, %v1321
    %v1323 = vpop.f32.mrb[0].mxu0
    %v1324 = vpop.f32.mrb[0].mxu0
    %v1325 = vadd.f32 %v1230, %v1324
    %v1326 = vpop.f32.mrb[0].mxu0
    %1327 = vmatprep.mubr.bf16.mxu0 0
    %1328 = vmatmul.mubr.bf16.gmra.mrb[0].mxu0 %v1148
    %v1329 = vpop.f32.mrb[0].mxu0
    %v1330 = vadd.f32 %v1230, %v1329
    %v1331 = vpop.f32.mrb[0].mxu0
    %v1332 = vpop.f32.mrb[0].mxu0
    %v1333 = vadd.f32 %v1230, %v1332
    %v1334 = vpop.f32.mrb[0].mxu0
    %1335 = vmatprep.mubr.bf16.mxu0 0
    %1336 = vmatmul.mubr.bf16.gmra.mrb[0].mxu0 %v1149
    %v1337 = vpop.f32.mrb[0].mxu0
    %v1338 = vadd.f32 %v1230, %v1337
    %v1339 = vpop.f32.mrb[0].mxu0
    %v1340 = vpop.f32.mrb[0].mxu0
    %v1341 = vadd.f32 %v1230, %v1340
    %v1342 = vpop.f32.mrb[0].mxu0
    %1343 = vmatprep.mubr.bf16.mxu0 0
    %1344 = vmatmul.mubr.bf16.gmra.mrb[0].mxu0 %v1150
    %v1345 = vpop.f32.mrb[0].mxu0
    %v1346 = vadd.f32 %v1230, %v1345
    %v1347 = vpop.f32.mrb[0].mxu0
    %v1348 = vpop.f32.mrb[0].mxu0
    %v1349 = vadd.f32 %v1230, %v1348
    %v1350 = vpop.f32.mrb[0].mxu0
    %1351 = vmatprep.mubr.bf16.mxu0 0
    %1352 = vmatmul.mubr.bf16.gmra.mrb[0].mxu0 %v1151
    %v1353 = vpop.f32.mrb[0].mxu0
    %v1354 = vadd.f32 %v1230, %v1353
    %v1355 = vpop.f32.mrb[0].mxu0
    %v1356 = vpop.f32.mrb[0].mxu0
    %v1357 = vadd.f32 %v1230, %v1356
    %v1358 = vpop.f32.mrb[0].mxu0
    %1359 = vmatprep.mubr.bf16.mxu0 0
    %1360 = vmatmul.mubr.bf16.gmra.mrb[0].mxu0 %v1152
    %v1361 = vpop.f32.mrb[0].mxu0
    %v1362 = vadd.f32 %v1230, %v1361
    %v1363 = vpop.f32.mrb[0].mxu0
    %v1364 = vpop.f32.mrb[0].mxu0
    %v1365 = vadd.f32 %v1230, %v1364
    %v1366 = vpop.f32.mrb[0].mxu0
    %1367 = vmatprep.mubr.bf16.mxu0 0
    %1368 = vmatmul.mubr.bf16.gmra.mrb[0].mxu0 %v1153
    %v1369 = vpop.f32.mrb[0].mxu0
    %v1370 = vadd.f32 %v1230, %v1369
    %v1371 = vpop.f32.mrb[0].mxu0
    %v1372 = vpop.f32.mrb[0].mxu0
    %v1373 = vadd.f32 %v1230, %v1372
    %v1374 = vpop.f32.mrb[0].mxu0
    %1375 = vmatprep.mubr.bf16.mxu0 0
    %1376 = vmatmul.mubr.bf16.gmra.mrb[0].mxu0 %v1154
    %v1377 = vpop.f32.mrb[0].mxu0
    %v1378 = vadd.f32 %v1230, %v1377
    %v1379 = vpop.f32.mrb[0].mxu0
    %v1380 = vpop.f32.mrb[0].mxu0
    %v1381 = vadd.f32 %v1230, %v1380
    %v1382 = vpop.f32.mrb[0].mxu0
    %1383 = vmatprep.mubr.bf16.mxu0 0
    %1384 = vmatmul.mubr.bf16.gmra.mrb[0].mxu0 %v1155
    %v1385 = vpop.f32.mrb[0].mxu0
    %v1386 = vadd.f32 %v1230, %v1385
    %v1387 = vpop.f32.mrb[0].mxu0
    %v1388 = vpop.f32.mrb[0].mxu0
    %v1389 = vadd.f32 %v1230, %v1388
    %v1390 = vpop.f32.mrb[0].mxu0
    %1391 = vmatprep.mubr.bf16.mxu0 0
    %1392 = vmatmul.mubr.bf16.gmra.mrb[0].mxu0 %v1156
    %v1393 = vpop.f32.mrb[0].mxu0
    %v1394 = vadd.f32 %v1230, %v1393
    %v1395 = vpop.f32.mrb[0].mxu0
    %v1396 = vpop.f32.mrb[0].mxu0
    %v1397 = vadd.f32 %v1230, %v1396
    %v1398 = vpop.f32.mrb[0].mxu0
    %1399 = vmatprep.mubr.bf16.mxu0 0
    %1400 = vmatmul.mubr.bf16.gmra.mrb[0].mxu0 %v1157
    %v1401 = vpop.f32.mrb[0].mxu0
    %v1402 = vadd.f32 %v1230, %v1401
    %v1403 = vpop.f32.mrb[0].mxu0
    %v1404 = vpop.f32.mrb[0].mxu0
    %v1405 = vadd.f32 %v1230, %v1404
    %v1406 = vpop.f32.mrb[0].mxu0
    %1407 = vmatprep.mubr.bf16.mxu0 0
    %1408 = vmatmul.mubr.bf16.gmra.mrb[0].mxu0 %v1158
    %v1409 = vpop.f32.mrb[0].mxu0
    %v1410 = vadd.f32 %v1230, %v1409
    %v1411 = vpop.f32.mrb[0].mxu0
    %v1412 = vpop.f32.mrb[0].mxu0
    %v1413 = vadd.f32 %v1230, %v1412
    %v1414 = vpop.f32.mrb[0].mxu0
    %1415 = vmatprep.mubr.bf16.mxu0 0
    %1416 = vmatmul.mubr.bf16.gmra.mrb[0].mxu0 %v1159
    %v1417 = vpop.f32.mrb[0].mxu0
    %v1418 = vadd.f32 %v1230, %v1417
    %v1419 = vpop.f32.mrb[0].mxu0
    %v1420 = vpop.f32.mrb[0].mxu0
    %v1421 = vadd.f32 %v1230, %v1420
    %v1422 = vpop.f32.mrb[0].mxu0
    %1423 = vmatprep.mubr.bf16.mxu0 0
    %1424 = vmatmul.mubr.bf16.gmra.mrb[0].mxu0 %v1160
    %v1425 = vpop.f32.mrb[0].mxu0
    %v1426 = vadd.f32 %v1230, %v1425
    %v1427 = vpop.f32.mrb[0].mxu0
    %v1428 = vpop.f32.mrb[0].mxu0
    %v1429 = vadd.f32 %v1230, %v1428
    %v1430 = vpop.f32.mrb[0].mxu0
    %1431 = vmatprep.mubr.bf16.mxu0 0
    %1432 = vmatmul.mubr.bf16.gmra.mrb[0].mxu0 %v1161
    %v1433 = vpop.f32.mrb[0].mxu0
    %v1434 = vadd.f32 %v1230, %v1433
    %v1435 = vpop.f32.mrb[0].mxu0
    %v1436 = vpop.f32.mrb[0].mxu0
    %v1437 = vadd.f32 %v1230, %v1436
    %v1438 = vpop.f32.mrb[0].mxu0
    %1439 = vmatprep.mubr.bf16.mxu0 0
    %1440 = vmatmul.mubr.bf16.gmra.mrb[0].mxu0 %v1162
    %v1441 = vpop.f32.mrb[0].mxu0
    %v1442 = vadd.f32 %v1230, %v1441
    %v1443 = vpop.f32.mrb[0].mxu0
    %v1444 = vpop.f32.mrb[0].mxu0
    %v1445 = vadd.f32 %v1230, %v1444
    %v1446 = vpop.f32.mrb[0].mxu0
    %1447 = vmatprep.mubr.bf16.mxu0 0
    %1448 = vmatmul.mubr.bf16.gmra.mrb[0].mxu0 %v1163
    %v1449 = vpop.f32.mrb[0].mxu0
    %v1450 = vadd.f32 %v1230, %v1449
    %v1451 = vpop.f32.mrb[0].mxu0
    %v1452 = vpop.f32.mrb[0].mxu0
    %v1453 = vadd.f32 %v1230, %v1452
    %v1454 = vpop.f32.mrb[0].mxu0
    %1455 = vmatprep.mubr.bf16.mxu0 0
    %1456 = vmatmul.mubr.bf16.gmra.mrb[0].mxu0 %v1164
    %v1457 = vpop.f32.mrb[0].mxu0
    %v1458 = vadd.f32 %v1230, %v1457
    %v1459 = vpop.f32.mrb[0].mxu0
    %v1460 = vpop.f32.mrb[0].mxu0
    %v1461 = vadd.f32 %v1230, %v1460
    %v1462 = vpop.f32.mrb[0].mxu0
    %1463 = vmatprep.mubr.bf16.mxu0 0
    %1464 = vmatmul.mubr.bf16.gmra.mrb[0].mxu0 %v1165
    %v1465 = vpop.f32.mrb[0].mxu0
    %v1466 = vadd.f32 %v1230, %v1465
    %v1467 = vpop.f32.mrb[0].mxu0
    %v1468 = vpop.f32.mrb[0].mxu0
    %v1469 = vadd.f32 %v1230, %v1468
    %v1470 = vpop.f32.mrb[0].mxu0
    %1471 = vmatprep.mubr.bf16.mxu0 0
    %1472 = vmatmul.mubr.bf16.gmra.mrb[0].mxu0 %v1166
    %v1473 = vpop.f32.mrb[0].mxu0
    %v1474 = vadd.f32 %v1230, %v1473
    %v1475 = vpop.f32.mrb[0].mxu0
    %v1476 = vpop.f32.mrb[0].mxu0
    %v1477 = vadd.f32 %v1230, %v1476
    %v1478 = vpop.f32.mrb[0].mxu0
    %1479 = vmatprep.mubr.bf16.mxu0 0
    %1480 = vmatmul.mubr.bf16.gmra.mrb[0].mxu0 %v1167
    %v1481 = vpop.f32.mrb[0].mxu0
    %v1482 = vadd.f32 %v1230, %v1481
    %v1483 = vpop.f32.mrb[0].mxu0
    %v1484 = vpop.f32.mrb[0].mxu0
    %v1485 = vadd.f32 %v1230, %v1484
    %v1486 = vpop.f32.mrb[0].mxu0
    %1487 = vmatprep.mubr.bf16.mxu0 0
    %1488 = vmatmul.mubr.bf16.gmra.mrb[0].mxu0 %v1168
    %v1489 = vpop.f32.mrb[0].mxu0
    %v1490 = vadd.f32 %v1230, %v1489
    %v1491 = vpop.f32.mrb[0].mxu0
    %v1492 = vpop.f32.mrb[0].mxu0
    %v1493 = vadd.f32 %v1230, %v1492
    %v1494 = vpop.f32.mrb[0].mxu0
    %1495 = vmatprep.mubr.bf16.mxu0 0
    %1496 = vmatmul.mubr.bf16.gmra.mrb[0].mxu0 %v1169
    %v1497 = vpop.f32.mrb[0].mxu0
    %v1498 = vadd.f32 %v1230, %v1497
    %v1499 = vpop.f32.mrb[0].mxu0
    %v1500 = vpop.f32.mrb[0].mxu0
    %v1501 = vadd.f32 %v1230, %v1500
    %v1502 = vpop.f32.mrb[0].mxu0
    %1503 = vmatprep.mubr.bf16.mxu0 0
    %1504 = vmatmul.mubr.bf16.gmra.mrb[0].mxu0 %v1170
    %v1505 = vpop.f32.mrb[0].mxu0
    %v1506 = vadd.f32 %v1230, %v1505
    %v1507 = vpop.f32.mrb[0].mxu0
    %v1508 = vpop.f32.mrb[0].mxu0
    %v1509 = vadd.f32 %v1230, %v1508
    %v1510 = vpop.f32.mrb[0].mxu0
    %1511 = vmatprep.mubr.bf16.mxu0 0
    %1512 = vmatmul.mubr.bf16.gmra.mrb[0].mxu0 %v1171
    %v1513 = vpop.f32.mrb[0].mxu0
    %v1514 = vadd.f32 %v1230, %v1513
    %v1515 = vpop.f32.mrb[0].mxu0
    %v1516 = vpop.f32.mrb[0].mxu0
    %v1517 = vadd.f32 %v1230, %v1516
    %v1518 = vpop.f32.mrb[0].mxu0
    %1519 = vmatprep.mubr.bf16.mxu0 0
    %1520 = vmatmul.mubr.bf16.gmra.mrb[0].mxu0 %v1172
    %v1521 = vpop.f32.mrb[0].mxu0
    %v1522 = vadd.f32 %v1230, %v1521
    %v1523 = vpop.f32.mrb[0].mxu0
    %v1524 = vpop.f32.mrb[0].mxu0
    %v1525 = vadd.f32 %v1230, %v1524
    %v1526 = vpop.f32.mrb[0].mxu0
    %1527 = vmatprep.mubr.bf16.mxu0 0
    %1528 = vmatmul.mubr.bf16.gmra.mrb[0].mxu0 %v1173
    %v1529 = vpop.f32.mrb[0].mxu0
    %v1530 = vadd.f32 %v1230, %v1529
    %v1531 = vpop.f32.mrb[0].mxu0
    %v1532 = vpop.f32.mrb[0].mxu0
    %v1533 = vadd.f32 %v1230, %v1532
    %v1534 = vpop.f32.mrb[0].mxu0
    %1535 = vmatprep.mubr.bf16.mxu0 0
    %1536 = vmatmul.mubr.bf16.gmra.mrb[0].mxu0 %v1174
    %v1537 = vpop.f32.mrb[0].mxu0
    %v1538 = vadd.f32 %v1230, %v1537
    %v1539 = vpop.f32.mrb[0].mxu0
    %v1540 = vpop.f32.mrb[0].mxu0
    %v1541 = vadd.f32 %v1230, %v1540
    %v1542 = vpop.f32.mrb[0].mxu0
    %1543 = vmatprep.mubr.bf16.mxu0 0
    %1544 = vmatmul.mubr.bf16.gmra.mrb[0].mxu0 %v1175
    %v1545 = vpop.f32.mrb[0].mxu0
    %v1546 = vadd.f32 %v1230, %v1545
    %v1547 = vpop.f32.mrb[0].mxu0
    %v1548 = vpop.f32.mrb[0].mxu0
    %v1549 = vadd.f32 %v1230, %v1548
    %v1550 = vpop.f32.mrb[0].mxu0
    %1551 = vmatprep.mubr.bf16.mxu0 0
    %1552 = vmatmul.mubr.bf16.gmra.mrb[0].mxu0 %v1176
    %v1553 = vpop.f32.mrb[0].mxu0
    %v1554 = vadd.f32 %v1230, %v1553
    %v1555 = vpop.f32.mrb[0].mxu0
    %v1556 = vpop.f32.mrb[0].mxu0
    %v1557 = vadd.f32 %v1230, %v1556
    %v1558 = vpop.f32.mrb[0].mxu0
    %1559 = vmatprep.mubr.bf16.mxu0 0
    %1560 = vmatmul.mubr.bf16.gmra.mrb[0].mxu0 %v1177
    %v1561 = vpop.f32.mrb[0].mxu0
    %v1562 = vadd.f32 %v1230, %v1561
    %v1563 = vpop.f32.mrb[0].mxu0
    %v1564 = vpop.f32.mrb[0].mxu0
    %v1565 = vadd.f32 %v1230, %v1564
    %v1566 = vpop.f32.mrb[0].mxu0
    %1567 = vmatprep.mubr.bf16.mxu0 0
    %1568 = vmatmul.mubr.bf16.gmra.mrb[0].mxu0 %v1178
    %v1569 = vpop.f32.mrb[0].mxu0
    %v1570 = vadd.f32 %v1230, %v1569
    %v1571 = vpop.f32.mrb[0].mxu0
    %v1572 = vpop.f32.mrb[0].mxu0
    %v1573 = vadd.f32 %v1230, %v1572
    %v1574 = vpop.f32.mrb[0].mxu0
    %1575 = vmatprep.mubr.bf16.mxu0 0
    %1576 = vmatmul.mubr.bf16.gmra.mrb[0].mxu0 %v1179
    %v1577 = vpop.f32.mrb[0].mxu0
    %v1578 = vadd.f32 %v1230, %v1577
    %v1579 = vpop.f32.mrb[0].mxu0
    %v1580 = vpop.f32.mrb[0].mxu0
    %v1581 = vadd.f32 %v1230, %v1580
    %v1582 = vpop.f32.mrb[0].mxu0
    %1583 = vmatprep.mubr.bf16.mxu0 0
    %1584 = vmatmul.mubr.bf16.gmra.mrb[0].mxu0 %v1180
    %v1585 = vpop.f32.mrb[0].mxu0
    %v1586 = vadd.f32 %v1230, %v1585
    %v1587 = vpop.f32.mrb[0].mxu0
    %v1588 = vpop.f32.mrb[0].mxu0
    %v1589 = vadd.f32 %v1230, %v1588
    %v1590 = vpop.f32.mrb[0].mxu0
    %1591 = vmatprep.mubr.bf16.mxu0 0
    %1592 = vmatmul.mubr.bf16.gmra.mrb[0].mxu0 %v1181
    %v1593 = vpop.f32.mrb[0].mxu0
    %v1594 = vadd.f32 %v1230, %v1593
    %v1595 = vpop.f32.mrb[0].mxu0
    %v1596 = vpop.f32.mrb[0].mxu0
    %v1597 = vadd.f32 %v1230, %v1596
    %v1598 = vpop.f32.mrb[0].mxu0
    %1599 = vmatprep.mubr.bf16.mxu0 0
    %1600 = vmatmul.mubr.bf16.gmra.mrb[0].mxu0 %v1182
    %v1601 = vpop.f32.mrb[0].mxu0
    %v1602 = vadd.f32 %v1230, %v1601
    %v1603 = vpop.f32.mrb[0].mxu0
    %v1604 = vpop.f32.mrb[0].mxu0
    %v1605 = vadd.f32 %v1230, %v1604
    %v1606 = vpop.f32.mrb[0].mxu0
    %1607 = vmatprep.mubr.bf16.mxu0 0
    %1608 = vmatmul.mubr.bf16.gmra.mrb[0].mxu0 %v1183
    %v1609 = vpop.f32.mrb[0].mxu0
    %v1610 = vadd.f32 %v1230, %v1609
    %v1611 = vpop.f32.mrb[0].mxu0
    %v1612 = vpop.f32.mrb[0].mxu0
    %v1613 = vadd.f32 %v1230, %v1612
    %v1614 = vpop.f32.mrb[0].mxu0
    %1615 = vmatprep.mubr.bf16.mxu0 0
    %1616 = vmatmul.mubr.bf16.gmra.mrb[0].mxu0 %v1184
    %v1617 = vpop.f32.mrb[0].mxu0
    %v1618 = vadd.f32 %v1230, %v1617
    %v1619 = vpop.f32.mrb[0].mxu0
    %v1620 = vpop.f32.mrb[0].mxu0
    %v1621 = vadd.f32 %v1230, %v1620
    %v1622 = vpop.f32.mrb[0].mxu0
    %1623 = vmatprep.mubr.bf16.mxu0 0
    %1624 = vmatmul.mubr.bf16.gmra.mrb[0].mxu0 %v1185
    %v1625 = vpop.f32.mrb[0].mxu0
    %v1626 = vadd.f32 %v1230, %v1625
    %v1627 = vpop.f32.mrb[0].mxu0
    %v1628 = vpop.f32.mrb[0].mxu0
    %v1629 = vadd.f32 %v1230, %v1628
    %v1630 = vpop.f32.mrb[0].mxu0
    %1631 = vmatprep.mubr.bf16.mxu0 0
    %1632 = vmatmul.mubr.bf16.gmra.mrb[0].mxu0 %v1186
    %v1633 = vpop.f32.mrb[0].mxu0
    %v1634 = vadd.f32 %v1230, %v1633
    %v1635 = vpop.f32.mrb[0].mxu0
    %v1636 = vpop.f32.mrb[0].mxu0
    %v1637 = vadd.f32 %v1230, %v1636
    %v1638 = vpop.f32.mrb[0].mxu0
    %1639 = vmatprep.mubr.bf16.mxu0 0
    %1640 = vmatmul.mubr.bf16.gmra.mrb[0].mxu0 %v1187
    %v1641 = vpop.f32.mrb[0].mxu0
    %v1642 = vadd.f32 %v1230, %v1641
    %v1643 = vpop.f32.mrb[0].mxu0
    %v1644 = vpop.f32.mrb[0].mxu0
    %v1645 = vadd.f32 %v1230, %v1644
    %v1646 = vpop.f32.mrb[0].mxu0
    %1647 = vmatprep.mubr.bf16.mxu0 0
    %1648 = vmatmul.mubr.bf16.gmra.mrb[0].mxu0 %v1188
    %v1649 = vpop.f32.mrb[0].mxu0
    %v1650 = vadd.f32 %v1230, %v1649
    %v1651 = vpop.f32.mrb[0].mxu0
    %v1652 = vpop.f32.mrb[0].mxu0
    %v1653 = vadd.f32 %v1230, %v1652
    %v1654 = vpop.f32.mrb[0].mxu0
    %1655 = vmatprep.mubr.bf16.mxu0 0
    %1656 = vmatmul.mubr.bf16.gmra.mrb[0].mxu0 %v1189
    %v1657 = vpop.f32.mrb[0].mxu0
    %v1658 = vadd.f32 %v1230, %v1657
    %v1659 = vpop.f32.mrb[0].mxu0
    %v1660 = vpop.f32.mrb[0].mxu0
    %v1661 = vadd.f32 %v1230, %v1660
    %v1662 = vpop.f32.mrb[0].mxu0
    %1663 = vmatprep.mubr.bf16.mxu0 0
    %1664 = vmatmul.mubr.bf16.gmra.mrb[0].mxu0 %v1190
    %v1665 = vpop.f32.mrb[0].mxu0
    %v1666 = vadd.f32 %v1230, %v1665
    %v1667 = vpop.f32.mrb[0].mxu0
    %v1668 = vpop.f32.mrb[0].mxu0
    %v1669 = vadd.f32 %v1230, %v1668
    %v1670 = vpop.f32.mrb[0].mxu0
    %1671 = vmatprep.mubr.bf16.mxu0 0
    %1672 = vmatmul.mubr.bf16.gmra.mrb[0].mxu0 %v1191
    %v1673 = vpop.f32.mrb[0].mxu0
    %v1674 = vadd.f32 %v1230, %v1673
    %v1675 = vpop.f32.mrb[0].mxu0
    %v1676 = vpop.f32.mrb[0].mxu0
    %v1677 = vadd.f32 %v1230, %v1676
    %v1678 = vpop.f32.mrb[0].mxu0
    %1679 = vmatprep.mubr.bf16.mxu0 0
    %1680 = vmatmul.mubr.bf16.gmra.mrb[0].mxu0 %v1192
    %v1681 = vpop.f32.mrb[0].mxu0
    %v1682 = vadd.f32 %v1230, %v1681
    %v1683 = vpop.f32.mrb[0].mxu0
    %v1684 = vpop.f32.mrb[0].mxu0
    %v1685 = vadd.f32 %v1230, %v1684
    %v1686 = vpop.f32.mrb[0].mxu0
    %1687 = vmatprep.mubr.bf16.mxu0 0
    %1688 = vmatmul.mubr.bf16.gmra.mrb[0].mxu0 %v1193
    %v1689 = vpop.f32.mrb[0].mxu0
    %v1690 = vadd.f32 %v1230, %v1689
    %v1691 = vpop.f32.mrb[0].mxu0
    %v1692 = vpop.f32.mrb[0].mxu0
    %v1693 = vadd.f32 %v1230, %v1692
    %v1694 = vpop.f32.mrb[0].mxu0
    %1695 = vmatprep.mubr.bf16.mxu0 0
    %1696 = vmatmul.mubr.bf16.gmra.mrb[0].mxu0 %v1194
    %v1697 = vpop.f32.mrb[0].mxu0
    %v1698 = vadd.f32 %v1230, %v1697
    %v1699 = vpop.f32.mrb[0].mxu0
    %v1700 = vpop.f32.mrb[0].mxu0
    %v1701 = vadd.f32 %v1230, %v1700
    %v1702 = vpop.f32.mrb[0].mxu0
    %1703 = vmatprep.mubr.bf16.mxu0 0
    %1704 = vmatmul.mubr.bf16.gmra.mrb[0].mxu0 %v1195
    %v1705 = vpop.f32.mrb[0].mxu0
    %v1706 = vadd.f32 %v1230, %v1705
    %v1707 = vpop.f32.mrb[0].mxu0
    %v1708 = vpop.f32.mrb[0].mxu0
    %v1709 = vadd.f32 %v1230, %v1708
    %v1710 = vpop.f32.mrb[0].mxu0
    %1711 = vmatprep.mubr.bf16.mxu0 0
    %1712 = vmatmul.mubr.bf16.gmra.mrb[0].mxu0 %v1196
    %v1713 = vpop.f32.mrb[0].mxu0
    %v1714 = vadd.f32 %v1230, %v1713
    %v1715 = vpop.f32.mrb[0].mxu0
    %v1716 = vpop.f32.mrb[0].mxu0
    %v1717 = vadd.f32 %v1230, %v1716
    %v1718 = vpop.f32.mrb[0].mxu0
    %1719 = vmatprep.mubr.bf16.mxu0 0
    %1720 = vmatmul.mubr.bf16.gmra.mrb[0].mxu0 %v1197
    %v1721 = vpop.f32.mrb[0].mxu0
    %v1722 = vadd.f32 %v1230, %v1721
    %v1723 = vpop.f32.mrb[0].mxu0
    %v1724 = vpop.f32.mrb[0].mxu0
    %v1725 = vadd.f32 %v1230, %v1724
    %v1726 = vpop.f32.mrb[0].mxu0
    %1727 = vmatprep.mubr.bf16.mxu0 0
    %1728 = vmatmul.mubr.bf16.gmra.mrb[0].mxu0 %v1198
    %v1729 = vpop.f32.mrb[0].mxu0
    %v1730 = vadd.f32 %v1230, %v1729
    %v1731 = vpop.f32.mrb[0].mxu0
    %v1732 = vpop.f32.mrb[0].mxu0
    %v1733 = vadd.f32 %v1230, %v1732
    %v1734 = vpop.f32.mrb[0].mxu0
    %1735 = vmatprep.mubr.bf16.mxu0 0
    %1736 = vmatmul.mubr.bf16.gmra.mrb[0].mxu0 %v1199
    %v1737 = vpop.f32.mrb[0].mxu0
    %v1738 = vadd.f32 %v1230, %v1737
    %v1739 = vpop.f32.mrb[0].mxu0
    %v1740 = vpop.f32.mrb[0].mxu0
    %v1741 = vadd.f32 %v1230, %v1740
    %v1742 = vpop.f32.mrb[0].mxu0
    %1743 = vmatprep.mubr.bf16.mxu0 0
    %1744 = vmatmul.mubr.bf16.gmra.mrb[0].mxu0 %v1200
    %v1745 = vpop.f32.mrb[0].mxu0
    %v1746 = vadd.f32 %v1230, %v1745
    %v1747 = vpop.f32.mrb[0].mxu0
    %v1748 = vpop.f32.mrb[0].mxu0
    %v1749 = vadd.f32 %v1230, %v1748
    %v1750 = vpop.f32.mrb[0].mxu0
    %1751 = vmatprep.mubr.bf16.mxu0 0
    %1752 = vmatmul.mubr.bf16.gmra.mrb[0].mxu0 %v1201
    %v1753 = vpop.f32.mrb[0].mxu0
    %v1754 = vadd.f32 %v1230, %v1753
    %v1755 = vpop.f32.mrb[0].mxu0
    %v1756 = vpop.f32.mrb[0].mxu0
    %v1757 = vadd.f32 %v1230, %v1756
    %v1758 = vpop.f32.mrb[0].mxu0
    %1759 = vmatprep.mubr.bf16.mxu0 0
    %1760 = vmatmul.mubr.bf16.gmra.mrb[0].mxu0 %v1202
    %v1761 = vpop.f32.mrb[0].mxu0
    %v1762 = vadd.f32 %v1230, %v1761
    %v1763 = vpop.f32.mrb[0].mxu0
    %v1764 = vpop.f32.mrb[0].mxu0
    %v1765 = vadd.f32 %v1230, %v1764
    %v1766 = vpop.f32.mrb[0].mxu0
    %1767 = vmatprep.mubr.bf16.mxu0 0
    %1768 = vmatmul.mubr.bf16.gmra.mrb[0].mxu0 %v1203
    %v1769 = vpop.f32.mrb[0].mxu0
    %v1770 = vadd.f32 %v1230, %v1769
    %v1771 = vpop.f32.mrb[0].mxu0
    %v1772 = vpop.f32.mrb[0].mxu0
    %v1773 = vadd.f32 %v1230, %v1772
    %v1774 = vpop.f32.mrb[0].mxu0
    %1775 = vmatprep.mubr.bf16.mxu0 0
    %1776 = vmatmul.mubr.bf16.gmra.mrb[0].mxu0 %v1204
    %v1777 = vpop.f32.mrb[0].mxu0
    %v1778 = vadd.f32 %v1230, %v1777
    %v1779 = vpop.f32.mrb[0].mxu0
    %v1780 = vpop.f32.mrb[0].mxu0
    %v1781 = vadd.f32 %v1230, %v1780
    %v1782 = vpop.f32.mrb[0].mxu0
    %1783 = vmatprep.mubr.bf16.mxu0 0
    %1784 = vmatmul.mubr.bf16.gmra.mrb[0].mxu0 %v1205
    %v1785 = vpop.f32.mrb[0].mxu0
    %v1786 = vadd.f32 %v1230, %v1785
    %v1787 = vpop.f32.mrb[0].mxu0
    %v1788 = vpop.f32.mrb[0].mxu0
    %v1789 = vadd.f32 %v1230, %v1788
    %v1790 = vpop.f32.mrb[0].mxu0
    %1791 = vmatprep.mubr.bf16.mxu0 0
    %1792 = vmatmul.mubr.bf16.gmra.mrb[0].mxu0 %v1206
    %v1793 = vpop.f32.mrb[0].mxu0
    %v1794 = vadd.f32 %v1230, %v1793
    %v1795 = vpop.f32.mrb[0].mxu0
    %v1796 = vpop.f32.mrb[0].mxu0
    %v1797 = vadd.f32 %v1230, %v1796
    %v1798 = vpop.f32.mrb[0].mxu0
    %1799 = vmatprep.mubr.bf16.mxu0 0
    %1800 = vmatmul.mubr.bf16.gmra.mrb[0].mxu0 %v1207
    %v1801 = vpop.f32.mrb[0].mxu0
    %v1802 = vadd.f32 %v1230, %v1801
    %v1803 = vpop.f32.mrb[0].mxu0
    %v1804 = vpop.f32.mrb[0].mxu0
    %v1805 = vadd.f32 %v1230, %v1804
    %v1806 = vpop.f32.mrb[0].mxu0
    %1807 = vmatprep.mubr.bf16.mxu0 0
    %1808 = vmatmul.mubr.bf16.gmra.mrb[0].mxu0 %v1208
    %v1809 = vpop.f32.mrb[0].mxu0
    %v1810 = vadd.f32 %v1230, %v1809
    %v1811 = vpop.f32.mrb[0].mxu0
    %v1812 = vpop.f32.mrb[0].mxu0
    %v1813 = vadd.f32 %v1230, %v1812
    %v1814 = vpop.f32.mrb[0].mxu0
    %1815 = vmatprep.mubr.bf16.mxu0 0
    %1816 = vmatmul.mubr.bf16.gmra.mrb[0].mxu0 %v1209
    %v1817 = vpop.f32.mrb[0].mxu0
    %v1818 = vadd.f32 %v1230, %v1817
    %v1819 = vpop.f32.mrb[0].mxu0
    %v1820 = vpop.f32.mrb[0].mxu0
    %v1821 = vadd.f32 %v1230, %v1820
    %v1822 = vpop.f32.mrb[0].mxu0
    %1823 = vdwg.mxu0
    %v1824 = vmax.f32 %v1314, 0.0
    %v1825 = vmax.f32 %v1317, 0.0
    %v1826 = vmax.f32 %v1322, 0.0
    %v1827 = vmax.f32 %v1325, 0.0
    %v1828 = vmax.f32 %v1330, 0.0
    %v1829 = vmax.f32 %v1333, 0.0
    %v1830 = vmax.f32 %v1338, 0.0
    %v1831 = vmax.f32 %v1341, 0.0
    %v1832 = vmax.f32 %v1346, 0.0
    %v1833 = vmax.f32 %v1349, 0.0
    %v1834 = vmax.f32 %v1354, 0.0
    %v1835 = vmax.f32 %v1357, 0.0
    %v1836 = vmax.f32 %v1362, 0.0
    %v1837 = vmax.f32 %v1365, 0.0
    %v1838 = vmax.f32 %v1370, 0.0
    %v1839 = vmax.f32 %v1373, 0.0
    %v1840 = vmax.f32 %v1378, 0.0
    %v1841 = vmax.f32 %v1381, 0.0
    %v1842 = vmax.f32 %v1386, 0.0
    %v1843 = vmax.f32 %v1389, 0.0
    %v1844 = vmax.f32 %v1394, 0.0
    %v1845 = vmax.f32 %v1397, 0.0
    %v1846 = vmax.f32 %v1402, 0.0
    %v1847 = vmax.f32 %v1405, 0.0
    %v1848 = vmax.f32 %v1410, 0.0
    %v1849 = vmax.f32 %v1413, 0.0
    %v1850 = vmax.f32 %v1418, 0.0
    %v1851 = vmax.f32 %v1421, 0.0
    %v1852 = vmax.f32 %v1426, 0.0
    %v1853 = vmax.f32 %v1429, 0.0
    %v1854 = vmax.f32 %v1434, 0.0
    %v1855 = vmax.f32 %v1437, 0.0
    %v1856 = vmax.f32 %v1442, 0.0
    %v1857 = vmax.f32 %v1445, 0.0
    %v1858 = vmax.f32 %v1450, 0.0
    %v1859 = vmax.f32 %v1453, 0.0
    %v1860 = vmax.f32 %v1458, 0.0
    %v1861 = vmax.f32 %v1461, 0.0
    %v1862 = vmax.f32 %v1466, 0.0
    %v1863 = vmax.f32 %v1469, 0.0
    %v1864 = vmax.f32 %v1474, 0.0
    %v1865 = vmax.f32 %v1477, 0.0
    %v1866 = vmax.f32 %v1482, 0.0
    %v1867 = vmax.f32 %v1485, 0.0
    %v1868 = vmax.f32 %v1490, 0.0
    %v1869 = vmax.f32 %v1493, 0.0
    %v1870 = vmax.f32 %v1498, 0.0
    %v1871 = vmax.f32 %v1501, 0.0
    %v1872 = vmax.f32 %v1506, 0.0
    %v1873 = vmax.f32 %v1509, 0.0
    %v1874 = vmax.f32 %v1514, 0.0
    %v1875 = vmax.f32 %v1517, 0.0
    %v1876 = vmax.f32 %v1522, 0.0
    %v1877 = vmax.f32 %v1525, 0.0
    %v1878 = vmax.f32 %v1530, 0.0
    %v1879 = vmax.f32 %v1533, 0.0
    %v1880 = vmax.f32 %v1538, 0.0
    %v1881 = vmax.f32 %v1541, 0.0
    %v1882 = vmax.f32 %v1546, 0.0
    %v1883 = vmax.f32 %v1549, 0.0
    %v1884 = vmax.f32 %v1554, 0.0
    %v1885 = vmax.f32 %v1557, 0.0
    %v1886 = vmax.f32 %v1562, 0.0
    %v1887 = vmax.f32 %v1565, 0.0
    %v1888 = vmax.f32 %v1570, 0.0
    %v1889 = vmax.f32 %v1573, 0.0
    %v1890 = vmax.f32 %v1578, 0.0
    %v1891 = vmax.f32 %v1581, 0.0
    %v1892 = vmax.f32 %v1586, 0.0
    %v1893 = vmax.f32 %v1589, 0.0
    %v1894 = vmax.f32 %v1594, 0.0
    %v1895 = vmax.f32 %v1597, 0.0
    %v1896 = vmax.f32 %v1602, 0.0
    %v1897 = vmax.f32 %v1605, 0.0
    %v1898 = vmax.f32 %v1610, 0.0
    %v1899 = vmax.f32 %v1613, 0.0
    %v1900 = vmax.f32 %v1618, 0.0
    %v1901 = vmax.f32 %v1621, 0.0
    %v1902 = vmax.f32 %v1626, 0.0
    %v1903 = vmax.f32 %v1629, 0.0
    %v1904 = vmax.f32 %v1634, 0.0
    %v1905 = vmax.f32 %v1637, 0.0
    %v1906 = vmax.f32 %v1642, 0.0
    %v1907 = vmax.f32 %v1645, 0.0
    %v1908 = vmax.f32 %v1650, 0.0
    %v1909 = vmax.f32 %v1653, 0.0
    %v1910 = vmax.f32 %v1658, 0.0
    %v1911 = vmax.f32 %v1661, 0.0
    %v1912 = vmax.f32 %v1666, 0.0
    %v1913 = vmax.f32 %v1669, 0.0
    %v1914 = vmax.f32 %v1674, 0.0
    %v1915 = vmax.f32 %v1677, 0.0
    %v1916 = vmax.f32 %v1682, 0.0
    %v1917 = vmax.f32 %v1685, 0.0
    %v1918 = vmax.f32 %v1690, 0.0
    %v1919 = vmax.f32 %v1693, 0.0
    %v1920 = vmax.f32 %v1698, 0.0
    %v1921 = vmax.f32 %v1701, 0.0
    %v1922 = vmax.f32 %v1706, 0.0
    %v1923 = vmax.f32 %v1709, 0.0
    %v1924 = vmax.f32 %v1714, 0.0
    %v1925 = vmax.f32 %v1717, 0.0
    %v1926 = vmax.f32 %v1722, 0.0
    %v1927 = vmax.f32 %v1725, 0.0
    %v1928 = vmax.f32 %v1730, 0.0
    %v1929 = vmax.f32 %v1733, 0.0
    %v1930 = vmax.f32 %v1738, 0.0
    %v1931 = vmax.f32 %v1741, 0.0
    %v1932 = vmax.f32 %v1746, 0.0
    %v1933 = vmax.f32 %v1749, 0.0
    %v1934 = vmax.f32 %v1754, 0.0
    %v1935 = vmax.f32 %v1757, 0.0
    %v1936 = vmax.f32 %v1762, 0.0
    %v1937 = vmax.f32 %v1765, 0.0
    %v1938 = vmax.f32 %v1770, 0.0
    %v1939 = vmax.f32 %v1773, 0.0
    %v1940 = vmax.f32 %v1778, 0.0
    %v1941 = vmax.f32 %v1781, 0.0
    %v1942 = vmax.f32 %v1786, 0.0
    %v1943 = vmax.f32 %v1789, 0.0
    %v1944 = vmax.f32 %v1794, 0.0
    %v1945 = vmax.f32 %v1797, 0.0
    %v1946 = vmax.f32 %v1802, 0.0
    %v1947 = vmax.f32 %v1805, 0.0
    %v1948 = vmax.f32 %v1810, 0.0
    %v1949 = vmax.f32 %v1813, 0.0
    %v1950 = vmax.f32 %v1818, 0.0
    %v1951 = vmax.f32 %v1821, 0.0
    %v1952 = vld [vmem:[%s3] sm:$0x1]
    %v1954 = vlaneseq
    %v1955 = vshrl.u32 %v1954, 7
    %v1956 = vsub.s32 0, %v1955
    %v1957 = vrot.slane %v1952, %v1956
    %v1959 = vmul.f32 %v1824, %v1957
    %v1960 = vmul.f32 %v1825, %v1957
    %v1961 = vmul.f32 %v1826, %v1957
    %v1962 = vmul.f32 %v1827, %v1957
    %v1963 = vmul.f32 %v1828, %v1957
    %v1964 = vmul.f32 %v1829, %v1957
    %v1965 = vmul.f32 %v1830, %v1957
    %v1966 = vmul.f32 %v1831, %v1957
    %v1967 = vmul.f32 %v1832, %v1957
    %v1968 = vmul.f32 %v1833, %v1957
    %v1969 = vmul.f32 %v1834, %v1957
    %v1970 = vmul.f32 %v1835, %v1957
    %v1971 = vmul.f32 %v1836, %v1957
    %v1972 = vmul.f32 %v1837, %v1957
    %v1973 = vmul.f32 %v1838, %v1957
    %v1974 = vmul.f32 %v1839, %v1957
    %v1975 = vmul.f32 %v1840, %v1957
    %v1976 = vmul.f32 %v1841, %v1957
    %v1977 = vmul.f32 %v1842, %v1957
    %v1978 = vmul.f32 %v1843, %v1957
    %v1979 = vmul.f32 %v1844, %v1957
    %v1980 = vmul.f32 %v1845, %v1957
    %v1981 = vmul.f32 %v1846, %v1957
    %v1982 = vmul.f32 %v1847, %v1957
    %v1983 = vmul.f32 %v1848, %v1957
    %v1984 = vmul.f32 %v1849, %v1957
    %v1985 = vmul.f32 %v1850, %v1957
    %v1986 = vmul.f32 %v1851, %v1957
    %v1987 = vmul.f32 %v1852, %v1957
    %v1988 = vmul.f32 %v1853, %v1957
    %v1989 = vmul.f32 %v1854, %v1957
    %v1990 = vmul.f32 %v1855, %v1957
    %v1991 = vmul.f32 %v1856, %v1957
    %v1992 = vmul.f32 %v1857, %v1957
    %v1993 = vmul.f32 %v1858, %v1957
    %v1994 = vmul.f32 %v1859, %v1957
    %v1995 = vmul.f32 %v1860, %v1957
    %v1996 = vmul.f32 %v1861, %v1957
    %v1997 = vmul.f32 %v1862, %v1957
    %v1998 = vmul.f32 %v1863, %v1957
    %v1999 = vmul.f32 %v1864, %v1957
    %v2000 = vmul.f32 %v1865, %v1957
    %v2001 = vmul.f32 %v1866, %v1957
    %v2002 = vmul.f32 %v1867, %v1957
    %v2003 = vmul.f32 %v1868, %v1957
    %v2004 = vmul.f32 %v1869, %v1957
    %v2005 = vmul.f32 %v1870, %v1957
    %v2006 = vmul.f32 %v1871, %v1957
    %v2007 = vmul.f32 %v1872, %v1957
    %v2008 = vmul.f32 %v1873, %v1957
    %v2009 = vmul.f32 %v1874, %v1957
    %v2010 = vmul.f32 %v1875, %v1957
    %v2011 = vmul.f32 %v1876, %v1957
    %v2012 = vmul.f32 %v1877, %v1957
    %v2013 = vmul.f32 %v1878, %v1957
    %v2014 = vmul.f32 %v1879, %v1957
    %v2015 = vmul.f32 %v1880, %v1957
    %v2016 = vmul.f32 %v1881, %v1957
    %v2017 = vmul.f32 %v1882, %v1957
    %v2018 = vmul.f32 %v1883, %v1957
    %v2019 = vmul.f32 %v1884, %v1957
    %v2020 = vmul.f32 %v1885, %v1957
    %v2021 = vmul.f32 %v1886, %v1957
    %v2022 = vmul.f32 %v1887, %v1957
    %v2023 = vmul.f32 %v1888, %v1957
    %v2024 = vmul.f32 %v1889, %v1957
    %v2025 = vmul.f32 %v1890, %v1957
    %v2026 = vmul.f32 %v1891, %v1957
    %v2027 = vmul.f32 %v1892, %v1957
    %v2028 = vmul.f32 %v1893, %v1957
    %v2029 = vmul.f32 %v1894, %v1957
    %v2030 = vmul.f32 %v1895, %v1957
    %v2031 = vmul.f32 %v1896, %v1957
    %v2032 = vmul.f32 %v1897, %v1957
    %v2033 = vmul.f32 %v1898, %v1957
    %v2034 = vmul.f32 %v1899, %v1957
    %v2035 = vmul.f32 %v1900, %v1957
    %v2036 = vmul.f32 %v1901, %v1957
    %v2037 = vmul.f32 %v1902, %v1957
    %v2038 = vmul.f32 %v1903, %v1957
    %v2039 = vmul.f32 %v1904, %v1957
    %v2040 = vmul.f32 %v1905, %v1957
    %v2041 = vmul.f32 %v1906, %v1957
    %v2042 = vmul.f32 %v1907, %v1957
    %v2043 = vmul.f32 %v1908, %v1957
    %v2044 = vmul.f32 %v1909, %v1957
    %v2045 = vmul.f32 %v1910, %v1957
    %v2046 = vmul.f32 %v1911, %v1957
    %v2047 = vmul.f32 %v1912, %v1957
    %v2048 = vmul.f32 %v1913, %v1957
    %v2049 = vmul.f32 %v1914, %v1957
    %v2050 = vmul.f32 %v1915, %v1957
    %v2051 = vmul.f32 %v1916, %v1957
    %v2052 = vmul.f32 %v1917, %v1957
    %v2053 = vmul.f32 %v1918, %v1957
    %v2054 = vmul.f32 %v1919, %v1957
    %v2055 = vmul.f32 %v1920, %v1957
    %v2056 = vmul.f32 %v1921, %v1957
    %v2057 = vmul.f32 %v1922, %v1957
    %v2058 = vmul.f32 %v1923, %v1957
    %v2059 = vmul.f32 %v1924, %v1957
    %v2060 = vmul.f32 %v1925, %v1957
    %v2061 = vmul.f32 %v1926, %v1957
    %v2062 = vmul.f32 %v1927, %v1957
    %v2063 = vmul.f32 %v1928, %v1957
    %v2064 = vmul.f32 %v1929, %v1957
    %v2065 = vmul.f32 %v1930, %v1957
    %v2066 = vmul.f32 %v1931, %v1957
    %v2067 = vmul.f32 %v1932, %v1957
    %v2068 = vmul.f32 %v1933, %v1957
    %v2069 = vmul.f32 %v1934, %v1957
    %v2070 = vmul.f32 %v1935, %v1957
    %v2071 = vmul.f32 %v1936, %v1957
    %v2072 = vmul.f32 %v1937, %v1957
    %v2073 = vmul.f32 %v1938, %v1957
    %v2074 = vmul.f32 %v1939, %v1957
    %v2075 = vmul.f32 %v1940, %v1957
    %v2076 = vmul.f32 %v1941, %v1957
    %v2077 = vmul.f32 %v1942, %v1957
    %v2078 = vmul.f32 %v1943, %v1957
    %v2079 = vmul.f32 %v1944, %v1957
    %v2080 = vmul.f32 %v1945, %v1957
    %v2081 = vmul.f32 %v1946, %v1957
    %v2082 = vmul.f32 %v1947, %v1957
    %v2083 = vmul.f32 %v1948, %v1957
    %v2084 = vmul.f32 %v1949, %v1957
    %v2085 = vmul.f32 %v1950, %v1957
    %v2086 = vmul.f32 %v1951, %v1957
    %2087 = vadd.xlane.f32.xlu0 %v1959
    %v2088 = vpop.xlane.xlu0 %2087
    %2089 = vadd.xlane.f32.xlu0 %v1960
    %v2090 = vpop.xlane.xlu0 %2089
    %2091 = vadd.xlane.f32.xlu0 %v1961
    %v2092 = vpop.xlane.xlu0 %2091
    %2093 = vadd.xlane.f32.xlu0 %v1962
    %v2094 = vpop.xlane.xlu0 %2093
    %2095 = vadd.xlane.f32.xlu0 %v1963
    %v2096 = vpop.xlane.xlu0 %2095
    %2097 = vadd.xlane.f32.xlu0 %v1964
    %v2098 = vpop.xlane.xlu0 %2097
    %2099 = vadd.xlane.f32.xlu0 %v1965
    %v2100 = vpop.xlane.xlu0 %2099
    %2101 = vadd.xlane.f32.xlu0 %v1966
    %v2102 = vpop.xlane.xlu0 %2101
    %2103 = vadd.xlane.f32.xlu0 %v1967
    %v2104 = vpop.xlane.xlu0 %2103
    %2105 = vadd.xlane.f32.xlu0 %v1968
    %v2106 = vpop.xlane.xlu0 %2105
    %2107 = vadd.xlane.f32.xlu0 %v1969
    %v2108 = vpop.xlane.xlu0 %2107
    %2109 = vadd.xlane.f32.xlu0 %v1970
    %v2110 = vpop.xlane.xlu0 %2109
    %2111 = vadd.xlane.f32.xlu0 %v1971
    %v2112 = vpop.xlane.xlu0 %2111
    %2113 = vadd.xlane.f32.xlu0 %v1972
    %v2114 = vpop.xlane.xlu0 %2113
    %2115 = vadd.xlane.f32.xlu0 %v1973
    %v2116 = vpop.xlane.xlu0 %2115
    %2117 = vadd.xlane.f32.xlu0 %v1974
    %v2118 = vpop.xlane.xlu0 %2117
    %2119 = vadd.xlane.f32.xlu0 %v1975
    %v2120 = vpop.xlane.xlu0 %2119
    %2121 = vadd.xlane.f32.xlu0 %v1976
    %v2122 = vpop.xlane.xlu0 %2121
    %2123 = vadd.xlane.f32.xlu0 %v1977
    %v2124 = vpop.xlane.xlu0 %2123
    %2125 = vadd.xlane.f32.xlu0 %v1978
    %v2126 = vpop.xlane.xlu0 %2125
    %2127 = vadd.xlane.f32.xlu0 %v1979
    %v2128 = vpop.xlane.xlu0 %2127
    %2129 = vadd.xlane.f32.xlu0 %v1980
    %v2130 = vpop.xlane.xlu0 %2129
    %2131 = vadd.xlane.f32.xlu0 %v1981
    %v2132 = vpop.xlane.xlu0 %2131
    %2133 = vadd.xlane.f32.xlu0 %v1982
    %v2134 = vpop.xlane.xlu0 %2133
    %2135 = vadd.xlane.f32.xlu0 %v1983
    %v2136 = vpop.xlane.xlu0 %2135
    %2137 = vadd.xlane.f32.xlu0 %v1984
    %v2138 = vpop.xlane.xlu0 %2137
    %2139 = vadd.xlane.f32.xlu0 %v1985
    %v2140 = vpop.xlane.xlu0 %2139
    %2141 = vadd.xlane.f32.xlu0 %v1986
    %v2142 = vpop.xlane.xlu0 %2141
    %2143 = vadd.xlane.f32.xlu0 %v1987
    %v2144 = vpop.xlane.xlu0 %2143
    %2145 = vadd.xlane.f32.xlu0 %v1988
    %v2146 = vpop.xlane.xlu0 %2145
    %2147 = vadd.xlane.f32.xlu0 %v1989
    %v2148 = vpop.xlane.xlu0 %2147
    %2149 = vadd.xlane.f32.xlu0 %v1990
    %v2150 = vpop.xlane.xlu0 %2149
    %2151 = vadd.xlane.f32.xlu0 %v1991
    %v2152 = vpop.xlane.xlu0 %2151
    %2153 = vadd.xlane.f32.xlu0 %v1992
    %v2154 = vpop.xlane.xlu0 %2153
    %2155 = vadd.xlane.f32.xlu0 %v1993
    %v2156 = vpop.xlane.xlu0 %2155
    %2157 = vadd.xlane.f32.xlu0 %v1994
    %v2158 = vpop.xlane.xlu0 %2157
    %2159 = vadd.xlane.f32.xlu0 %v1995
    %v2160 = vpop.xlane.xlu0 %2159
    %2161 = vadd.xlane.f32.xlu0 %v1996
    %v2162 = vpop.xlane.xlu0 %2161
    %2163 = vadd.xlane.f32.xlu0 %v1997
    %v2164 = vpop.xlane.xlu0 %2163
    %2165 = vadd.xlane.f32.xlu0 %v1998
    %v2166 = vpop.xlane.xlu0 %2165
    %2167 = vadd.xlane.f32.xlu0 %v1999
    %v2168 = vpop.xlane.xlu0 %2167
    %2169 = vadd.xlane.f32.xlu0 %v2000
    %v2170 = vpop.xlane.xlu0 %2169
    %2171 = vadd.xlane.f32.xlu0 %v2001
    %v2172 = vpop.xlane.xlu0 %2171
    %2173 = vadd.xlane.f32.xlu0 %v2002
    %v2174 = vpop.xlane.xlu0 %2173
    %2175 = vadd.xlane.f32.xlu0 %v2003
    %v2176 = vpop.xlane.xlu0 %2175
    %2177 = vadd.xlane.f32.xlu0 %v2004
    %v2178 = vpop.xlane.xlu0 %2177
    %2179 = vadd.xlane.f32.xlu0 %v2005
    %v2180 = vpop.xlane.xlu0 %2179
    %2181 = vadd.xlane.f32.xlu0 %v2006
    %v2182 = vpop.xlane.xlu0 %2181
    %2183 = vadd.xlane.f32.xlu0 %v2007
    %v2184 = vpop.xlane.xlu0 %2183
    %2185 = vadd.xlane.f32.xlu0 %v2008
    %v2186 = vpop.xlane.xlu0 %2185
    %2187 = vadd.xlane.f32.xlu0 %v2009
    %v2188 = vpop.xlane.xlu0 %2187
    %2189 = vadd.xlane.f32.xlu0 %v2010
    %v2190 = vpop.xlane.xlu0 %2189
    %2191 = vadd.xlane.f32.xlu0 %v2011
    %v2192 = vpop.xlane.xlu0 %2191
    %2193 = vadd.xlane.f32.xlu0 %v2012
    %v2194 = vpop.xlane.xlu0 %2193
    %2195 = vadd.xlane.f32.xlu0 %v2013
    %v2196 = vpop.xlane.xlu0 %2195
    %2197 = vadd.xlane.f32.xlu0 %v2014
    %v2198 = vpop.xlane.xlu0 %2197
    %2199 = vadd.xlane.f32.xlu0 %v2015
    %v2200 = vpop.xlane.xlu0 %2199
    %2201 = vadd.xlane.f32.xlu0 %v2016
    %v2202 = vpop.xlane.xlu0 %2201
    %2203 = vadd.xlane.f32.xlu0 %v2017
    %v2204 = vpop.xlane.xlu0 %2203
    %2205 = vadd.xlane.f32.xlu0 %v2018
    %v2206 = vpop.xlane.xlu0 %2205
    %2207 = vadd.xlane.f32.xlu0 %v2019
    %v2208 = vpop.xlane.xlu0 %2207
    %2209 = vadd.xlane.f32.xlu0 %v2020
    %v2210 = vpop.xlane.xlu0 %2209
    %2211 = vadd.xlane.f32.xlu0 %v2021
    %v2212 = vpop.xlane.xlu0 %2211
    %2213 = vadd.xlane.f32.xlu0 %v2022
    %v2214 = vpop.xlane.xlu0 %2213
    %2215 = vadd.xlane.f32.xlu0 %v2023
    %v2216 = vpop.xlane.xlu0 %2215
    %2217 = vadd.xlane.f32.xlu0 %v2024
    %v2218 = vpop.xlane.xlu0 %2217
    %2219 = vadd.xlane.f32.xlu0 %v2025
    %v2220 = vpop.xlane.xlu0 %2219
    %2221 = vadd.xlane.f32.xlu0 %v2026
    %v2222 = vpop.xlane.xlu0 %2221
    %2223 = vadd.xlane.f32.xlu0 %v2027
    %v2224 = vpop.xlane.xlu0 %2223
    %2225 = vadd.xlane.f32.xlu0 %v2028
    %v2226 = vpop.xlane.xlu0 %2225
    %2227 = vadd.xlane.f32.xlu0 %v2029
    %v2228 = vpop.xlane.xlu0 %2227
    %2229 = vadd.xlane.f32.xlu0 %v2030
    %v2230 = vpop.xlane.xlu0 %2229
    %2231 = vadd.xlane.f32.xlu0 %v2031
    %v2232 = vpop.xlane.xlu0 %2231
    %2233 = vadd.xlane.f32.xlu0 %v2032
    %v2234 = vpop.xlane.xlu0 %2233
    %2235 = vadd.xlane.f32.xlu0 %v2033
    %v2236 = vpop.xlane.xlu0 %2235
    %2237 = vadd.xlane.f32.xlu0 %v2034
    %v2238 = vpop.xlane.xlu0 %2237
    %2239 = vadd.xlane.f32.xlu0 %v2035
    %v2240 = vpop.xlane.xlu0 %2239
    %2241 = vadd.xlane.f32.xlu0 %v2036
    %v2242 = vpop.xlane.xlu0 %2241
    %2243 = vadd.xlane.f32.xlu0 %v2037
    %v2244 = vpop.xlane.xlu0 %2243
    %2245 = vadd.xlane.f32.xlu0 %v2038
    %v2246 = vpop.xlane.xlu0 %2245
    %2247 = vadd.xlane.f32.xlu0 %v2039
    %v2248 = vpop.xlane.xlu0 %2247
    %2249 = vadd.xlane.f32.xlu0 %v2040
    %v2250 = vpop.xlane.xlu0 %2249
    %2251 = vadd.xlane.f32.xlu0 %v2041
    %v2252 = vpop.xlane.xlu0 %2251
    %2253 = vadd.xlane.f32.xlu0 %v2042
    %v2254 = vpop.xlane.xlu0 %2253
    %2255 = vadd.xlane.f32.xlu0 %v2043
    %v2256 = vpop.xlane.xlu0 %2255
    %2257 = vadd.xlane.f32.xlu0 %v2044
    %v2258 = vpop.xlane.xlu0 %2257
    %2259 = vadd.xlane.f32.xlu0 %v2045
    %v2260 = vpop.xlane.xlu0 %2259
    %2261 = vadd.xlane.f32.xlu0 %v2046
    %v2262 = vpop.xlane.xlu0 %2261
    %2263 = vadd.xlane.f32.xlu0 %v2047
    %v2264 = vpop.xlane.xlu0 %2263
    %2265 = vadd.xlane.f32.xlu0 %v2048
    %v2266 = vpop.xlane.xlu0 %2265
    %2267 = vadd.xlane.f32.xlu0 %v2049
    %v2268 = vpop.xlane.xlu0 %2267
    %2269 = vadd.xlane.f32.xlu0 %v2050
    %v2270 = vpop.xlane.xlu0 %2269
    %2271 = vadd.xlane.f32.xlu0 %v2051
    %v2272 = vpop.xlane.xlu0 %2271
    %2273 = vadd.xlane.f32.xlu0 %v2052
    %v2274 = vpop.xlane.xlu0 %2273
    %2275 = vadd.xlane.f32.xlu0 %v2053
    %v2276 = vpop.xlane.xlu0 %2275
    %2277 = vadd.xlane.f32.xlu0 %v2054
    %v2278 = vpop.xlane.xlu0 %2277
    %2279 = vadd.xlane.f32.xlu0 %v2055
    %v2280 = vpop.xlane.xlu0 %2279
    %2281 = vadd.xlane.f32.xlu0 %v2056
    %v2282 = vpop.xlane.xlu0 %2281
    %2283 = vadd.xlane.f32.xlu0 %v2057
    %v2284 = vpop.xlane.xlu0 %2283
    %2285 = vadd.xlane.f32.xlu0 %v2058
    %v2286 = vpop.xlane.xlu0 %2285
    %2287 = vadd.xlane.f32.xlu0 %v2059
    %v2288 = vpop.xlane.xlu0 %2287
    %2289 = vadd.xlane.f32.xlu0 %v2060
    %v2290 = vpop.xlane.xlu0 %2289
    %2291 = vadd.xlane.f32.xlu0 %v2061
    %v2292 = vpop.xlane.xlu0 %2291
    %2293 = vadd.xlane.f32.xlu0 %v2062
    %v2294 = vpop.xlane.xlu0 %2293
    %2295 = vadd.xlane.f32.xlu0 %v2063
    %v2296 = vpop.xlane.xlu0 %2295
    %2297 = vadd.xlane.f32.xlu0 %v2064
    %v2298 = vpop.xlane.xlu0 %2297
    %2299 = vadd.xlane.f32.xlu0 %v2065
    %v2300 = vpop.xlane.xlu0 %2299
    %2301 = vadd.xlane.f32.xlu0 %v2066
    %v2302 = vpop.xlane.xlu0 %2301
    %2303 = vadd.xlane.f32.xlu0 %v2067
    %v2304 = vpop.xlane.xlu0 %2303
    %2305 = vadd.xlane.f32.xlu0 %v2068
    %v2306 = vpop.xlane.xlu0 %2305
    %2307 = vadd.xlane.f32.xlu0 %v2069
    %v2308 = vpop.xlane.xlu0 %2307
    %2309 = vadd.xlane.f32.xlu0 %v2070
    %v2310 = vpop.xlane.xlu0 %2309
    %2311 = vadd.xlane.f32.xlu0 %v2071
    %v2312 = vpop.xlane.xlu0 %2311
    %2313 = vadd.xlane.f32.xlu0 %v2072
    %v2314 = vpop.xlane.xlu0 %2313
    %2315 = vadd.xlane.f32.xlu0 %v2073
    %v2316 = vpop.xlane.xlu0 %2315
    %2317 = vadd.xlane.f32.xlu0 %v2074
    %v2318 = vpop.xlane.xlu0 %2317
    %2319 = vadd.xlane.f32.xlu0 %v2075
    %v2320 = vpop.xlane.xlu0 %2319
    %2321 = vadd.xlane.f32.xlu0 %v2076
    %v2322 = vpop.xlane.xlu0 %2321
    %2323 = vadd.xlane.f32.xlu0 %v2077
    %v2324 = vpop.xlane.xlu0 %2323
    %2325 = vadd.xlane.f32.xlu0 %v2078
    %v2326 = vpop.xlane.xlu0 %2325
    %2327 = vadd.xlane.f32.xlu0 %v2079
    %v2328 = vpop.xlane.xlu0 %2327
    %2329 = vadd.xlane.f32.xlu0 %v2080
    %v2330 = vpop.xlane.xlu0 %2329
    %2331 = vadd.xlane.f32.xlu0 %v2081
    %v2332 = vpop.xlane.xlu0 %2331
    %2333 = vadd.xlane.f32.xlu0 %v2082
    %v2334 = vpop.xlane.xlu0 %2333
    %2335 = vadd.xlane.f32.xlu0 %v2083
    %v2336 = vpop.xlane.xlu0 %2335
    %2337 = vadd.xlane.f32.xlu0 %v2084
    %v2338 = vpop.xlane.xlu0 %2337
    %2339 = vadd.xlane.f32.xlu0 %v2085
    %v2340 = vpop.xlane.xlu0 %2339
    %2341 = vadd.xlane.f32.xlu0 %v2086
    %v2342 = vpop.xlane.xlu0 %2341
    %s2343 = sld [smem:[#allocation2]]
    %v2344 = vstv %s2343
    %v2345 = vadd.f32 %v2088, %v2344
    %v2346 = vadd.f32 %v2090, %v2344
    %v2347 = vadd.f32 %v2092, %v2344
    %v2348 = vadd.f32 %v2094, %v2344
    %v2349 = vadd.f32 %v2096, %v2344
    %v2350 = vadd.f32 %v2098, %v2344
    %v2351 = vadd.f32 %v2100, %v2344
    %v2352 = vadd.f32 %v2102, %v2344
    %v2353 = vadd.f32 %v2104, %v2344
    %v2354 = vadd.f32 %v2106, %v2344
    %v2355 = vadd.f32 %v2108, %v2344
    %v2356 = vadd.f32 %v2110, %v2344
    %v2357 = vadd.f32 %v2112, %v2344
    %v2358 = vadd.f32 %v2114, %v2344
    %v2359 = vadd.f32 %v2116, %v2344
    %v2360 = vadd.f32 %v2118, %v2344
    %v2361 = vadd.f32 %v2120, %v2344
    %v2362 = vadd.f32 %v2122, %v2344
    %v2363 = vadd.f32 %v2124, %v2344
    %v2364 = vadd.f32 %v2126, %v2344
    %v2365 = vadd.f32 %v2128, %v2344
    %v2366 = vadd.f32 %v2130, %v2344
    %v2367 = vadd.f32 %v2132, %v2344
    %v2368 = vadd.f32 %v2134, %v2344
    %v2369 = vadd.f32 %v2136, %v2344
    %v2370 = vadd.f32 %v2138, %v2344
    %v2371 = vadd.f32 %v2140, %v2344
    %v2372 = vadd.f32 %v2142, %v2344
    %v2373 = vadd.f32 %v2144, %v2344
    %v2374 = vadd.f32 %v2146, %v2344
    %v2375 = vadd.f32 %v2148, %v2344
    %v2376 = vadd.f32 %v2150, %v2344
    %v2377 = vadd.f32 %v2152, %v2344
    %v2378 = vadd.f32 %v2154, %v2344
    %v2379 = vadd.f32 %v2156, %v2344
    %v2380 = vadd.f32 %v2158, %v2344
    %v2381 = vadd.f32 %v2160, %v2344
    %v2382 = vadd.f32 %v2162, %v2344
    %v2383 = vadd.f32 %v2164, %v2344
    %v2384 = vadd.f32 %v2166, %v2344
    %v2385 = vadd.f32 %v2168, %v2344
    %v2386 = vadd.f32 %v2170, %v2344
    %v2387 = vadd.f32 %v2172, %v2344
    %v2388 = vadd.f32 %v2174, %v2344
    %v2389 = vadd.f32 %v2176, %v2344
    %v2390 = vadd.f32 %v2178, %v2344
    %v2391 = vadd.f32 %v2180, %v2344
    %v2392 = vadd.f32 %v2182, %v2344
    %v2393 = vadd.f32 %v2184, %v2344
    %v2394 = vadd.f32 %v2186, %v2344
    %v2395 = vadd.f32 %v2188, %v2344
    %v2396 = vadd.f32 %v2190, %v2344
    %v2397 = vadd.f32 %v2192, %v2344
    %v2398 = vadd.f32 %v2194, %v2344
    %v2399 = vadd.f32 %v2196, %v2344
    %v2400 = vadd.f32 %v2198, %v2344
    %v2401 = vadd.f32 %v2200, %v2344
    %v2402 = vadd.f32 %v2202, %v2344
    %v2403 = vadd.f32 %v2204, %v2344
    %v2404 = vadd.f32 %v2206, %v2344
    %v2405 = vadd.f32 %v2208, %v2344
    %v2406 = vadd.f32 %v2210, %v2344
    %v2407 = vadd.f32 %v2212, %v2344
    %v2408 = vadd.f32 %v2214, %v2344
    %v2409 = vadd.f32 %v2216, %v2344
    %v2410 = vadd.f32 %v2218, %v2344
    %v2411 = vadd.f32 %v2220, %v2344
    %v2412 = vadd.f32 %v2222, %v2344
    %v2413 = vadd.f32 %v2224, %v2344
    %v2414 = vadd.f32 %v2226, %v2344
    %v2415 = vadd.f32 %v2228, %v2344
    %v2416 = vadd.f32 %v2230, %v2344
    %v2417 = vadd.f32 %v2232, %v2344
    %v2418 = vadd.f32 %v2234, %v2344
    %v2419 = vadd.f32 %v2236, %v2344
    %v2420 = vadd.f32 %v2238, %v2344
    %v2421 = vadd.f32 %v2240, %v2344
    %v2422 = vadd.f32 %v2242, %v2344
    %v2423 = vadd.f32 %v2244, %v2344
    %v2424 = vadd.f32 %v2246, %v2344
    %v2425 = vadd.f32 %v2248, %v2344
    %v2426 = vadd.f32 %v2250, %v2344
    %v2427 = vadd.f32 %v2252, %v2344
    %v2428 = vadd.f32 %v2254, %v2344
    %v2429 = vadd.f32 %v2256, %v2344
    %v2430 = vadd.f32 %v2258, %v2344
    %v2431 = vadd.f32 %v2260, %v2344
    %v2432 = vadd.f32 %v2262, %v2344
    %v2433 = vadd.f32 %v2264, %v2344
    %v2434 = vadd.f32 %v2266, %v2344
    %v2435 = vadd.f32 %v2268, %v2344
    %v2436 = vadd.f32 %v2270, %v2344
    %v2437 = vadd.f32 %v2272, %v2344
    %v2438 = vadd.f32 %v2274, %v2344
    %v2439 = vadd.f32 %v2276, %v2344
    %v2440 = vadd.f32 %v2278, %v2344
    %v2441 = vadd.f32 %v2280, %v2344
    %v2442 = vadd.f32 %v2282, %v2344
    %v2443 = vadd.f32 %v2284, %v2344
    %v2444 = vadd.f32 %v2286, %v2344
    %v2445 = vadd.f32 %v2288, %v2344
    %v2446 = vadd.f32 %v2290, %v2344
    %v2447 = vadd.f32 %v2292, %v2344
    %v2448 = vadd.f32 %v2294, %v2344
    %v2449 = vadd.f32 %v2296, %v2344
    %v2450 = vadd.f32 %v2298, %v2344
    %v2451 = vadd.f32 %v2300, %v2344
    %v2452 = vadd.f32 %v2302, %v2344
    %v2453 = vadd.f32 %v2304, %v2344
    %v2454 = vadd.f32 %v2306, %v2344
    %v2455 = vadd.f32 %v2308, %v2344
    %v2456 = vadd.f32 %v2310, %v2344
    %v2457 = vadd.f32 %v2312, %v2344
    %v2458 = vadd.f32 %v2314, %v2344
    %v2459 = vadd.f32 %v2316, %v2344
    %v2460 = vadd.f32 %v2318, %v2344
    %v2461 = vadd.f32 %v2320, %v2344
    %v2462 = vadd.f32 %v2322, %v2344
    %v2463 = vadd.f32 %v2324, %v2344
    %v2464 = vadd.f32 %v2326, %v2344
    %v2465 = vadd.f32 %v2328, %v2344
    %v2466 = vadd.f32 %v2330, %v2344
    %v2467 = vadd.f32 %v2332, %v2344
    %v2468 = vadd.f32 %v2334, %v2344
    %v2469 = vadd.f32 %v2336, %v2344
    %v2470 = vadd.f32 %v2338, %v2344
    %v2471 = vadd.f32 %v2340, %v2344
    %v2472 = vadd.f32 %v2342, %v2344
    %v2473 = vxor.u32 %v2345, 2147483648
    %v2474 = vxor.u32 %v2346, 2147483648
    %v2475 = vxor.u32 %v2347, 2147483648
    %v2476 = vxor.u32 %v2348, 2147483648
    %v2477 = vxor.u32 %v2349, 2147483648
    %v2478 = vxor.u32 %v2350, 2147483648
    %v2479 = vxor.u32 %v2351, 2147483648
    %v2480 = vxor.u32 %v2352, 2147483648
    %v2481 = vxor.u32 %v2353, 2147483648
    %v2482 = vxor.u32 %v2354, 2147483648
    %v2483 = vxor.u32 %v2355, 2147483648
    %v2484 = vxor.u32 %v2356, 2147483648
    %v2485 = vxor.u32 %v2357, 2147483648
    %v2486 = vxor.u32 %v2358, 2147483648
    %v2487 = vxor.u32 %v2359, 2147483648
    %v2488 = vxor.u32 %v2360, 2147483648
    %v2489 = vxor.u32 %v2361, 2147483648
    %v2490 = vxor.u32 %v2362, 2147483648
    %v2491 = vxor.u32 %v2363, 2147483648
    %v2492 = vxor.u32 %v2364, 2147483648
    %v2493 = vxor.u32 %v2365, 2147483648
    %v2494 = vxor.u32 %v2366, 2147483648
    %v2495 = vxor.u32 %v2367, 2147483648
    %v2496 = vxor.u32 %v2368, 2147483648
    %v2497 = vxor.u32 %v2369, 2147483648
    %v2498 = vxor.u32 %v2370, 2147483648
    %v2499 = vxor.u32 %v2371, 2147483648
    %v2500 = vxor.u32 %v2372, 2147483648
    %v2501 = vxor.u32 %v2373, 2147483648
    %v2502 = vxor.u32 %v2374, 2147483648
    %v2503 = vxor.u32 %v2375, 2147483648
    %v2504 = vxor.u32 %v2376, 2147483648
    %v2505 = vxor.u32 %v2377, 2147483648
    %v2506 = vxor.u32 %v2378, 2147483648
    %v2507 = vxor.u32 %v2379, 2147483648
    %v2508 = vxor.u32 %v2380, 2147483648
    %v2509 = vxor.u32 %v2381, 2147483648
    %v2510 = vxor.u32 %v2382, 2147483648
    %v2511 = vxor.u32 %v2383, 2147483648
    %v2512 = vxor.u32 %v2384, 2147483648
    %v2513 = vxor.u32 %v2385, 2147483648
    %v2514 = vxor.u32 %v2386, 2147483648
    %v2515 = vxor.u32 %v2387, 2147483648
    %v2516 = vxor.u32 %v2388, 2147483648
    %v2517 = vxor.u32 %v2389, 2147483648
    %v2518 = vxor.u32 %v2390, 2147483648
    %v2519 = vxor.u32 %v2391, 2147483648
    %v2520 = vxor.u32 %v2392, 2147483648
    %v2521 = vxor.u32 %v2393, 2147483648
    %v2522 = vxor.u32 %v2394, 2147483648
    %v2523 = vxor.u32 %v2395, 2147483648
    %v2524 = vxor.u32 %v2396, 2147483648
    %v2525 = vxor.u32 %v2397, 2147483648
    %v2526 = vxor.u32 %v2398, 2147483648
    %v2527 = vxor.u32 %v2399, 2147483648
    %v2528 = vxor.u32 %v2400, 2147483648
    %v2529 = vxor.u32 %v2401, 2147483648
    %v2530 = vxor.u32 %v2402, 2147483648
    %v2531 = vxor.u32 %v2403, 2147483648
    %v2532 = vxor.u32 %v2404, 2147483648
    %v2533 = vxor.u32 %v2405, 2147483648
    %v2534 = vxor.u32 %v2406, 2147483648
    %v2535 = vxor.u32 %v2407, 2147483648
    %v2536 = vxor.u32 %v2408, 2147483648
    %v2537 = vxor.u32 %v2409, 2147483648
    %v2538 = vxor.u32 %v2410, 2147483648
    %v2539 = vxor.u32 %v2411, 2147483648
    %v2540 = vxor.u32 %v2412, 2147483648
    %v2541 = vxor.u32 %v2413, 2147483648
    %v2542 = vxor.u32 %v2414, 2147483648
    %v2543 = vxor.u32 %v2415, 2147483648
    %v2544 = vxor.u32 %v2416, 2147483648
    %v2545 = vxor.u32 %v2417, 2147483648
    %v2546 = vxor.u32 %v2418, 2147483648
    %v2547 = vxor.u32 %v2419, 2147483648
    %v2548 = vxor.u32 %v2420, 2147483648
    %v2549 = vxor.u32 %v2421, 2147483648
    %v2550 = vxor.u32 %v2422, 2147483648
    %v2551 = vxor.u32 %v2423, 2147483648
    %v2552 = vxor.u32 %v2424, 2147483648
    %v2553 = vxor.u32 %v2425, 2147483648
    %v2554 = vxor.u32 %v2426, 2147483648
    %v2555 = vxor.u32 %v2427, 2147483648
    %v2556 = vxor.u32 %v2428, 2147483648
    %v2557 = vxor.u32 %v2429, 2147483648
    %v2558 = vxor.u32 %v2430, 2147483648
    %v2559 = vxor.u32 %v2431, 2147483648
    %v2560 = vxor.u32 %v2432, 2147483648
    %v2561 = vxor.u32 %v2433, 2147483648
    %v2562 = vxor.u32 %v2434, 2147483648
    %v2563 = vxor.u32 %v2435, 2147483648
    %v2564 = vxor.u32 %v2436, 2147483648
    %v2565 = vxor.u32 %v2437, 2147483648
    %v2566 = vxor.u32 %v2438, 2147483648
    %v2567 = vxor.u32 %v2439, 2147483648
    %v2568 = vxor.u32 %v2440, 2147483648
    %v2569 = vxor.u32 %v2441, 2147483648
    %v2570 = vxor.u32 %v2442, 2147483648
    %v2571 = vxor.u32 %v2443, 2147483648
    %v2572 = vxor.u32 %v2444, 2147483648
    %v2573 = vxor.u32 %v2445, 2147483648
    %v2574 = vxor.u32 %v2446, 2147483648
    %v2575 = vxor.u32 %v2447, 2147483648
    %v2576 = vxor.u32 %v2448, 2147483648
    %v2577 = vxor.u32 %v2449, 2147483648
    %v2578 = vxor.u32 %v2450, 2147483648
    %v2579 = vxor.u32 %v2451, 2147483648
    %v2580 = vxor.u32 %v2452, 2147483648
    %v2581 = vxor.u32 %v2453, 2147483648
    %v2582 = vxor.u32 %v2454, 2147483648
    %v2583 = vxor.u32 %v2455, 2147483648
    %v2584 = vxor.u32 %v2456, 2147483648
    %v2585 = vxor.u32 %v2457, 2147483648
    %v2586 = vxor.u32 %v2458, 2147483648
    %v2587 = vxor.u32 %v2459, 2147483648
    %v2588 = vxor.u32 %v2460, 2147483648
    %v2589 = vxor.u32 %v2461, 2147483648
    %v2590 = vxor.u32 %v2462, 2147483648
    %v2591 = vxor.u32 %v2463, 2147483648
    %v2592 = vxor.u32 %v2464, 2147483648
    %v2593 = vxor.u32 %v2465, 2147483648
    %v2594 = vxor.u32 %v2466, 2147483648
    %v2595 = vxor.u32 %v2467, 2147483648
    %v2596 = vxor.u32 %v2468, 2147483648
    %v2597 = vxor.u32 %v2469, 2147483648
    %v2598 = vxor.u32 %v2470, 2147483648
    %v2599 = vxor.u32 %v2471, 2147483648
    %v2600 = vxor.u32 %v2472, 2147483648
    %v2601 = vmul.f32 %v2473, 1.442695
    %v2602 = vpow.pop %v2601
    %v2603 = vmul.f32 %v2474, 1.442695
    %v2604 = vpow.pop %v2603
    %v2605 = vmul.f32 %v2475, 1.442695
    %v2606 = vpow.pop %v2605
    %v2607 = vmul.f32 %v2476, 1.442695
    %v2608 = vpow.pop %v2607
    %v2609 = vmul.f32 %v2477, 1.442695
    %v2610 = vpow.pop %v2609
    %v2611 = vmul.f32 %v2478, 1.442695
    %v2612 = vpow.pop %v2611
    %v2613 = vmul.f32 %v2479, 1.442695
    %v2614 = vpow.pop %v2613
    %v2615 = vmul.f32 %v2480, 1.442695
    %v2616 = vpow.pop %v2615
    %v2617 = vmul.f32 %v2481, 1.442695
    %v2618 = vpow.pop %v2617
    %v2619 = vmul.f32 %v2482, 1.442695
    %v2620 = vpow.pop %v2619
    %v2621 = vmul.f32 %v2483, 1.442695
    %v2622 = vpow.pop %v2621
    %v2623 = vmul.f32 %v2484, 1.442695
    %v2624 = vpow.pop %v2623
    %v2625 = vmul.f32 %v2485, 1.442695
    %v2626 = vpow.pop %v2625
    %v2627 = vmul.f32 %v2486, 1.442695
    %v2628 = vpow.pop %v2627
    %v2629 = vmul.f32 %v2487, 1.442695
    %v2630 = vpow.pop %v2629
    %v2631 = vmul.f32 %v2488, 1.442695
    %v2632 = vpow.pop %v2631
    %v2633 = vmul.f32 %v2489, 1.442695
    %v2634 = vpow.pop %v2633
    %v2635 = vmul.f32 %v2490, 1.442695
    %v2636 = vpow.pop %v2635
    %v2637 = vmul.f32 %v2491, 1.442695
    %v2638 = vpow.pop %v2637
    %v2639 = vmul.f32 %v2492, 1.442695
    %v2640 = vpow.pop %v2639
    %v2641 = vmul.f32 %v2493, 1.442695
    %v2642 = vpow.pop %v2641
    %v2643 = vmul.f32 %v2494, 1.442695
    %v2644 = vpow.pop %v2643
    %v2645 = vmul.f32 %v2495, 1.442695
    %v2646 = vpow.pop %v2645
    %v2647 = vmul.f32 %v2496, 1.442695
    %v2648 = vpow.pop %v2647
    %v2649 = vmul.f32 %v2497, 1.442695
    %v2650 = vpow.pop %v2649
    %v2651 = vmul.f32 %v2498, 1.442695
    %v2652 = vpow.pop %v2651
    %v2653 = vmul.f32 %v2499, 1.442695
    %v2654 = vpow.pop %v2653
    %v2655 = vmul.f32 %v2500, 1.442695
    %v2656 = vpow.pop %v2655
    %v2657 = vmul.f32 %v2501, 1.442695
    %v2658 = vpow.pop %v2657
    %v2659 = vmul.f32 %v2502, 1.442695
    %v2660 = vpow.pop %v2659
    %v2661 = vmul.f32 %v2503, 1.442695
    %v2662 = vpow.pop %v2661
    %v2663 = vmul.f32 %v2504, 1.442695
    %v2664 = vpow.pop %v2663
    %v2665 = vmul.f32 %v2505, 1.442695
    %v2666 = vpow.pop %v2665
    %v2667 = vmul.f32 %v2506, 1.442695
    %v2668 = vpow.pop %v2667
    %v2669 = vmul.f32 %v2507, 1.442695
    %v2670 = vpow.pop %v2669
    %v2671 = vmul.f32 %v2508, 1.442695
    %v2672 = vpow.pop %v2671
    %v2673 = vmul.f32 %v2509, 1.442695
    %v2674 = vpow.pop %v2673
    %v2675 = vmul.f32 %v2510, 1.442695
    %v2676 = vpow.pop %v2675
    %v2677 = vmul.f32 %v2511, 1.442695
    %v2678 = vpow.pop %v2677
    %v2679 = vmul.f32 %v2512, 1.442695
    %v2680 = vpow.pop %v2679
    %v2681 = vmul.f32 %v2513, 1.442695
    %v2682 = vpow.pop %v2681
    %v2683 = vmul.f32 %v2514, 1.442695
    %v2684 = vpow.pop %v2683
    %v2685 = vmul.f32 %v2515, 1.442695
    %v2686 = vpow.pop %v2685
    %v2687 = vmul.f32 %v2516, 1.442695
    %v2688 = vpow.pop %v2687
    %v2689 = vmul.f32 %v2517, 1.442695
    %v2690 = vpow.pop %v2689
    %v2691 = vmul.f32 %v2518, 1.442695
    %v2692 = vpow.pop %v2691
    %v2693 = vmul.f32 %v2519, 1.442695
    %v2694 = vpow.pop %v2693
    %v2695 = vmul.f32 %v2520, 1.442695
    %v2696 = vpow.pop %v2695
    %v2697 = vmul.f32 %v2521, 1.442695
    %v2698 = vpow.pop %v2697
    %v2699 = vmul.f32 %v2522, 1.442695
    %v2700 = vpow.pop %v2699
    %v2701 = vmul.f32 %v2523, 1.442695
    %v2702 = vpow.pop %v2701
    %v2703 = vmul.f32 %v2524, 1.442695
    %v2704 = vpow.pop %v2703
    %v2705 = vmul.f32 %v2525, 1.442695
    %v2706 = vpow.pop %v2705
    %v2707 = vmul.f32 %v2526, 1.442695
    %v2708 = vpow.pop %v2707
    %v2709 = vmul.f32 %v2527, 1.442695
    %v2710 = vpow.pop %v2709
    %v2711 = vmul.f32 %v2528, 1.442695
    %v2712 = vpow.pop %v2711
    %v2713 = vmul.f32 %v2529, 1.442695
    %v2714 = vpow.pop %v2713
    %v2715 = vmul.f32 %v2530, 1.442695
    %v2716 = vpow.pop %v2715
    %v2717 = vmul.f32 %v2531, 1.442695
    %v2718 = vpow.pop %v2717
    %v2719 = vmul.f32 %v2532, 1.442695
    %v2720 = vpow.pop %v2719
    %v2721 = vmul.f32 %v2533, 1.442695
    %v2722 = vpow.pop %v2721
    %v2723 = vmul.f32 %v2534, 1.442695
    %v2724 = vpow.pop %v2723
    %v2725 = vmul.f32 %v2535, 1.442695
    %v2726 = vpow.pop %v2725
    %v2727 = vmul.f32 %v2536, 1.442695
    %v2728 = vpow.pop %v2727
    %v2729 = vmul.f32 %v2537, 1.442695
    %v2730 = vpow.pop %v2729
    %v2731 = vmul.f32 %v2538, 1.442695
    %v2732 = vpow.pop %v2731
    %v2733 = vmul.f32 %v2539, 1.442695
    %v2734 = vpow.pop %v2733
    %v2735 = vmul.f32 %v2540, 1.442695
    %v2736 = vpow.pop %v2735
    %v2737 = vmul.f32 %v2541, 1.442695
    %v2738 = vpow.pop %v2737
    %v2739 = vmul.f32 %v2542, 1.442695
    %v2740 = vpow.pop %v2739
    %v2741 = vmul.f32 %v2543, 1.442695
    %v2742 = vpow.pop %v2741
    %v2743 = vmul.f32 %v2544, 1.442695
    %v2744 = vpow.pop %v2743
    %v2745 = vmul.f32 %v2545, 1.442695
    %v2746 = vpow.pop %v2745
    %v2747 = vmul.f32 %v2546, 1.442695
    %v2748 = vpow.pop %v2747
    %v2749 = vmul.f32 %v2547, 1.442695
    %v2750 = vpow.pop %v2749
    %v2751 = vmul.f32 %v2548, 1.442695
    %v2752 = vpow.pop %v2751
    %v2753 = vmul.f32 %v2549, 1.442695
    %v2754 = vpow.pop %v2753
    %v2755 = vmul.f32 %v2550, 1.442695
    %v2756 = vpow.pop %v2755
    %v2757 = vmul.f32 %v2551, 1.442695
    %v2758 = vpow.pop %v2757
    %v2759 = vmul.f32 %v2552, 1.442695
    %v2760 = vpow.pop %v2759
    %v2761 = vmul.f32 %v2553, 1.442695
    %v2762 = vpow.pop %v2761
    %v2763 = vmul.f32 %v2554, 1.442695
    %v2764 = vpow.pop %v2763
    %v2765 = vmul.f32 %v2555, 1.442695
    %v2766 = vpow.pop %v2765
    %v2767 = vmul.f32 %v2556, 1.442695
    %v2768 = vpow.pop %v2767
    %v2769 = vmul.f32 %v2557, 1.442695
    %v2770 = vpow.pop %v2769
    %v2771 = vmul.f32 %v2558, 1.442695
    %v2772 = vpow.pop %v2771
    %v2773 = vmul.f32 %v2559, 1.442695
    %v2774 = vpow.pop %v2773
    %v2775 = vmul.f32 %v2560, 1.442695
    %v2776 = vpow.pop %v2775
    %v2777 = vmul.f32 %v2561, 1.442695
    %v2778 = vpow.pop %v2777
    %v2779 = vmul.f32 %v2562, 1.442695
    %v2780 = vpow.pop %v2779
    %v2781 = vmul.f32 %v2563, 1.442695
    %v2782 = vpow.pop %v2781
    %v2783 = vmul.f32 %v2564, 1.442695
    %v2784 = vpow.pop %v2783
    %v2785 = vmul.f32 %v2565, 1.442695
    %v2786 = vpow.pop %v2785
    %v2787 = vmul.f32 %v2566, 1.442695
    %v2788 = vpow.pop %v2787
    %v2789 = vmul.f32 %v2567, 1.442695
    %v2790 = vpow.pop %v2789
    %v2791 = vmul.f32 %v2568, 1.442695
    %v2792 = vpow.pop %v2791
    %v2793 = vmul.f32 %v2569, 1.442695
    %v2794 = vpow.pop %v2793
    %v2795 = vmul.f32 %v2570, 1.442695
    %v2796 = vpow.pop %v2795
    %v2797 = vmul.f32 %v2571, 1.442695
    %v2798 = vpow.pop %v2797
    %v2799 = vmul.f32 %v2572, 1.442695
    %v2800 = vpow.pop %v2799
    %v2801 = vmul.f32 %v2573, 1.442695
    %v2802 = vpow.pop %v2801
    %v2803 = vmul.f32 %v2574, 1.442695
    %v2804 = vpow.pop %v2803
    %v2805 = vmul.f32 %v2575, 1.442695
    %v2806 = vpow.pop %v2805
    %v2807 = vmul.f32 %v2576, 1.442695
    %v2808 = vpow.pop %v2807
    %v2809 = vmul.f32 %v2577, 1.442695
    %v2810 = vpow.pop %v2809
    %v2811 = vmul.f32 %v2578, 1.442695
    %v2812 = vpow.pop %v2811
    %v2813 = vmul.f32 %v2579, 1.442695
    %v2814 = vpow.pop %v2813
    %v2815 = vmul.f32 %v2580, 1.442695
    %v2816 = vpow.pop %v2815
    %v2817 = vmul.f32 %v2581, 1.442695
    %v2818 = vpow.pop %v2817
    %v2819 = vmul.f32 %v2582, 1.442695
    %v2820 = vpow.pop %v2819
    %v2821 = vmul.f32 %v2583, 1.442695
    %v2822 = vpow.pop %v2821
    %v2823 = vmul.f32 %v2584, 1.442695
    %v2824 = vpow.pop %v2823
    %v2825 = vmul.f32 %v2585, 1.442695
    %v2826 = vpow.pop %v2825
    %v2827 = vmul.f32 %v2586, 1.442695
    %v2828 = vpow.pop %v2827
    %v2829 = vmul.f32 %v2587, 1.442695
    %v2830 = vpow.pop %v2829
    %v2831 = vmul.f32 %v2588, 1.442695
    %v2832 = vpow.pop %v2831
    %v2833 = vmul.f32 %v2589, 1.442695
    %v2834 = vpow.pop %v2833
    %v2835 = vmul.f32 %v2590, 1.442695
    %v2836 = vpow.pop %v2835
    %v2837 = vmul.f32 %v2591, 1.442695
    %v2838 = vpow.pop %v2837
    %v2839 = vmul.f32 %v2592, 1.442695
    %v2840 = vpow.pop %v2839
    %v2841 = vmul.f32 %v2593, 1.442695
    %v2842 = vpow.pop %v2841
    %v2843 = vmul.f32 %v2594, 1.442695
    %v2844 = vpow.pop %v2843
    %v2845 = vmul.f32 %v2595, 1.442695
    %v2846 = vpow.pop %v2845
    %v2847 = vmul.f32 %v2596, 1.442695
    %v2848 = vpow.pop %v2847
    %v2849 = vmul.f32 %v2597, 1.442695
    %v2850 = vpow.pop %v2849
    %v2851 = vmul.f32 %v2598, 1.442695
    %v2852 = vpow.pop %v2851
    %v2853 = vmul.f32 %v2599, 1.442695
    %v2854 = vpow.pop %v2853
    %v2855 = vmul.f32 %v2600, 1.442695
    %v2856 = vpow.pop %v2855
    %v2857 = vadd.f32 %v2602, 1.0
    %v2858 = vadd.f32 %v2604, 1.0
    %v2859 = vadd.f32 %v2606, 1.0
    %v2860 = vadd.f32 %v2608, 1.0
    %v2861 = vadd.f32 %v2610, 1.0
    %v2862 = vadd.f32 %v2612, 1.0
    %v2863 = vadd.f32 %v2614, 1.0
    %v2864 = vadd.f32 %v2616, 1.0
    %v2865 = vadd.f32 %v2618, 1.0
    %v2866 = vadd.f32 %v2620, 1.0
    %v2867 = vadd.f32 %v2622, 1.0
    %v2868 = vadd.f32 %v2624, 1.0
    %v2869 = vadd.f32 %v2626, 1.0
    %v2870 = vadd.f32 %v2628, 1.0
    %v2871 = vadd.f32 %v2630, 1.0
    %v2872 = vadd.f32 %v2632, 1.0
    %v2873 = vadd.f32 %v2634, 1.0
    %v2874 = vadd.f32 %v2636, 1.0
    %v2875 = vadd.f32 %v2638, 1.0
    %v2876 = vadd.f32 %v2640, 1.0
    %v2877 = vadd.f32 %v2642, 1.0
    %v2878 = vadd.f32 %v2644, 1.0
    %v2879 = vadd.f32 %v2646, 1.0
    %v2880 = vadd.f32 %v2648, 1.0
    %v2881 = vadd.f32 %v2650, 1.0
    %v2882 = vadd.f32 %v2652, 1.0
    %v2883 = vadd.f32 %v2654, 1.0
    %v2884 = vadd.f32 %v2656, 1.0
    %v2885 = vadd.f32 %v2658, 1.0
    %v2886 = vadd.f32 %v2660, 1.0
    %v2887 = vadd.f32 %v2662, 1.0
    %v2888 = vadd.f32 %v2664, 1.0
    %v2889 = vadd.f32 %v2666, 1.0
    %v2890 = vadd.f32 %v2668, 1.0
    %v2891 = vadd.f32 %v2670, 1.0
    %v2892 = vadd.f32 %v2672, 1.0
    %v2893 = vadd.f32 %v2674, 1.0
    %v2894 = vadd.f32 %v2676, 1.0
    %v2895 = vadd.f32 %v2678, 1.0
    %v2896 = vadd.f32 %v2680, 1.0
    %v2897 = vadd.f32 %v2682, 1.0
    %v2898 = vadd.f32 %v2684, 1.0
    %v2899 = vadd.f32 %v2686, 1.0
    %v2900 = vadd.f32 %v2688, 1.0
    %v2901 = vadd.f32 %v2690, 1.0
    %v2902 = vadd.f32 %v2692, 1.0
    %v2903 = vadd.f32 %v2694, 1.0
    %v2904 = vadd.f32 %v2696, 1.0
    %v2905 = vadd.f32 %v2698, 1.0
    %v2906 = vadd.f32 %v2700, 1.0
    %v2907 = vadd.f32 %v2702, 1.0
    %v2908 = vadd.f32 %v2704, 1.0
    %v2909 = vadd.f32 %v2706, 1.0
    %v2910 = vadd.f32 %v2708, 1.0
    %v2911 = vadd.f32 %v2710, 1.0
    %v2912 = vadd.f32 %v2712, 1.0
    %v2913 = vadd.f32 %v2714, 1.0
    %v2914 = vadd.f32 %v2716, 1.0
    %v2915 = vadd.f32 %v2718, 1.0
    %v2916 = vadd.f32 %v2720, 1.0
    %v2917 = vadd.f32 %v2722, 1.0
    %v2918 = vadd.f32 %v2724, 1.0
    %v2919 = vadd.f32 %v2726, 1.0
    %v2920 = vadd.f32 %v2728, 1.0
    %v2921 = vadd.f32 %v2730, 1.0
    %v2922 = vadd.f32 %v2732, 1.0
    %v2923 = vadd.f32 %v2734, 1.0
    %v2924 = vadd.f32 %v2736, 1.0
    %v2925 = vadd.f32 %v2738, 1.0
    %v2926 = vadd.f32 %v2740, 1.0
    %v2927 = vadd.f32 %v2742, 1.0
    %v2928 = vadd.f32 %v2744, 1.0
    %v2929 = vadd.f32 %v2746, 1.0
    %v2930 = vadd.f32 %v2748, 1.0
    %v2931 = vadd.f32 %v2750, 1.0
    %v2932 = vadd.f32 %v2752, 1.0
    %v2933 = vadd.f32 %v2754, 1.0
    %v2934 = vadd.f32 %v2756, 1.0
    %v2935 = vadd.f32 %v2758, 1.0
    %v2936 = vadd.f32 %v2760, 1.0
    %v2937 = vadd.f32 %v2762, 1.0
    %v2938 = vadd.f32 %v2764, 1.0
    %v2939 = vadd.f32 %v2766, 1.0
    %v2940 = vadd.f32 %v2768, 1.0
    %v2941 = vadd.f32 %v2770, 1.0
    %v2942 = vadd.f32 %v2772, 1.0
    %v2943 = vadd.f32 %v2774, 1.0
    %v2944 = vadd.f32 %v2776, 1.0
    %v2945 = vadd.f32 %v2778, 1.0
    %v2946 = vadd.f32 %v2780, 1.0
    %v2947 = vadd.f32 %v2782, 1.0
    %v2948 = vadd.f32 %v2784, 1.0
    %v2949 = vadd.f32 %v2786, 1.0
    %v2950 = vadd.f32 %v2788, 1.0
    %v2951 = vadd.f32 %v2790, 1.0
    %v2952 = vadd.f32 %v2792, 1.0
    %v2953 = vadd.f32 %v2794, 1.0
    %v2954 = vadd.f32 %v2796, 1.0
    %v2955 = vadd.f32 %v2798, 1.0
    %v2956 = vadd.f32 %v2800, 1.0
    %v2957 = vadd.f32 %v2802, 1.0
    %v2958 = vadd.f32 %v2804, 1.0
    %v2959 = vadd.f32 %v2806, 1.0
    %v2960 = vadd.f32 %v2808, 1.0
    %v2961 = vadd.f32 %v2810, 1.0
    %v2962 = vadd.f32 %v2812, 1.0
    %v2963 = vadd.f32 %v2814, 1.0
    %v2964 = vadd.f32 %v2816, 1.0
    %v2965 = vadd.f32 %v2818, 1.0
    %v2966 = vadd.f32 %v2820, 1.0
    %v2967 = vadd.f32 %v2822, 1.0
    %v2968 = vadd.f32 %v2824, 1.0
    %v2969 = vadd.f32 %v2826, 1.0
    %v2970 = vadd.f32 %v2828, 1.0
    %v2971 = vadd.f32 %v2830, 1.0
    %v2972 = vadd.f32 %v2832, 1.0
    %v2973 = vadd.f32 %v2834, 1.0
    %v2974 = vadd.f32 %v2836, 1.0
    %v2975 = vadd.f32 %v2838, 1.0
    %v2976 = vadd.f32 %v2840, 1.0
    %v2977 = vadd.f32 %v2842, 1.0
    %v2978 = vadd.f32 %v2844, 1.0
    %v2979 = vadd.f32 %v2846, 1.0
    %v2980 = vadd.f32 %v2848, 1.0
    %v2981 = vadd.f32 %v2850, 1.0
    %v2982 = vadd.f32 %v2852, 1.0
    %v2983 = vadd.f32 %v2854, 1.0
    %v2984 = vadd.f32 %v2856, 1.0
    %v2985 = vrcp.pop %v2857
    %v2986 = vmul.f32 1.0, %v2985
    %v2987 = vrcp.pop %v2858
    %v2988 = vmul.f32 1.0, %v2987
    %v2989 = vrcp.pop %v2859
    %v2990 = vmul.f32 1.0, %v2989
    %v2991 = vrcp.pop %v2860
    %v2992 = vmul.f32 1.0, %v2991
    %v2993 = vrcp.pop %v2861
    %v2994 = vmul.f32 1.0, %v2993
    %v2995 = vrcp.pop %v2862
    %v2996 = vmul.f32 1.0, %v2995
    %v2997 = vrcp.pop %v2863
    %v2998 = vmul.f32 1.0, %v2997
    %v2999 = vrcp.pop %v2864
    %v3000 = vmul.f32 1.0, %v2999
    %v3001 = vrcp.pop %v2865
    %v3002 = vmul.f32 1.0, %v3001
    %v3003 = vrcp.pop %v2866
    %v3004 = vmul.f32 1.0, %v3003
    %v3005 = vrcp.pop %v2867
    %v3006 = vmul.f32 1.0, %v3005
    %v3007 = vrcp.pop %v2868
    %v3008 = vmul.f32 1.0, %v3007
    %v3009 = vrcp.pop %v2869
    %v3010 = vmul.f32 1.0, %v3009
    %v3011 = vrcp.pop %v2870
    %v3012 = vmul.f32 1.0, %v3011
    %v3013 = vrcp.pop %v2871
    %v3014 = vmul.f32 1.0, %v3013
    %v3015 = vrcp.pop %v2872
    %v3016 = vmul.f32 1.0, %v3015
    %v3017 = vrcp.pop %v2873
    %v3018 = vmul.f32 1.0, %v3017
    %v3019 = vrcp.pop %v2874
    %v3020 = vmul.f32 1.0, %v3019
    %v3021 = vrcp.pop %v2875
    %v3022 = vmul.f32 1.0, %v3021
    %v3023 = vrcp.pop %v2876
    %v3024 = vmul.f32 1.0, %v3023
    %v3025 = vrcp.pop %v2877
    %v3026 = vmul.f32 1.0, %v3025
    %v3027 = vrcp.pop %v2878
    %v3028 = vmul.f32 1.0, %v3027
    %v3029 = vrcp.pop %v2879
    %v3030 = vmul.f32 1.0, %v3029
    %v3031 = vrcp.pop %v2880
    %v3032 = vmul.f32 1.0, %v3031
    %v3033 = vrcp.pop %v2881
    %v3034 = vmul.f32 1.0, %v3033
    %v3035 = vrcp.pop %v2882
    %v3036 = vmul.f32 1.0, %v3035
    %v3037 = vrcp.pop %v2883
    %v3038 = vmul.f32 1.0, %v3037
    %v3039 = vrcp.pop %v2884
    %v3040 = vmul.f32 1.0, %v3039
    %v3041 = vrcp.pop %v2885
    %v3042 = vmul.f32 1.0, %v3041
    %v3043 = vrcp.pop %v2886
    %v3044 = vmul.f32 1.0, %v3043
    %v3045 = vrcp.pop %v2887
    %v3046 = vmul.f32 1.0, %v3045
    %v3047 = vrcp.pop %v2888
    %v3048 = vmul.f32 1.0, %v3047
    %v3049 = vrcp.pop %v2889
    %v3050 = vmul.f32 1.0, %v3049
    %v3051 = vrcp.pop %v2890
    %v3052 = vmul.f32 1.0, %v3051
    %v3053 = vrcp.pop %v2891
    %v3054 = vmul.f32 1.0, %v3053
    %v3055 = vrcp.pop %v2892
    %v3056 = vmul.f32 1.0, %v3055
    %v3057 = vrcp.pop %v2893
    %v3058 = vmul.f32 1.0, %v3057
    %v3059 = vrcp.pop %v2894
    %v3060 = vmul.f32 1.0, %v3059
    %v3061 = vrcp.pop %v2895
    %v3062 = vmul.f32 1.0, %v3061
    %v3063 = vrcp.pop %v2896
    %v3064 = vmul.f32 1.0, %v3063
    %v3065 = vrcp.pop %v2897
    %v3066 = vmul.f32 1.0, %v3065
    %v3067 = vrcp.pop %v2898
    %v3068 = vmul.f32 1.0, %v3067
    %v3069 = vrcp.pop %v2899
    %v3070 = vmul.f32 1.0, %v3069
    %v3071 = vrcp.pop %v2900
    %v3072 = vmul.f32 1.0, %v3071
    %v3073 = vrcp.pop %v2901
    %v3074 = vmul.f32 1.0, %v3073
    %v3075 = vrcp.pop %v2902
    %v3076 = vmul.f32 1.0, %v3075
    %v3077 = vrcp.pop %v2903
    %v3078 = vmul.f32 1.0, %v3077
    %v3079 = vrcp.pop %v2904
    %v3080 = vmul.f32 1.0, %v3079
    %v3081 = vrcp.pop %v2905
    %v3082 = vmul.f32 1.0, %v3081
    %v3083 = vrcp.pop %v2906
    %v3084 = vmul.f32 1.0, %v3083
    %v3085 = vrcp.pop %v2907
    %v3086 = vmul.f32 1.0, %v3085
    %v3087 = vrcp.pop %v2908
    %v3088 = vmul.f32 1.0, %v3087
    %v3089 = vrcp.pop %v2909
    %v3090 = vmul.f32 1.0, %v3089
    %v3091 = vrcp.pop %v2910
    %v3092 = vmul.f32 1.0, %v3091
    %v3093 = vrcp.pop %v2911
    %v3094 = vmul.f32 1.0, %v3093
    %v3095 = vrcp.pop %v2912
    %v3096 = vmul.f32 1.0, %v3095
    %v3097 = vrcp.pop %v2913
    %v3098 = vmul.f32 1.0, %v3097
    %v3099 = vrcp.pop %v2914
    %v3100 = vmul.f32 1.0, %v3099
    %v3101 = vrcp.pop %v2915
    %v3102 = vmul.f32 1.0, %v3101
    %v3103 = vrcp.pop %v2916
    %v3104 = vmul.f32 1.0, %v3103
    %v3105 = vrcp.pop %v2917
    %v3106 = vmul.f32 1.0, %v3105
    %v3107 = vrcp.pop %v2918
    %v3108 = vmul.f32 1.0, %v3107
    %v3109 = vrcp.pop %v2919
    %v3110 = vmul.f32 1.0, %v3109
    %v3111 = vrcp.pop %v2920
    %v3112 = vmul.f32 1.0, %v3111
    %v3113 = vrcp.pop %v2921
    %v3114 = vmul.f32 1.0, %v3113
    %v3115 = vrcp.pop %v2922
    %v3116 = vmul.f32 1.0, %v3115
    %v3117 = vrcp.pop %v2923
    %v3118 = vmul.f32 1.0, %v3117
    %v3119 = vrcp.pop %v2924
    %v3120 = vmul.f32 1.0, %v3119
    %v3121 = vrcp.pop %v2925
    %v3122 = vmul.f32 1.0, %v3121
    %v3123 = vrcp.pop %v2926
    %v3124 = vmul.f32 1.0, %v3123
    %v3125 = vrcp.pop %v2927
    %v3126 = vmul.f32 1.0, %v3125
    %v3127 = vrcp.pop %v2928
    %v3128 = vmul.f32 1.0, %v3127
    %v3129 = vrcp.pop %v2929
    %v3130 = vmul.f32 1.0, %v3129
    %v3131 = vrcp.pop %v2930
    %v3132 = vmul.f32 1.0, %v3131
    %v3133 = vrcp.pop %v2931
    %v3134 = vmul.f32 1.0, %v3133
    %v3135 = vrcp.pop %v2932
    %v3136 = vmul.f32 1.0, %v3135
    %v3137 = vrcp.pop %v2933
    %v3138 = vmul.f32 1.0, %v3137
    %v3139 = vrcp.pop %v2934
    %v3140 = vmul.f32 1.0, %v3139
    %v3141 = vrcp.pop %v2935
    %v3142 = vmul.f32 1.0, %v3141
    %v3143 = vrcp.pop %v2936
    %v3144 = vmul.f32 1.0, %v3143
    %v3145 = vrcp.pop %v2937
    %v3146 = vmul.f32 1.0, %v3145
    %v3147 = vrcp.pop %v2938
    %v3148 = vmul.f32 1.0, %v3147
    %v3149 = vrcp.pop %v2939
    %v3150 = vmul.f32 1.0, %v3149
    %v3151 = vrcp.pop %v2940
    %v3152 = vmul.f32 1.0, %v3151
    %v3153 = vrcp.pop %v2941
    %v3154 = vmul.f32 1.0, %v3153
    %v3155 = vrcp.pop %v2942
    %v3156 = vmul.f32 1.0, %v3155
    %v3157 = vrcp.pop %v2943
    %v3158 = vmul.f32 1.0, %v3157
    %v3159 = vrcp.pop %v2944
    %v3160 = vmul.f32 1.0, %v3159
    %v3161 = vrcp.pop %v2945
    %v3162 = vmul.f32 1.0, %v3161
    %v3163 = vrcp.pop %v2946
    %v3164 = vmul.f32 1.0, %v3163
    %v3165 = vrcp.pop %v2947
    %v3166 = vmul.f32 1.0, %v3165
    %v3167 = vrcp.pop %v2948
    %v3168 = vmul.f32 1.0, %v3167
    %v3169 = vrcp.pop %v2949
    %v3170 = vmul.f32 1.0, %v3169
    %v3171 = vrcp.pop %v2950
    %v3172 = vmul.f32 1.0, %v3171
    %v3173 = vrcp.pop %v2951
    %v3174 = vmul.f32 1.0, %v3173
    %v3175 = vrcp.pop %v2952
    %v3176 = vmul.f32 1.0, %v3175
    %v3177 = vrcp.pop %v2953
    %v3178 = vmul.f32 1.0, %v3177
    %v3179 = vrcp.pop %v2954
    %v3180 = vmul.f32 1.0, %v3179
    %v3181 = vrcp.pop %v2955
    %v3182 = vmul.f32 1.0, %v3181
    %v3183 = vrcp.pop %v2956
    %v3184 = vmul.f32 1.0, %v3183
    %v3185 = vrcp.pop %v2957
    %v3186 = vmul.f32 1.0, %v3185
    %v3187 = vrcp.pop %v2958
    %v3188 = vmul.f32 1.0, %v3187
    %v3189 = vrcp.pop %v2959
    %v3190 = vmul.f32 1.0, %v3189
    %v3191 = vrcp.pop %v2960
    %v3192 = vmul.f32 1.0, %v3191
    %v3193 = vrcp.pop %v2961
    %v3194 = vmul.f32 1.0, %v3193
    %v3195 = vrcp.pop %v2962
    %v3196 = vmul.f32 1.0, %v3195
    %v3197 = vrcp.pop %v2963
    %v3198 = vmul.f32 1.0, %v3197
    %v3199 = vrcp.pop %v2964
    %v3200 = vmul.f32 1.0, %v3199
    %v3201 = vrcp.pop %v2965
    %v3202 = vmul.f32 1.0, %v3201
    %v3203 = vrcp.pop %v2966
    %v3204 = vmul.f32 1.0, %v3203
    %v3205 = vrcp.pop %v2967
    %v3206 = vmul.f32 1.0, %v3205
    %v3207 = vrcp.pop %v2968
    %v3208 = vmul.f32 1.0, %v3207
    %v3209 = vrcp.pop %v2969
    %v3210 = vmul.f32 1.0, %v3209
    %v3211 = vrcp.pop %v2970
    %v3212 = vmul.f32 1.0, %v3211
    %v3213 = vrcp.pop %v2971
    %v3214 = vmul.f32 1.0, %v3213
    %v3215 = vrcp.pop %v2972
    %v3216 = vmul.f32 1.0, %v3215
    %v3217 = vrcp.pop %v2973
    %v3218 = vmul.f32 1.0, %v3217
    %v3219 = vrcp.pop %v2974
    %v3220 = vmul.f32 1.0, %v3219
    %v3221 = vrcp.pop %v2975
    %v3222 = vmul.f32 1.0, %v3221
    %v3223 = vrcp.pop %v2976
    %v3224 = vmul.f32 1.0, %v3223
    %v3225 = vrcp.pop %v2977
    %v3226 = vmul.f32 1.0, %v3225
    %v3227 = vrcp.pop %v2978
    %v3228 = vmul.f32 1.0, %v3227
    %v3229 = vrcp.pop %v2979
    %v3230 = vmul.f32 1.0, %v3229
    %v3231 = vrcp.pop %v2980
    %v3232 = vmul.f32 1.0, %v3231
    %v3233 = vrcp.pop %v2981
    %v3234 = vmul.f32 1.0, %v3233
    %v3235 = vrcp.pop %v2982
    %v3236 = vmul.f32 1.0, %v3235
    %v3237 = vrcp.pop %v2983
    %v3238 = vmul.f32 1.0, %v3237
    %v3239 = vrcp.pop %v2984
    %v3240 = vmul.f32 1.0, %v3239
    %v3369 = vlaneseq
    %v3370 = vand.u32 %v3369, 127
    %v3371 = vlaneseq
    %v3372 = vshrl.u32 %v3371, 7
    %v3373 = vsub.s32 %v3370, %v3372
    %v3374 = vrot.slane %v2986, %v3373
    %v3375 = vadd.s32 %v3370, 4294967288
    %v3376 = vlaneseq
    %v3377 = vshrl.u32 %v3376, 7
    %v3378 = vsub.s32 %v3375, %v3377
    %v3379 = vrot.slane %v2988, %v3378
    %vm3380 = vcmask 130112
    %v3381 = vsel %vm3380, %v3379, %v3374
    %v3382 = vadd.s32 %v3370, 4294967280
    %v3383 = vlaneseq
    %v3384 = vshrl.u32 %v3383, 7
    %v3385 = vsub.s32 %v3382, %v3384
    %v3386 = vrot.slane %v2990, %v3385
    %vm3387 = vcmask 195712
    %v3388 = vsel %vm3387, %v3386, %v3381
    %v3389 = vadd.s32 %v3370, 4294967272
    %v3390 = vlaneseq
    %v3391 = vshrl.u32 %v3390, 7
    %v3392 = vsub.s32 %v3389, %v3391
    %v3393 = vrot.slane %v2992, %v3392
    %vm3394 = vcmask 261312
    %v3395 = vsel %vm3394, %v3393, %v3388
    %v3396 = vadd.s32 %v3370, 4294967264
    %v3397 = vlaneseq
    %v3398 = vshrl.u32 %v3397, 7
    %v3399 = vsub.s32 %v3396, %v3398
    %v3400 = vrot.slane %v2994, %v3399
    %vm3401 = vcmask 326912
    %v3402 = vsel %vm3401, %v3400, %v3395
    %v3403 = vadd.s32 %v3370, 4294967256
    %v3404 = vlaneseq
    %v3405 = vshrl.u32 %v3404, 7
    %v3406 = vsub.s32 %v3403, %v3405
    %v3407 = vrot.slane %v2996, %v3406
    %vm3408 = vcmask 392512
    %v3409 = vsel %vm3408, %v3407, %v3402
    %v3410 = vadd.s32 %v3370, 4294967248
    %v3411 = vlaneseq
    %v3412 = vshrl.u32 %v3411, 7
    %v3413 = vsub.s32 %v3410, %v3412
    %v3414 = vrot.slane %v2998, %v3413
    %vm3415 = vcmask 458112
    %v3416 = vsel %vm3415, %v3414, %v3409
    %v3417 = vadd.s32 %v3370, 4294967240
    %v3418 = vlaneseq
    %v3419 = vshrl.u32 %v3418, 7
    %v3420 = vsub.s32 %v3417, %v3419
    %v3421 = vrot.slane %v3000, %v3420
    %vm3422 = vcmask 523712
    %v3423 = vsel %vm3422, %v3421, %v3416
    %v3424 = vadd.s32 %v3370, 4294967232
    %v3425 = vlaneseq
    %v3426 = vshrl.u32 %v3425, 7
    %v3427 = vsub.s32 %v3424, %v3426
    %v3428 = vrot.slane %v3002, %v3427
    %vm3429 = vcmask 589312
    %v3430 = vsel %vm3429, %v3428, %v3423
    %v3431 = vadd.s32 %v3370, 4294967224
    %v3432 = vlaneseq
    %v3433 = vshrl.u32 %v3432, 7
    %v3434 = vsub.s32 %v3431, %v3433
    %v3435 = vrot.slane %v3004, %v3434
    %vm3436 = vcmask 654912
    %v3437 = vsel %vm3436, %v3435, %v3430
    %v3438 = vadd.s32 %v3370, 4294967216
    %v3439 = vlaneseq
    %v3440 = vshrl.u32 %v3439, 7
    %v3441 = vsub.s32 %v3438, %v3440
    %v3442 = vrot.slane %v3006, %v3441
    %vm3443 = vcmask 720512
    %v3444 = vsel %vm3443, %v3442, %v3437
    %v3445 = vadd.s32 %v3370, 4294967208
    %v3446 = vlaneseq
    %v3447 = vshrl.u32 %v3446, 7
    %v3448 = vsub.s32 %v3445, %v3447
    %v3449 = vrot.slane %v3008, %v3448
    %vm3450 = vcmask 786112
    %v3451 = vsel %vm3450, %v3449, %v3444
    %v3452 = vadd.s32 %v3370, 4294967200
    %v3453 = vlaneseq
    %v3454 = vshrl.u32 %v3453, 7
    %v3455 = vsub.s32 %v3452, %v3454
    %v3456 = vrot.slane %v3010, %v3455
    %vm3457 = vcmask 851712
    %v3458 = vsel %vm3457, %v3456, %v3451
    %v3459 = vadd.s32 %v3370, 4294967192
    %v3460 = vlaneseq
    %v3461 = vshrl.u32 %v3460, 7
    %v3462 = vsub.s32 %v3459, %v3461
    %v3463 = vrot.slane %v3012, %v3462
    %vm3464 = vcmask 917312
    %v3465 = vsel %vm3464, %v3463, %v3458
    %v3466 = vadd.s32 %v3370, 4294967184
    %v3467 = vlaneseq
    %v3468 = vshrl.u32 %v3467, 7
    %v3469 = vsub.s32 %v3466, %v3468
    %v3470 = vrot.slane %v3014, %v3469
    %vm3471 = vcmask 982912
    %v3472 = vsel %vm3471, %v3470, %v3465
    %v3473 = vadd.s32 %v3370, 4294967176
    %v3474 = vlaneseq
    %v3475 = vshrl.u32 %v3474, 7
    %v3476 = vsub.s32 %v3473, %v3475
    %v3477 = vrot.slane %v3016, %v3476
    %vm3478 = vcmask 1048512
    %v3479 = vsel %vm3478, %v3477, %v3472
    %v3480 = vlaneseq
    %v3481 = vshrl.u32 %v3480, 7
    %v3482 = vsub.s32 %v3370, %v3481
    %v3483 = vrot.slane %v3018, %v3482
    %v3484 = vlaneseq
    %v3485 = vshrl.u32 %v3484, 7
    %v3486 = vsub.s32 %v3375, %v3485
    %v3487 = vrot.slane %v3020, %v3486
    %v3488 = vsel %vm3380, %v3487, %v3483
    %v3489 = vlaneseq
    %v3490 = vshrl.u32 %v3489, 7
    %v3491 = vsub.s32 %v3382, %v3490
    %v3492 = vrot.slane %v3022, %v3491
    %v3493 = vsel %vm3387, %v3492, %v3488
    %v3494 = vlaneseq
    %v3495 = vshrl.u32 %v3494, 7
    %v3496 = vsub.s32 %v3389, %v3495
    %v3497 = vrot.slane %v3024, %v3496
    %v3498 = vsel %vm3394, %v3497, %v3493
    %v3499 = vlaneseq
    %v3500 = vshrl.u32 %v3499, 7
    %v3501 = vsub.s32 %v3396, %v3500
    %v3502 = vrot.slane %v3026, %v3501
    %v3503 = vsel %vm3401, %v3502, %v3498
    %v3504 = vlaneseq
    %v3505 = vshrl.u32 %v3504, 7
    %v3506 = vsub.s32 %v3403, %v3505
    %v3507 = vrot.slane %v3028, %v3506
    %v3508 = vsel %vm3408, %v3507, %v3503
    %v3509 = vlaneseq
    %v3510 = vshrl.u32 %v3509, 7
    %v3511 = vsub.s32 %v3410, %v3510
    %v3512 = vrot.slane %v3030, %v3511
    %v3513 = vsel %vm3415, %v3512, %v3508
    %v3514 = vlaneseq
    %v3515 = vshrl.u32 %v3514, 7
    %v3516 = vsub.s32 %v3417, %v3515
    %v3517 = vrot.slane %v3032, %v3516
    %v3518 = vsel %vm3422, %v3517, %v3513
    %v3519 = vlaneseq
    %v3520 = vshrl.u32 %v3519, 7
    %v3521 = vsub.s32 %v3424, %v3520
    %v3522 = vrot.slane %v3034, %v3521
    %v3523 = vsel %vm3429, %v3522, %v3518
    %v3524 = vlaneseq
    %v3525 = vshrl.u32 %v3524, 7
    %v3526 = vsub.s32 %v3431, %v3525
    %v3527 = vrot.slane %v3036, %v3526
    %v3528 = vsel %vm3436, %v3527, %v3523
    %v3529 = vlaneseq
    %v3530 = vshrl.u32 %v3529, 7
    %v3531 = vsub.s32 %v3438, %v3530
    %v3532 = vrot.slane %v3038, %v3531
    %v3533 = vsel %vm3443, %v3532, %v3528
    %v3534 = vlaneseq
    %v3535 = vshrl.u32 %v3534, 7
    %v3536 = vsub.s32 %v3445, %v3535
    %v3537 = vrot.slane %v3040, %v3536
    %v3538 = vsel %vm3450, %v3537, %v3533
    %v3539 = vlaneseq
    %v3540 = vshrl.u32 %v3539, 7
    %v3541 = vsub.s32 %v3452, %v3540
    %v3542 = vrot.slane %v3042, %v3541
    %v3543 = vsel %vm3457, %v3542, %v3538
    %v3544 = vlaneseq
    %v3545 = vshrl.u32 %v3544, 7
    %v3546 = vsub.s32 %v3459, %v3545
    %v3547 = vrot.slane %v3044, %v3546
    %v3548 = vsel %vm3464, %v3547, %v3543
    %v3549 = vlaneseq
    %v3550 = vshrl.u32 %v3549, 7
    %v3551 = vsub.s32 %v3466, %v3550
    %v3552 = vrot.slane %v3046, %v3551
    %v3553 = vsel %vm3471, %v3552, %v3548
    %v3554 = vlaneseq
    %v3555 = vshrl.u32 %v3554, 7
    %v3556 = vsub.s32 %v3473, %v3555
    %v3557 = vrot.slane %v3048, %v3556
    %v3558 = vsel %vm3478, %v3557, %v3553
    %v3559 = vlaneseq
    %v3560 = vshrl.u32 %v3559, 7
    %v3561 = vsub.s32 %v3370, %v3560
    %v3562 = vrot.slane %v3050, %v3561
    %v3563 = vlaneseq
    %v3564 = vshrl.u32 %v3563, 7
    %v3565 = vsub.s32 %v3375, %v3564
    %v3566 = vrot.slane %v3052, %v3565
    %v3567 = vsel %vm3380, %v3566, %v3562
    %v3568 = vlaneseq
    %v3569 = vshrl.u32 %v3568, 7
    %v3570 = vsub.s32 %v3382, %v3569
    %v3571 = vrot.slane %v3054, %v3570
    %v3572 = vsel %vm3387, %v3571, %v3567
    %v3573 = vlaneseq
    %v3574 = vshrl.u32 %v3573, 7
    %v3575 = vsub.s32 %v3389, %v3574
    %v3576 = vrot.slane %v3056, %v3575
    %v3577 = vsel %vm3394, %v3576, %v3572
    %v3578 = vlaneseq
    %v3579 = vshrl.u32 %v3578, 7
    %v3580 = vsub.s32 %v3396, %v3579
    %v3581 = vrot.slane %v3058, %v3580
    %v3582 = vsel %vm3401, %v3581, %v3577
    %v3583 = vlaneseq
    %v3584 = vshrl.u32 %v3583, 7
    %v3585 = vsub.s32 %v3403, %v3584
    %v3586 = vrot.slane %v3060, %v3585
    %v3587 = vsel %vm3408, %v3586, %v3582
    %v3588 = vlaneseq
    %v3589 = vshrl.u32 %v3588, 7
    %v3590 = vsub.s32 %v3410, %v3589
    %v3591 = vrot.slane %v3062, %v3590
    %v3592 = vsel %vm3415, %v3591, %v3587
    %v3593 = vlaneseq
    %v3594 = vshrl.u32 %v3593, 7
    %v3595 = vsub.s32 %v3417, %v3594
    %v3596 = vrot.slane %v3064, %v3595
    %v3597 = vsel %vm3422, %v3596, %v3592
    %v3598 = vlaneseq
    %v3599 = vshrl.u32 %v3598, 7
    %v3600 = vsub.s32 %v3424, %v3599
    %v3601 = vrot.slane %v3066, %v3600
    %v3602 = vsel %vm3429, %v3601, %v3597
    %v3603 = vlaneseq
    %v3604 = vshrl.u32 %v3603, 7
    %v3605 = vsub.s32 %v3431, %v3604
    %v3606 = vrot.slane %v3068, %v3605
    %v3607 = vsel %vm3436, %v3606, %v3602
    %v3608 = vlaneseq
    %v3609 = vshrl.u32 %v3608, 7
    %v3610 = vsub.s32 %v3438, %v3609
    %v3611 = vrot.slane %v3070, %v3610
    %v3612 = vsel %vm3443, %v3611, %v3607
    %v3613 = vlaneseq
    %v3614 = vshrl.u32 %v3613, 7
    %v3615 = vsub.s32 %v3445, %v3614
    %v3616 = vrot.slane %v3072, %v3615
    %v3617 = vsel %vm3450, %v3616, %v3612
    %v3618 = vlaneseq
    %v3619 = vshrl.u32 %v3618, 7
    %v3620 = vsub.s32 %v3452, %v3619
    %v3621 = vrot.slane %v3074, %v3620
    %v3622 = vsel %vm3457, %v3621, %v3617
    %v3623 = vlaneseq
    %v3624 = vshrl.u32 %v3623, 7
    %v3625 = vsub.s32 %v3459, %v3624
    %v3626 = vrot.slane %v3076, %v3625
    %v3627 = vsel %vm3464, %v3626, %v3622
    %v3628 = vlaneseq
    %v3629 = vshrl.u32 %v3628, 7
    %v3630 = vsub.s32 %v3466, %v3629
    %v3631 = vrot.slane %v3078, %v3630
    %v3632 = vsel %vm3471, %v3631, %v3627
    %v3633 = vlaneseq
    %v3634 = vshrl.u32 %v3633, 7
    %v3635 = vsub.s32 %v3473, %v3634
    %v3636 = vrot.slane %v3080, %v3635
    %v3637 = vsel %vm3478, %v3636, %v3632
    %v3638 = vlaneseq
    %v3639 = vshrl.u32 %v3638, 7
    %v3640 = vsub.s32 %v3370, %v3639
    %v3641 = vrot.slane %v3082, %v3640
    %v3642 = vlaneseq
    %v3643 = vshrl.u32 %v3642, 7
    %v3644 = vsub.s32 %v3375, %v3643
    %v3645 = vrot.slane %v3084, %v3644
    %v3646 = vsel %vm3380, %v3645, %v3641
    %v3647 = vlaneseq
    %v3648 = vshrl.u32 %v3647, 7
    %v3649 = vsub.s32 %v3382, %v3648
    %v3650 = vrot.slane %v3086, %v3649
    %v3651 = vsel %vm3387, %v3650, %v3646
    %v3652 = vlaneseq
    %v3653 = vshrl.u32 %v3652, 7
    %v3654 = vsub.s32 %v3389, %v3653
    %v3655 = vrot.slane %v3088, %v3654
    %v3656 = vsel %vm3394, %v3655, %v3651
    %v3657 = vlaneseq
    %v3658 = vshrl.u32 %v3657, 7
    %v3659 = vsub.s32 %v3396, %v3658
    %v3660 = vrot.slane %v3090, %v3659
    %v3661 = vsel %vm3401, %v3660, %v3656
    %v3662 = vlaneseq
    %v3663 = vshrl.u32 %v3662, 7
    %v3664 = vsub.s32 %v3403, %v3663
    %v3665 = vrot.slane %v3092, %v3664
    %v3666 = vsel %vm3408, %v3665, %v3661
    %v3667 = vlaneseq
    %v3668 = vshrl.u32 %v3667, 7
    %v3669 = vsub.s32 %v3410, %v3668
    %v3670 = vrot.slane %v3094, %v3669
    %v3671 = vsel %vm3415, %v3670, %v3666
    %v3672 = vlaneseq
    %v3673 = vshrl.u32 %v3672, 7
    %v3674 = vsub.s32 %v3417, %v3673
    %v3675 = vrot.slane %v3096, %v3674
    %v3676 = vsel %vm3422, %v3675, %v3671
    %v3677 = vlaneseq
    %v3678 = vshrl.u32 %v3677, 7
    %v3679 = vsub.s32 %v3424, %v3678
    %v3680 = vrot.slane %v3098, %v3679
    %v3681 = vsel %vm3429, %v3680, %v3676
    %v3682 = vlaneseq
    %v3683 = vshrl.u32 %v3682, 7
    %v3684 = vsub.s32 %v3431, %v3683
    %v3685 = vrot.slane %v3100, %v3684
    %v3686 = vsel %vm3436, %v3685, %v3681
    %v3687 = vlaneseq
    %v3688 = vshrl.u32 %v3687, 7
    %v3689 = vsub.s32 %v3438, %v3688
    %v3690 = vrot.slane %v3102, %v3689
    %v3691 = vsel %vm3443, %v3690, %v3686
    %v3692 = vlaneseq
    %v3693 = vshrl.u32 %v3692, 7
    %v3694 = vsub.s32 %v3445, %v3693
    %v3695 = vrot.slane %v3104, %v3694
    %v3696 = vsel %vm3450, %v3695, %v3691
    %v3697 = vlaneseq
    %v3698 = vshrl.u32 %v3697, 7
    %v3699 = vsub.s32 %v3452, %v3698
    %v3700 = vrot.slane %v3106, %v3699
    %v3701 = vsel %vm3457, %v3700, %v3696
    %v3702 = vlaneseq
    %v3703 = vshrl.u32 %v3702, 7
    %v3704 = vsub.s32 %v3459, %v3703
    %v3705 = vrot.slane %v3108, %v3704
    %v3706 = vsel %vm3464, %v3705, %v3701
    %v3707 = vlaneseq
    %v3708 = vshrl.u32 %v3707, 7
    %v3709 = vsub.s32 %v3466, %v3708
    %v3710 = vrot.slane %v3110, %v3709
    %v3711 = vsel %vm3471, %v3710, %v3706
    %v3712 = vlaneseq
    %v3713 = vshrl.u32 %v3712, 7
    %v3714 = vsub.s32 %v3473, %v3713
    %v3715 = vrot.slane %v3112, %v3714
    %v3716 = vsel %vm3478, %v3715, %v3711
    %v3717 = vlaneseq
    %v3718 = vshrl.u32 %v3717, 7
    %v3719 = vsub.s32 %v3370, %v3718
    %v3720 = vrot.slane %v3114, %v3719
    %v3721 = vlaneseq
    %v3722 = vshrl.u32 %v3721, 7
    %v3723 = vsub.s32 %v3375, %v3722
    %v3724 = vrot.slane %v3116, %v3723
    %v3725 = vsel %vm3380, %v3724, %v3720
    %v3726 = vlaneseq
    %v3727 = vshrl.u32 %v3726, 7
    %v3728 = vsub.s32 %v3382, %v3727
    %v3729 = vrot.slane %v3118, %v3728
    %v3730 = vsel %vm3387, %v3729, %v3725
    %v3731 = vlaneseq
    %v3732 = vshrl.u32 %v3731, 7
    %v3733 = vsub.s32 %v3389, %v3732
    %v3734 = vrot.slane %v3120, %v3733
    %v3735 = vsel %vm3394, %v3734, %v3730
    %v3736 = vlaneseq
    %v3737 = vshrl.u32 %v3736, 7
    %v3738 = vsub.s32 %v3396, %v3737
    %v3739 = vrot.slane %v3122, %v3738
    %v3740 = vsel %vm3401, %v3739, %v3735
    %v3741 = vlaneseq
    %v3742 = vshrl.u32 %v3741, 7
    %v3743 = vsub.s32 %v3403, %v3742
    %v3744 = vrot.slane %v3124, %v3743
    %v3745 = vsel %vm3408, %v3744, %v3740
    %v3746 = vlaneseq
    %v3747 = vshrl.u32 %v3746, 7
    %v3748 = vsub.s32 %v3410, %v3747
    %v3749 = vrot.slane %v3126, %v3748
    %v3750 = vsel %vm3415, %v3749, %v3745
    %v3751 = vlaneseq
    %v3752 = vshrl.u32 %v3751, 7
    %v3753 = vsub.s32 %v3417, %v3752
    %v3754 = vrot.slane %v3128, %v3753
    %v3755 = vsel %vm3422, %v3754, %v3750
    %v3756 = vlaneseq
    %v3757 = vshrl.u32 %v3756, 7
    %v3758 = vsub.s32 %v3424, %v3757
    %v3759 = vrot.slane %v3130, %v3758
    %v3760 = vsel %vm3429, %v3759, %v3755
    %v3761 = vlaneseq
    %v3762 = vshrl.u32 %v3761, 7
    %v3763 = vsub.s32 %v3431, %v3762
    %v3764 = vrot.slane %v3132, %v3763
    %v3765 = vsel %vm3436, %v3764, %v3760
    %v3766 = vlaneseq
    %v3767 = vshrl.u32 %v3766, 7
    %v3768 = vsub.s32 %v3438, %v3767
    %v3769 = vrot.slane %v3134, %v3768
    %v3770 = vsel %vm3443, %v3769, %v3765
    %v3771 = vlaneseq
    %v3772 = vshrl.u32 %v3771, 7
    %v3773 = vsub.s32 %v3445, %v3772
    %v3774 = vrot.slane %v3136, %v3773
    %v3775 = vsel %vm3450, %v3774, %v3770
    %v3776 = vlaneseq
    %v3777 = vshrl.u32 %v3776, 7
    %v3778 = vsub.s32 %v3452, %v3777
    %v3779 = vrot.slane %v3138, %v3778
    %v3780 = vsel %vm3457, %v3779, %v3775
    %v3781 = vlaneseq
    %v3782 = vshrl.u32 %v3781, 7
    %v3783 = vsub.s32 %v3459, %v3782
    %v3784 = vrot.slane %v3140, %v3783
    %v3785 = vsel %vm3464, %v3784, %v3780
    %v3786 = vlaneseq
    %v3787 = vshrl.u32 %v3786, 7
    %v3788 = vsub.s32 %v3466, %v3787
    %v3789 = vrot.slane %v3142, %v3788
    %v3790 = vsel %vm3471, %v3789, %v3785
    %v3791 = vlaneseq
    %v3792 = vshrl.u32 %v3791, 7
    %v3793 = vsub.s32 %v3473, %v3792
    %v3794 = vrot.slane %v3144, %v3793
    %v3795 = vsel %vm3478, %v3794, %v3790
    %v3796 = vlaneseq
    %v3797 = vshrl.u32 %v3796, 7
    %v3798 = vsub.s32 %v3370, %v3797
    %v3799 = vrot.slane %v3146, %v3798
    %v3800 = vlaneseq
    %v3801 = vshrl.u32 %v3800, 7
    %v3802 = vsub.s32 %v3375, %v3801
    %v3803 = vrot.slane %v3148, %v3802
    %v3804 = vsel %vm3380, %v3803, %v3799
    %v3805 = vlaneseq
    %v3806 = vshrl.u32 %v3805, 7
    %v3807 = vsub.s32 %v3382, %v3806
    %v3808 = vrot.slane %v3150, %v3807
    %v3809 = vsel %vm3387, %v3808, %v3804
    %v3810 = vlaneseq
    %v3811 = vshrl.u32 %v3810, 7
    %v3812 = vsub.s32 %v3389, %v3811
    %v3813 = vrot.slane %v3152, %v3812
    %v3814 = vsel %vm3394, %v3813, %v3809
    %v3815 = vlaneseq
    %v3816 = vshrl.u32 %v3815, 7
    %v3817 = vsub.s32 %v3396, %v3816
    %v3818 = vrot.slane %v3154, %v3817
    %v3819 = vsel %vm3401, %v3818, %v3814
    %v3820 = vlaneseq
    %v3821 = vshrl.u32 %v3820, 7
    %v3822 = vsub.s32 %v3403, %v3821
    %v3823 = vrot.slane %v3156, %v3822
    %v3824 = vsel %vm3408, %v3823, %v3819
    %v3825 = vlaneseq
    %v3826 = vshrl.u32 %v3825, 7
    %v3827 = vsub.s32 %v3410, %v3826
    %v3828 = vrot.slane %v3158, %v3827
    %v3829 = vsel %vm3415, %v3828, %v3824
    %v3830 = vlaneseq
    %v3831 = vshrl.u32 %v3830, 7
    %v3832 = vsub.s32 %v3417, %v3831
    %v3833 = vrot.slane %v3160, %v3832
    %v3834 = vsel %vm3422, %v3833, %v3829
    %v3835 = vlaneseq
    %v3836 = vshrl.u32 %v3835, 7
    %v3837 = vsub.s32 %v3424, %v3836
    %v3838 = vrot.slane %v3162, %v3837
    %v3839 = vsel %vm3429, %v3838, %v3834
    %v3840 = vlaneseq
    %v3841 = vshrl.u32 %v3840, 7
    %v3842 = vsub.s32 %v3431, %v3841
    %v3843 = vrot.slane %v3164, %v3842
    %v3844 = vsel %vm3436, %v3843, %v3839
    %v3845 = vlaneseq
    %v3846 = vshrl.u32 %v3845, 7
    %v3847 = vsub.s32 %v3438, %v3846
    %v3848 = vrot.slane %v3166, %v3847
    %v3849 = vsel %vm3443, %v3848, %v3844
    %v3850 = vlaneseq
    %v3851 = vshrl.u32 %v3850, 7
    %v3852 = vsub.s32 %v3445, %v3851
    %v3853 = vrot.slane %v3168, %v3852
    %v3854 = vsel %vm3450, %v3853, %v3849
    %v3855 = vlaneseq
    %v3856 = vshrl.u32 %v3855, 7
    %v3857 = vsub.s32 %v3452, %v3856
    %v3858 = vrot.slane %v3170, %v3857
    %v3859 = vsel %vm3457, %v3858, %v3854
    %v3860 = vlaneseq
    %v3861 = vshrl.u32 %v3860, 7
    %v3862 = vsub.s32 %v3459, %v3861
    %v3863 = vrot.slane %v3172, %v3862
    %v3864 = vsel %vm3464, %v3863, %v3859
    %v3865 = vlaneseq
    %v3866 = vshrl.u32 %v3865, 7
    %v3867 = vsub.s32 %v3466, %v3866
    %v3868 = vrot.slane %v3174, %v3867
    %v3869 = vsel %vm3471, %v3868, %v3864
    %v3870 = vlaneseq
    %v3871 = vshrl.u32 %v3870, 7
    %v3872 = vsub.s32 %v3473, %v3871
    %v3873 = vrot.slane %v3176, %v3872
    %v3874 = vsel %vm3478, %v3873, %v3869
    %v3875 = vlaneseq
    %v3876 = vshrl.u32 %v3875, 7
    %v3877 = vsub.s32 %v3370, %v3876
    %v3878 = vrot.slane %v3178, %v3877
    %v3879 = vlaneseq
    %v3880 = vshrl.u32 %v3879, 7
    %v3881 = vsub.s32 %v3375, %v3880
    %v3882 = vrot.slane %v3180, %v3881
    %v3883 = vsel %vm3380, %v3882, %v3878
    %v3884 = vlaneseq
    %v3885 = vshrl.u32 %v3884, 7
    %v3886 = vsub.s32 %v3382, %v3885
    %v3887 = vrot.slane %v3182, %v3886
    %v3888 = vsel %vm3387, %v3887, %v3883
    %v3889 = vlaneseq
    %v3890 = vshrl.u32 %v3889, 7
    %v3891 = vsub.s32 %v3389, %v3890
    %v3892 = vrot.slane %v3184, %v3891
    %v3893 = vsel %vm3394, %v3892, %v3888
    %v3894 = vlaneseq
    %v3895 = vshrl.u32 %v3894, 7
    %v3896 = vsub.s32 %v3396, %v3895
    %v3897 = vrot.slane %v3186, %v3896
    %v3898 = vsel %vm3401, %v3897, %v3893
    %v3899 = vlaneseq
    %v3900 = vshrl.u32 %v3899, 7
    %v3901 = vsub.s32 %v3403, %v3900
    %v3902 = vrot.slane %v3188, %v3901
    %v3903 = vsel %vm3408, %v3902, %v3898
    %v3904 = vlaneseq
    %v3905 = vshrl.u32 %v3904, 7
    %v3906 = vsub.s32 %v3410, %v3905
    %v3907 = vrot.slane %v3190, %v3906
    %v3908 = vsel %vm3415, %v3907, %v3903
    %v3909 = vlaneseq
    %v3910 = vshrl.u32 %v3909, 7
    %v3911 = vsub.s32 %v3417, %v3910
    %v3912 = vrot.slane %v3192, %v3911
    %v3913 = vsel %vm3422, %v3912, %v3908
    %v3914 = vlaneseq
    %v3915 = vshrl.u32 %v3914, 7
    %v3916 = vsub.s32 %v3424, %v3915
    %v3917 = vrot.slane %v3194, %v3916
    %v3918 = vsel %vm3429, %v3917, %v3913
    %v3919 = vlaneseq
    %v3920 = vshrl.u32 %v3919, 7
    %v3921 = vsub.s32 %v3431, %v3920
    %v3922 = vrot.slane %v3196, %v3921
    %v3923 = vsel %vm3436, %v3922, %v3918
    %v3924 = vlaneseq
    %v3925 = vshrl.u32 %v3924, 7
    %v3926 = vsub.s32 %v3438, %v3925
    %v3927 = vrot.slane %v3198, %v3926
    %v3928 = vsel %vm3443, %v3927, %v3923
    %v3929 = vlaneseq
    %v3930 = vshrl.u32 %v3929, 7
    %v3931 = vsub.s32 %v3445, %v3930
    %v3932 = vrot.slane %v3200, %v3931
    %v3933 = vsel %vm3450, %v3932, %v3928
    %v3934 = vlaneseq
    %v3935 = vshrl.u32 %v3934, 7
    %v3936 = vsub.s32 %v3452, %v3935
    %v3937 = vrot.slane %v3202, %v3936
    %v3938 = vsel %vm3457, %v3937, %v3933
    %v3939 = vlaneseq
    %v3940 = vshrl.u32 %v3939, 7
    %v3941 = vsub.s32 %v3459, %v3940
    %v3942 = vrot.slane %v3204, %v3941
    %v3943 = vsel %vm3464, %v3942, %v3938
    %v3944 = vlaneseq
    %v3945 = vshrl.u32 %v3944, 7
    %v3946 = vsub.s32 %v3466, %v3945
    %v3947 = vrot.slane %v3206, %v3946
    %v3948 = vsel %vm3471, %v3947, %v3943
    %v3949 = vlaneseq
    %v3950 = vshrl.u32 %v3949, 7
    %v3951 = vsub.s32 %v3473, %v3950
    %v3952 = vrot.slane %v3208, %v3951
    %v3953 = vsel %vm3478, %v3952, %v3948
    %v3954 = vlaneseq
    %v3955 = vshrl.u32 %v3954, 7
    %v3956 = vsub.s32 %v3370, %v3955
    %v3957 = vrot.slane %v3210, %v3956
    %v3958 = vlaneseq
    %v3959 = vshrl.u32 %v3958, 7
    %v3960 = vsub.s32 %v3375, %v3959
    %v3961 = vrot.slane %v3212, %v3960
    %v3962 = vsel %vm3380, %v3961, %v3957
    %v3963 = vlaneseq
    %v3964 = vshrl.u32 %v3963, 7
    %v3965 = vsub.s32 %v3382, %v3964
    %v3966 = vrot.slane %v3214, %v3965
    %v3967 = vsel %vm3387, %v3966, %v3962
    %v3968 = vlaneseq
    %v3969 = vshrl.u32 %v3968, 7
    %v3970 = vsub.s32 %v3389, %v3969
    %v3971 = vrot.slane %v3216, %v3970
    %v3972 = vsel %vm3394, %v3971, %v3967
    %v3973 = vlaneseq
    %v3974 = vshrl.u32 %v3973, 7
    %v3975 = vsub.s32 %v3396, %v3974
    %v3976 = vrot.slane %v3218, %v3975
    %v3977 = vsel %vm3401, %v3976, %v3972
    %v3978 = vlaneseq
    %v3979 = vshrl.u32 %v3978, 7
    %v3980 = vsub.s32 %v3403, %v3979
    %v3981 = vrot.slane %v3220, %v3980
    %v3982 = vsel %vm3408, %v3981, %v3977
    %v3983 = vlaneseq
    %v3984 = vshrl.u32 %v3983, 7
    %v3985 = vsub.s32 %v3410, %v3984
    %v3986 = vrot.slane %v3222, %v3985
    %v3987 = vsel %vm3415, %v3986, %v3982
    %v3988 = vlaneseq
    %v3989 = vshrl.u32 %v3988, 7
    %v3990 = vsub.s32 %v3417, %v3989
    %v3991 = vrot.slane %v3224, %v3990
    %v3992 = vsel %vm3422, %v3991, %v3987
    %v3993 = vlaneseq
    %v3994 = vshrl.u32 %v3993, 7
    %v3995 = vsub.s32 %v3424, %v3994
    %v3996 = vrot.slane %v3226, %v3995
    %v3997 = vsel %vm3429, %v3996, %v3992
    %v3998 = vlaneseq
    %v3999 = vshrl.u32 %v3998, 7
    %v4000 = vsub.s32 %v3431, %v3999
    %v4001 = vrot.slane %v3228, %v4000
    %v4002 = vsel %vm3436, %v4001, %v3997
    %v4003 = vlaneseq
    %v4004 = vshrl.u32 %v4003, 7
    %v4005 = vsub.s32 %v3438, %v4004
    %v4006 = vrot.slane %v3230, %v4005
    %v4007 = vsel %vm3443, %v4006, %v4002
    %v4008 = vlaneseq
    %v4009 = vshrl.u32 %v4008, 7
    %v4010 = vsub.s32 %v3445, %v4009
    %v4011 = vrot.slane %v3232, %v4010
    %v4012 = vsel %vm3450, %v4011, %v4007
    %v4013 = vlaneseq
    %v4014 = vshrl.u32 %v4013, 7
    %v4015 = vsub.s32 %v3452, %v4014
    %v4016 = vrot.slane %v3234, %v4015
    %v4017 = vsel %vm3457, %v4016, %v4012
    %v4018 = vlaneseq
    %v4019 = vshrl.u32 %v4018, 7
    %v4020 = vsub.s32 %v3459, %v4019
    %v4021 = vrot.slane %v3236, %v4020
    %v4022 = vsel %vm3464, %v4021, %v4017
    %v4023 = vlaneseq
    %v4024 = vshrl.u32 %v4023, 7
    %v4025 = vsub.s32 %v3466, %v4024
    %v4026 = vrot.slane %v3238, %v4025
    %v4027 = vsel %vm3471, %v4026, %v4022
    %v4028 = vlaneseq
    %v4029 = vshrl.u32 %v4028, 7
    %v4030 = vsub.s32 %v3473, %v4029
    %v4031 = vrot.slane %v3240, %v4030
    %v4032 = vsel %vm3478, %v4031, %v4027
    %vm4033 = vcmask 1041409
    %v4034 = vsel %vm4033, %v3558, %v3479
    %vm4035 = vcmask 1042434
    %v4036 = vsel %vm4035, %v3637, %v4034
    %vm4037 = vcmask 1043459
    %v4038 = vsel %vm4037, %v3716, %v4036
    %vm4039 = vcmask 1044484
    %v4040 = vsel %vm4039, %v3795, %v4038
    %vm4041 = vcmask 1045509
    %v4042 = vsel %vm4041, %v3874, %v4040
    %vm4043 = vcmask 1046534
    %v4044 = vsel %vm4043, %v3953, %v4042
    %vm4045 = vcmask 1047559
    %v4046 = vsel %vm4045, %v4032, %v4044
    %4048 = vst [vmem:[#allocation9] sm:$0xff] %v4046
    // Predicated region
    $region38: #{tpu_custom_call.1} parent=1 // pred_check
      _
    $region39: #{tpu_custom_call.1} parent=1 // pred_check_branch
      %4050 = sbr.rel (0) target = $region41
    $region40: #{tpu_custom_call.1} parent=1 // pred_region
      %s4052 = ssub.s32 128, 128
      %4053 = vsyncadd [#allocation5], %s4052
      %s4055 = sshll.u32 [#allocation9], 4
      %s4056 = int_to_ptr.vmem [resolvable:$true] %s4055
      %4058 = dma.vmem_to_hbm [thread:$0]  %s4056, 128, %s6, [#allocation5]
    $region41: #{tpu_custom_call.1} parent=1 // pred_fallthru
      _
    // Predicated region
    $region42: #{tpu_custom_call.1} parent=1 // pred_check
      _
    $region43: #{tpu_custom_call.1} parent=1 // pred_check_branch
      %4060 = sbr.rel (0) target = $region45
    $region44: #{tpu_custom_call.1} parent=1 // pred_region
      %4061 = dma.done [#allocation5], 128
    $region45: #{tpu_custom_call.1} parent=1 // pred_fallthru
      _
    %4062 = vsyncpa [#allocation4], 1
    %4063 = vsyncpa [#allocation7], 1
    %4064 = vsyncpa [#allocation5], 1

</llo_original>
